<compile_context>
chip_gen: v5e
topology: v5e:2x2
jax: 0.10.0
libtpu: 0.0.40
codegen_flags: <defaults>
</compile_context>

<pallas_src>
import functools

import jax
import jax.numpy as jnp
from jax.experimental import pallas as pl
from jax.experimental.pallas import tpu as pltpu

LANE = 128


def _round_up(x, m):
    return ((x + m - 1) // m) * m


# ----------------------------------------------------------------------------
# small linear kernel (node embedding of the sparse node list)
# ----------------------------------------------------------------------------
def _linear_kernel(x_ref, w_ref, b_ref, o_ref):
    o_ref[...] = (
        jnp.dot(x_ref[...], w_ref[...], preferred_element_type=jnp.float32)
        + b_ref[...]
    )


def linear(x, w, b):
    M, K = x.shape
    N = w.shape[1]
    return pl.pallas_call(
        _linear_kernel,
        out_shape=jax.ShapeDtypeStruct((M, N), jnp.float32),
        grid=(1,),
        in_specs=[
            pl.BlockSpec((M, K), lambda i: (0, 0)),
            pl.BlockSpec((K, N), lambda i: (0, 0)),
            pl.BlockSpec((1, N), lambda i: (0, 0)),
        ],
        out_specs=pl.BlockSpec((M, N), lambda i: (0, 0)),
    )(x, w, b)


# ----------------------------------------------------------------------------
# fused MPNN stack: all K rounds in one kernel, mask applied in-kernel
#   H' = relu(H @ Wself + A @ (H @ Wmsg) + b) * node_mask       (K times)
# Wself|Wmsg concatenated into one (E, 2E) weight.
# ----------------------------------------------------------------------------
def _mpnn_kernel(h_ref, a_ref, m_ref, *rest, n_rounds, e_pad):
    w_refs = rest[: 2 * n_rounds]
    o_ref = rest[2 * n_rounds]

    h = h_ref[0]            # (S, Ep)
    a = a_ref[0]            # (S, S) weighted adjacency (dst <- src)
    m = m_ref[0]            # (S, 1) valid-node mask
    for k in range(n_rounds):
        wcat = w_refs[2 * k][...]      # (Ep, 2*Ep) = [Wself | Wmsg]
        bias = w_refs[2 * k + 1][...]  # (1, Ep)
        hw = jnp.dot(h, wcat, preferred_element_type=jnp.float32)   # (S, 2Ep)
        out = (
            hw[:, :e_pad]
            + jnp.dot(a, hw[:, e_pad:], preferred_element_type=jnp.float32)
            + bias
        )
        h = jnp.maximum(out, 0.0) * m   # zero padded node rows (fused mask)
    o_ref[0] = h


def mpnn_stack(h, adj, mask3, w_list, b_list):
    B, S, Ep = h.shape
    K = len(w_list)
    inputs = [h, adj, mask3]
    in_specs = [
        pl.BlockSpec((1, S, Ep), lambda i: (i, 0, 0)),
        pl.BlockSpec((1, S, S), lambda i: (i, 0, 0)),
        pl.BlockSpec((1, S, 1), lambda i: (i, 0, 0)),
    ]
    for w, b in zip(w_list, b_list):
        inputs += [w, b]
        in_specs += [
            pl.BlockSpec(w.shape, lambda i: (0, 0)),
            pl.BlockSpec(b.shape, lambda i: (0, 0)),
        ]
    kern = functools.partial(_mpnn_kernel, n_rounds=K, e_pad=Ep)
    return pl.pallas_call(
        kern,
        out_shape=jax.ShapeDtypeStruct((B, S, Ep), jnp.float32),
        grid=(B,),
        in_specs=in_specs,
        out_specs=pl.BlockSpec((1, S, Ep), lambda i: (i, 0, 0)),
        compiler_params=pltpu.CompilerParams(dimension_semantics=("parallel",)),
    )(*inputs)


# ----------------------------------------------------------------------------
# shared LSTM gate math: one fused matmul of [x, h] @ [Wih; Whh] + b
# gate columns are laid out in 128-lane-aligned blocks of size Hp.
# ----------------------------------------------------------------------------
def _lstm_gates(x, h_prev, c_prev, wcat, bias):
    hp = h_prev.shape[-1]
    xh = jnp.concatenate([x, h_prev], axis=-1)
    gates = jnp.dot(xh, wcat, preferred_element_type=jnp.float32) + bias
    i = jax.nn.sigmoid(gates[:, 0 * hp:1 * hp])
    f = jax.nn.sigmoid(gates[:, 1 * hp:2 * hp])
    g = jnp.tanh(gates[:, 2 * hp:3 * hp])
    o = jax.nn.sigmoid(gates[:, 3 * hp:4 * hp])
    c_new = f * c_prev + i * g
    h_new = o * jnp.tanh(c_new)
    return h_new, c_new


# ----------------------------------------------------------------------------
# fused encoder: full LSTM time loop (+ W1 projection of encoder outputs)
# grid=(S,), "arbitrary"; h/c state resident in VMEM outputs.
# ----------------------------------------------------------------------------
def _encoder_kernel(*refs, n_layers):
    emb_ref = refs[0]                               # (1, B, Ep) block at step t
    lstm_refs = refs[1:1 + 2 * n_layers]
    w1_ref = refs[1 + 2 * n_layers]
    b1_ref = refs[2 + 2 * n_layers]
    eproj_ref, h_ref, c_ref = refs[3 + 2 * n_layers:6 + 2 * n_layers]

    t = pl.program_id(0)

    @pl.when(t == 0)
    def _():
        h_ref[...] = jnp.zeros_like(h_ref)
        c_ref[...] = jnp.zeros_like(c_ref)

    inp = emb_ref[0]                                # (B, Ep)
    for l in range(n_layers):
        wcat = lstm_refs[2 * l][...]
        bias = lstm_refs[2 * l + 1][...]
        h_new, c_new = _lstm_gates(inp, h_ref[l], c_ref[l], wcat, bias)
        h_ref[l] = h_new
        c_ref[l] = c_new
        inp = h_new

    # fused W1 projection of the encoder output at this step
    eproj_ref[0] = (
        jnp.dot(inp, w1_ref[...], preferred_element_type=jnp.float32) + b1_ref[...]
    )


def encode(emb_tm, enc_params, w1, w1_b):
    S, B, Ep = emb_tm.shape
    Hp = w1.shape[0]
    L = len(enc_params)

    inputs = [emb_tm]
    in_specs = [pl.BlockSpec((1, B, Ep), lambda t: (t, 0, 0))]
    for wcat, b in enc_params:
        inputs += [wcat, b]
        in_specs += [
            pl.BlockSpec(wcat.shape, lambda t: (0, 0)),
            pl.BlockSpec(b.shape, lambda t: (0, 0)),
        ]
    inputs += [w1, w1_b]
    in_specs += [
        pl.BlockSpec(w1.shape, lambda t: (0, 0)),
        pl.BlockSpec(w1_b.shape, lambda t: (0, 0)),
    ]

    out_shape = (
        jax.ShapeDtypeStruct((S, B, Hp), jnp.float32),   # eproj (time-major)
        jax.ShapeDtypeStruct((L, B, Hp), jnp.float32),   # final h
        jax.ShapeDtypeStruct((L, B, Hp), jnp.float32),   # final c
    )
    out_specs = (
        pl.BlockSpec((1, B, Hp), lambda t: (t, 0, 0)),
        pl.BlockSpec((L, B, Hp), lambda t: (0, 0, 0)),
        pl.BlockSpec((L, B, Hp), lambda t: (0, 0, 0)),
    )
    kern = functools.partial(_encoder_kernel, n_layers=L)
    return pl.pallas_call(
        kern,
        out_shape=out_shape,
        grid=(S,),
        in_specs=in_specs,
        out_specs=out_specs,
        compiler_params=pltpu.CompilerParams(dimension_semantics=("arbitrary",)),
    )(*inputs)


# ----------------------------------------------------------------------------
# fused decoder: full decode loop in one kernel.
# grid=(S,), "arbitrary"; eproj / emb / mask / state resident in VMEM.
# Sampling uses precomputed Gumbel noise (Gumbel-max == categorical sampling).
# ----------------------------------------------------------------------------
def _decoder_kernel(*refs, n_layers, clip, sampling):
    eproj_ref, emb_ref, mask_ref, noise_ref, h0_ref, c0_ref = refs[:6]
    lstm_refs = refs[6:6 + 2 * n_layers]
    w2_ref, v_ref, dstart_ref = refs[6 + 2 * n_layers:9 + 2 * n_layers]
    choices_ref, ll_ref = refs[9 + 2 * n_layers:11 + 2 * n_layers]
    msk_ref, hs_ref, cs_ref, din_ref = refs[11 + 2 * n_layers:]

    t = pl.program_id(0)
    S, Bt, Hp = eproj_ref.shape

    @pl.when(t == 0)
    def _():
        msk_ref[...] = mask_ref[...]
        hs_ref[...] = h0_ref[...]
        cs_ref[...] = c0_ref[...]
        din_ref[...] = jnp.broadcast_to(dstart_ref[...], din_ref.shape)
        ll_ref[...] = jnp.zeros_like(ll_ref)

    # --- decoder LSTM stack ---
    inp = din_ref[...]                                        # (Bt, Ep)
    for l in range(n_layers):
        wcat = lstm_refs[2 * l][...]
        bias = lstm_refs[2 * l + 1][...]
        h_new, c_new = _lstm_gates(inp, hs_ref[l], cs_ref[l], wcat, bias)
        hs_ref[l] = h_new
        cs_ref[l] = c_new
        inp = h_new
    d = inp                                                   # (Bt, Hp)

    # --- pointer attention (time-major: choice axis on sublanes) ---
    q = jnp.dot(d, w2_ref[...], preferred_element_type=jnp.float32)   # (Bt, Hp)
    tact = jnp.tanh(eproj_ref[...] + q[None, :, :])                   # (S, Bt, Hp)
    u = jnp.sum(tact * v_ref[...], axis=-1)                           # (S, Bt)
    if clip:
        u = 10.0 * jnp.tanh(u)                                        # logit clipping C=10
    cur_mask = msk_ref[...]
    logits = jnp.where(cur_mask > 0.5, u, jnp.float32(-1e9))

    # log-softmax over the choice axis (axis 0)
    m = jnp.max(logits, axis=0, keepdims=True)
    z = jnp.sum(jnp.exp(logits - m), axis=0, keepdims=True)
    log_p = logits - m - jnp.log(z)

    # greedy argmax / Gumbel-max sampling
    score = logits + noise_ref[0] if sampling else logits
    best = jnp.max(score, axis=0, keepdims=True)
    idx = jax.lax.broadcasted_iota(jnp.int32, (S, Bt), 0)
    choice = jnp.min(jnp.where(score >= best, idx, S), axis=0, keepdims=True)  # (1, Bt)
    onehot = (idx == choice).astype(jnp.float32)                               # (S, Bt)

    ll_ref[...] += jnp.sum(onehot * log_p, axis=0, keepdims=True)
    msk_ref[...] = cur_mask * (1.0 - onehot)
    din_ref[...] = jnp.sum(emb_ref[...] * onehot[:, :, None], axis=0)          # (Bt, Ep)
    choices_ref[pl.ds(t, 1), :] = choice


def decode(eproj_tm, emb_tm, mask_tm, noise, h0, c0, dec_params, w2, v3, dec_start,
           clip, sampling):
    S, Bt, Hp = eproj_tm.shape
    Ep = emb_tm.shape[-1]
    L = len(dec_params)

    inputs = [eproj_tm, emb_tm, mask_tm, noise, h0, c0]
    in_specs = [
        pl.BlockSpec((S, Bt, Hp), lambda t: (0, 0, 0)),
        pl.BlockSpec((S, Bt, Ep), lambda t: (0, 0, 0)),
        pl.BlockSpec((S, Bt), lambda t: (0, 0)),
        pl.BlockSpec((1, S, Bt), lambda t: (t, 0, 0)),
        pl.BlockSpec((L, Bt, Hp), lambda t: (0, 0, 0)),
        pl.BlockSpec((L, Bt, Hp), lambda t: (0, 0, 0)),
    ]
    for wcat, b in dec_params:
        inputs += [wcat, b]
        in_specs += [
            pl.BlockSpec(wcat.shape, lambda t: (0, 0)),
            pl.BlockSpec(b.shape, lambda t: (0, 0)),
        ]
    inputs += [w2, v3, dec_start]
    in_specs += [
        pl.BlockSpec(w2.shape, lambda t: (0, 0)),
        pl.BlockSpec(v3.shape, lambda t: (0, 0, 0)),
        pl.BlockSpec(dec_start.shape, lambda t: (0, 0)),
    ]

    out_shape = (
        jax.ShapeDtypeStruct((S, Bt), jnp.int32),     # chosen indices (time-major)
        jax.ShapeDtypeStruct((1, Bt), jnp.float32),   # log-likelihood
    )
    out_specs = (
        pl.BlockSpec((S, Bt), lambda t: (0, 0)),
        pl.BlockSpec((1, Bt), lambda t: (0, 0)),
    )
    scratch = [
        pltpu.VMEM((S, Bt), jnp.float32),      # running mask
        pltpu.VMEM((L, Bt, Hp), jnp.float32),  # decoder h
        pltpu.VMEM((L, Bt, Hp), jnp.float32),  # decoder c
        pltpu.VMEM((Bt, Ep), jnp.float32),     # next decoder input
    ]
    kern = functools.partial(_decoder_kernel, n_layers=L, clip=clip, sampling=sampling)
    choices_tm, ll = pl.pallas_call(
        kern,
        out_shape=out_shape,
        grid=(S,),
        in_specs=in_specs,
        out_specs=out_specs,
        scratch_shapes=scratch,
        compiler_params=pltpu.CompilerParams(dimension_semantics=("arbitrary",)),
    )(*inputs)
    return choices_tm.T, ll[0]


# ----------------------------------------------------------------------------
# MpnnPtr model (parameters + forward orchestration)
# ----------------------------------------------------------------------------
class MpnnPtrPallas:
    def __init__(self, input_dim, embedding_dim, hidden_dim, K, n_layers,
                 p_dropout, logit_clipping=True, decoding_type="sampling",
                 feature_scale=1.0, seed=0):
        self.input_dim = input_dim
        self.E = embedding_dim
        self.H = hidden_dim
        self.Ep = _round_up(embedding_dim, LANE)   # lane-padded feature dims
        self.Hp = _round_up(hidden_dim, LANE)
        self.K = K
        self.n_layers = n_layers
        self.p_dropout = p_dropout                 # TODO(synk): dropout is a no-op at inference time.
        self.logit_clipping = logit_clipping
        self.decoding_type = decoding_type
        self.feature_scale = feature_scale

        key = jax.random.PRNGKey(seed)
        keys = iter(jax.random.split(key, 64))

        def nrm(k, shape, scale=0.1):
            return (scale * jax.random.normal(k, shape)).astype(jnp.float32)

        # --- MPNN (node embed + K rounds, Wself|Wmsg concatenated, zero-padded) ---
        self.embed_w = jnp.zeros((input_dim, self.Ep), jnp.float32).at[
            :, :embedding_dim].set(nrm(next(keys), (input_dim, embedding_dim)))
        self.embed_b = jnp.zeros((1, self.Ep), jnp.float32)

        self.mpnn_w, self.mpnn_b = [], []
        for _ in range(K):
            ws = nrm(next(keys), (embedding_dim, embedding_dim))
            wm = nrm(next(keys), (embedding_dim, embedding_dim))
            wcat = jnp.zeros((self.Ep, 2 * self.Ep), jnp.float32)
            wcat = wcat.at[:embedding_dim, :embedding_dim].set(ws)
            wcat = wcat.at[:embedding_dim, self.Ep:self.Ep + embedding_dim].set(wm)
            self.mpnn_w.append(wcat)
            self.mpnn_b.append(jnp.zeros((1, self.Ep), jnp.float32))

        # --- PointerNet LSTMs: [Wih; Whh] concatenated, gates lane-aligned, zero-padded ---
        def lstm_params(k, in_dim, in_pad):
            k1, k2 = jax.random.split(k)
            wih = nrm(k1, (in_dim, 4, hidden_dim))
            whh = nrm(k2, (hidden_dim, 4, hidden_dim))
            wcat = jnp.zeros((in_pad + self.Hp, 4, self.Hp), jnp.float32)
            wcat = wcat.at[:in_dim, :, :hidden_dim].set(wih)
            wcat = wcat.at[in_pad:in_pad + hidden_dim, :, :hidden_dim].set(whh)
            wcat = wcat.reshape(in_pad + self.Hp, 4 * self.Hp)
            # NOTE: single combined bias (b_ih + b_hh merged); zero-init here.
            bias = jnp.zeros((1, 4 * self.Hp), jnp.float32)
            return wcat, bias

        self.enc_lstm = [lstm_params(next(keys),
                                     embedding_dim if l == 0 else hidden_dim,
                                     self.Ep if l == 0 else self.Hp)
                         for l in range(n_layers)]
        self.dec_lstm = [lstm_params(next(keys),
                                     embedding_dim if l == 0 else hidden_dim,
                                     self.Ep if l == 0 else self.Hp)
                         for l in range(n_layers)]

        # --- pointer attention (zero-padded) ---
        self.w1 = jnp.zeros((self.Hp, self.Hp), jnp.float32).at[
            :hidden_dim, :hidden_dim].set(nrm(next(keys), (hidden_dim, hidden_dim)))
        self.w1_b = jnp.zeros((1, self.Hp), jnp.float32)
        self.w2 = jnp.zeros((self.Hp, self.Hp), jnp.float32).at[
            :hidden_dim, :hidden_dim].set(nrm(next(keys), (hidden_dim, hidden_dim)))
        self.v = jnp.zeros((1, 1, self.Hp), jnp.float32).at[
            0, 0, :hidden_dim].set(nrm(next(keys), (hidden_dim,)))
        self.dec_start = jnp.zeros((1, self.Ep), jnp.float32).at[
            :, :embedding_dim].set(nrm(next(keys), (1, embedding_dim)))

        self.sample_key = jax.random.PRNGKey(seed + 1)
        self._forward_jit = jax.jit(self._forward_impl,
                                    static_argnums=(5, 6, 7, 8, 9))

    # ----- graph encoder (Mpnn) -----
    def _mpnn(self, x, edge_index, edge_attr, batch, B, S):
        N = x.shape[0]
        x = x.astype(jnp.float32) / self.feature_scale
        edge_attr = edge_attr.astype(jnp.float32) / self.feature_scale

        counts = jnp.bincount(batch, length=B)
        starts = jnp.concatenate([jnp.zeros((1,), jnp.int32),
                                  jnp.cumsum(counts)[:-1].astype(jnp.int32)])
        pos = jnp.arange(N, dtype=jnp.int32) - starts[batch]

        # dense weighted adjacency: A[b, dst_local, src_local] += edge_attr
        src, dst = edge_index[0], edge_index[1]
        b_e = batch[src]
        adj = jnp.zeros((B, S, S), jnp.float32).at[b_e, pos[dst], pos[src]].add(edge_attr)

        # node embedding (Pallas linear), then scatter to dense batch
        h_flat = linear(x, self.embed_w, self.embed_b)                        # (N, Ep)
        h = jnp.zeros((B, S, self.Ep), jnp.float32).at[batch, pos].set(h_flat)
        mask = jnp.zeros((B, S), jnp.float32).at[batch, pos].set(1.0)

        h = mpnn_stack(h, adj, mask[:, :, None], self.mpnn_w, self.mpnn_b)
        return h, mask

    # ----- pointer network -----
    def _ptr_net(self, emb, mask, num_samples, key, sampling, clip):
        B, S, _ = emb.shape

        # time-major layout == original batched_embeddings.permute(1, 0, 2)
        emb_tm = jnp.transpose(emb, (1, 0, 2))                                # (S, B, Ep)
        eproj_tm, h_fin, c_fin = encode(emb_tm, self.enc_lstm, self.w1, self.w1_b)

        ns = num_samples
        if ns > 1:
            # TODO(synk): replicas are bit-identical; could be deduped via index_map reuse.
            emb_tm = jnp.repeat(emb_tm, ns, axis=1)
            eproj_tm = jnp.repeat(eproj_tm, ns, axis=1)
            mask = jnp.repeat(mask, ns, axis=0)
            h_fin = jnp.repeat(h_fin, ns, axis=1)
            c_fin = jnp.repeat(c_fin, ns, axis=1)
        Bt = B * ns
        mask_tm = jnp.transpose(mask, (1, 0))                                 # (S, Bt)

        if sampling:
            noise = jax.random.gumbel(key, (S, S, Bt), dtype=jnp.float32)
        else:
            noise = jnp.zeros((S, S, Bt), jnp.float32)

        return decode(eproj_tm, emb_tm, mask_tm, noise, h_fin, c_fin,
                      self.dec_lstm, self.w2, self.v, self.dec_start,
                      clip=clip, sampling=sampling)

    def _forward_impl(self, x, edge_index, edge_attr, batch, key,
                      B, S, num_samples, sampling, clip):
        emb, mask = self._mpnn(x, edge_index, edge_attr, batch, B, S)
        return self._ptr_net(emb, mask, num_samples, key, sampling, clip)

    def forward(self, x, edge_index, edge_attr, batch, B, S, num_samples=1):
        return self._forward_jit(x, edge_index, edge_attr, batch, self.sample_key,
                                 B, S, num_samples,
                                 self.decoding_type == "sampling",
                                 self.logit_clipping)


# ----------------------------------------------------------------------------
# demo
# ----------------------------------------------------------------------------
if __name__ == "__main__":
    input_dim = 4
    embedding_dim = 32
    hidden_dim = 32
    K = 2
    n_layers = 1
    p_dropout = 0.1
    B, S = 2, 8
    N = B * S

    key = jax.random.PRNGKey(0)
    kx, ke = jax.random.split(key)

    x = jax.random.normal(kx, (N, input_dim), dtype=jnp.float32)
    batch = jnp.repeat(jnp.arange(B, dtype=jnp.int32), S)

    # bidirectional ring graph inside each of the B graphs
    src_list, dst_list = [], []
    for b in range(B):
        for i in range(S):
            a = b * S + i
            c = b * S + (i + 1) % S
            src_list += [a, c]
            dst_list += [c, a]
    edge_index = jnp.array([src_list, dst_list], dtype=jnp.int32)             # (2, 2*B*S)
    edge_attr = jnp.abs(jax.random.normal(ke, (edge_index.shape[1],), dtype=jnp.float32)) + 0.5

    model = MpnnPtrPallas(input_dim, embedding_dim, hidden_dim, K, n_layers,
                          p_dropout, logit_clipping=True,
                          decoding_type="sampling", feature_scale=2.0, seed=0)

    seqs, log_like = model.forward(x, edge_index, edge_attr, batch, B, S, num_samples=1)
    jax.block_until_ready((seqs, log_like))

    assert seqs.shape == (B, S) and log_like.shape == (B,)
    print("KERNEL_OK")
</pallas_src>

<mosaic_0001>
module attributes {stable_mosaic.version = 11 : i64} {
  func.func @_linear_kernel(%arg0: i32, %arg1: memref<16x4xf32, #tpu.memory_space<vmem>>, %arg2: memref<4x128xf32, #tpu.memory_space<vmem>>, %arg3: memref<1x128xf32, #tpu.memory_space<vmem>>, %arg4: memref<16x128xf32, #tpu.memory_space<vmem>>) attributes {dimension_semantics = [#tpu.dimension_semantics<arbitrary>], iteration_bounds = array<i64: 1>, scalar_prefetch = 0 : i64, scratch_operands = 0 : i64, tpu.core_type = #tpu.core_type<tc>, window_params = [{pipeline_mode = #tpu.pipeline_mode<synchronous>, transform_indices = @transform_0, window_bounds = array<i64: 16, 4>}, {pipeline_mode = #tpu.pipeline_mode<synchronous>, transform_indices = @transform_1, window_bounds = array<i64: 4, 128>}, {pipeline_mode = #tpu.pipeline_mode<synchronous>, transform_indices = @transform_2, window_bounds = array<i64: 1, 128>}, {pipeline_mode = #tpu.pipeline_mode<synchronous>, transform_indices = @transform_3, window_bounds = array<i64: 16, 128>}]} {
    %c0 = arith.constant 0 : index
    %c0_0 = arith.constant 0 : index
    %0 = vector.load %arg1[%c0, %c0_0] : memref<16x4xf32, #tpu.memory_space<vmem>>, vector<16x4xf32>
    %c0_1 = arith.constant 0 : index
    %c0_2 = arith.constant 0 : index
    %1 = vector.load %arg2[%c0_1, %c0_2] : memref<4x128xf32, #tpu.memory_space<vmem>>, vector<4x128xf32>
    %cst = arith.constant dense<0.000000e+00> : vector<16x128xf32>
    %2 = tpu.matmul %0, %1, %cst {dimension_numbers = #tpu.dot_dimension_numbers<[1], [0], [0], [1], [0, 0, 1, 1], [], []>} : vector<16x4xf32>, vector<4x128xf32>, vector<16x128xf32> -> vector<16x128xf32>
    %c0_3 = arith.constant 0 : index
    %c0_4 = arith.constant 0 : index
    %3 = vector.load %arg3[%c0_3, %c0_4] : memref<1x128xf32, #tpu.memory_space<vmem>>, vector<1x128xf32>
    %4 = vector.broadcast %3 : vector<1x128xf32> to vector<16x128xf32>
    %5 = arith.addf %2, %4 : vector<16x128xf32>
    %c0_5 = arith.constant 0 : index
    %c0_6 = arith.constant 0 : index
    %6 = vector.load %arg4[%c0_5, %c0_6] : memref<16x128xf32, #tpu.memory_space<vmem>>, vector<16x128xf32>
    tpu.vector_store %arg4[%c0_5, %c0_6], %5 {strides = array<i32>} : memref<16x128xf32, #tpu.memory_space<vmem>>, vector<16x128xf32>,
    return
  }
  func.func @transform_0(%arg0: i32) -> (i32, i32) {
    %c0_i32 = arith.constant 0 : i32
    %c0_i32_0 = arith.constant 0 : i32
    %c0_i32_1 = arith.constant 0 : i32
    return %c0_i32, %c0_i32_0 : i32, i32
  }
  func.func @transform_1(%arg0: i32) -> (i32, i32) {
    %c0_i32 = arith.constant 0 : i32
    %c0_i32_0 = arith.constant 0 : i32
    %c0_i32_1 = arith.constant 0 : i32
    return %c0_i32, %c0_i32_0 : i32, i32
  }
  func.func @transform_2(%arg0: i32) -> (i32, i32) {
    %c0_i32 = arith.constant 0 : i32
    %c0_i32_0 = arith.constant 0 : i32
    %c0_i32_1 = arith.constant 0 : i32
    return %c0_i32, %c0_i32_0 : i32, i32
  }
  func.func @transform_3(%arg0: i32) -> (i32, i32) {
    %c0_i32 = arith.constant 0 : i32
    %c0_i32_0 = arith.constant 0 : i32
    %c0_i32_1 = arith.constant 0 : i32
    return %c0_i32, %c0_i32_0 : i32, i32
  }
}

module attributes {stable_mosaic.version = 11 : i64} {
  func.func @_mpnn_kernel(%arg0: i32, %arg1: memref<1x8x128xf32, #tpu.memory_space<vmem>>, %arg2: memref<1x8x8xf32, #tpu.memory_space<vmem>>, %arg3: memref<1x8x1xf32, #tpu.memory_space<vmem>>, %arg4: memref<128x256xf32, #tpu.memory_space<vmem>>, %arg5: memref<1x128xf32, #tpu.memory_space<vmem>>, %arg6: memref<128x256xf32, #tpu.memory_space<vmem>>, %arg7: memref<1x128xf32, #tpu.memory_space<vmem>>, %arg8: memref<1x8x128xf32, #tpu.memory_space<vmem>>) attributes {dimension_semantics = [#tpu.dimension_semantics<parallel>], iteration_bounds = array<i64: 2>, scalar_prefetch = 0 : i64, scratch_operands = 0 : i64, tpu.core_type = #tpu.core_type<tc>, window_params = [{transform_indices = @transform_0, window_bounds = array<i64: 1, 8, 128>}, {transform_indices = @transform_1, window_bounds = array<i64: 1, 8, 8>}, {transform_indices = @transform_2, window_bounds = array<i64: 1, 8, 1>}, {pipeline_mode = #tpu.pipeline_mode<synchronous>, transform_indices = @transform_3, window_bounds = array<i64: 128, 256>}, {pipeline_mode = #tpu.pipeline_mode<synchronous>, transform_indices = @transform_4, window_bounds = array<i64: 1, 128>}, {pipeline_mode = #tpu.pipeline_mode<synchronous>, transform_indices = @transform_5, window_bounds = array<i64: 128, 256>}, {pipeline_mode = #tpu.pipeline_mode<synchronous>, transform_indices = @transform_6, window_bounds = array<i64: 1, 128>}, {transform_indices = @transform_7, window_bounds = array<i64: 1, 8, 128>}]} {
    %c0 = arith.constant 0 : index
    %c0_0 = arith.constant 0 : index
    %c0_1 = arith.constant 0 : index
    %0 = vector.load %arg1[%c0, %c0_0, %c0_1] : memref<1x8x128xf32, #tpu.memory_space<vmem>>, vector<1x8x128xf32>
    %1 = vector.shape_cast %0 : vector<1x8x128xf32> to vector<8x128xf32>
    %c0_2 = arith.constant 0 : index
    %c0_3 = arith.constant 0 : index
    %c0_4 = arith.constant 0 : index
    %2 = vector.load %arg2[%c0_2, %c0_3, %c0_4] : memref<1x8x8xf32, #tpu.memory_space<vmem>>, vector<1x8x8xf32>
    %3 = vector.shape_cast %2 : vector<1x8x8xf32> to vector<8x8xf32>
    %c0_5 = arith.constant 0 : index
    %c0_6 = arith.constant 0 : index
    %c0_7 = arith.constant 0 : index
    %4 = vector.load %arg3[%c0_5, %c0_6, %c0_7] : memref<1x8x1xf32, #tpu.memory_space<vmem>>, vector<1x8x1xf32>
    %5 = vector.shape_cast %4 : vector<1x8x1xf32> to vector<8x1xf32>
    %c0_8 = arith.constant 0 : index
    %c0_9 = arith.constant 0 : index
    %6 = vector.load %arg4[%c0_8, %c0_9] : memref<128x256xf32, #tpu.memory_space<vmem>>, vector<128x256xf32>
    %c0_10 = arith.constant 0 : index
    %c0_11 = arith.constant 0 : index
    %7 = vector.load %arg5[%c0_10, %c0_11] : memref<1x128xf32, #tpu.memory_space<vmem>>, vector<1x128xf32>
    %cst = arith.constant dense<0.000000e+00> : vector<8x256xf32>
    %8 = tpu.matmul %1, %6, %cst {dimension_numbers = #tpu.dot_dimension_numbers<[1], [0], [0], [1], [0, 0, 1, 1], [], []>} : vector<8x128xf32>, vector<128x256xf32>, vector<8x256xf32> -> vector<8x256xf32>
    %9 = vector.extract_strided_slice %8 {offsets = [0, 0], sizes = [8, 128], strides = [1, 1]} : vector<8x256xf32> to vector<8x128xf32>
    %10 = vector.extract_strided_slice %8 {offsets = [0, 128], sizes = [8, 128], strides = [1, 1]} : vector<8x256xf32> to vector<8x128xf32>
    %cst_12 = arith.constant dense<0.000000e+00> : vector<8x128xf32>
    %11 = tpu.matmul %3, %10, %cst_12 {dimension_numbers = #tpu.dot_dimension_numbers<[1], [0], [0], [1], [0, 0, 1, 1], [], []>} : vector<8x8xf32>, vector<8x128xf32>, vector<8x128xf32> -> vector<8x128xf32>
    %12 = arith.addf %9, %11 : vector<8x128xf32>
    %13 = vector.broadcast %7 : vector<1x128xf32> to vector<8x128xf32>
    %14 = arith.addf %12, %13 : vector<8x128xf32>
    %cst_13 = arith.constant 0.000000e+00 : f32
    %15 = vector.broadcast %cst_13 : f32 to vector<8x128xf32>
    %16 = arith.maximumf %14, %15 : vector<8x128xf32>
    %17 = vector.broadcast %5 : vector<8x1xf32> to vector<8x128xf32>
    %18 = arith.mulf %16, %17 : vector<8x128xf32>
    %c0_14 = arith.constant 0 : index
    %c0_15 = arith.constant 0 : index
    %19 = vector.load %arg6[%c0_14, %c0_15] : memref<128x256xf32, #tpu.memory_space<vmem>>, vector<128x256xf32>
    %c0_16 = arith.constant 0 : index
    %c0_17 = arith.constant 0 : index
    %20 = vector.load %arg7[%c0_16, %c0_17] : memref<1x128xf32, #tpu.memory_space<vmem>>, vector<1x128xf32>
    %cst_18 = arith.constant dense<0.000000e+00> : vector<8x256xf32>
    %21 = tpu.matmul %18, %19, %cst_18 {dimension_numbers = #tpu.dot_dimension_numbers<[1], [0], [0], [1], [0, 0, 1, 1], [], []>} : vector<8x128xf32>, vector<128x256xf32>, vector<8x256xf32> -> vector<8x256xf32>
    %22 = vector.extract_strided_slice %21 {offsets = [0, 0], sizes = [8, 128], strides = [1, 1]} : vector<8x256xf32> to vector<8x128xf32>
    %23 = vector.extract_strided_slice %21 {offsets = [0, 128], sizes = [8, 128], strides = [1, 1]} : vector<8x256xf32> to vector<8x128xf32>
    %cst_19 = arith.constant dense<0.000000e+00> : vector<8x128xf32>
    %24 = tpu.matmul %3, %23, %cst_19 {dimension_numbers = #tpu.dot_dimension_numbers<[1], [0], [0], [1], [0, 0, 1, 1], [], []>} : vector<8x8xf32>, vector<8x128xf32>, vector<8x128xf32> -> vector<8x128xf32>
    %25 = arith.addf %22, %24 : vector<8x128xf32>
    %26 = vector.broadcast %20 : vector<1x128xf32> to vector<8x128xf32>
    %27 = arith.addf %25, %26 : vector<8x128xf32>
    %cst_20 = arith.constant 0.000000e+00 : f32
    %28 = vector.broadcast %cst_20 : f32 to vector<8x128xf32>
    %29 = arith.maximumf %27, %28 : vector<8x128xf32>
    %30 = vector.broadcast %5 : vector<8x1xf32> to vector<8x128xf32>
    %31 = arith.mulf %29, %30 : vector<8x128xf32>
    %c0_21 = arith.constant 0 : index
    %c0_22 = arith.constant 0 : index
    %c0_23 = arith.constant 0 : index
    %32 = vector.load %arg8[%c0_21, %c0_22, %c0_23] : memref<1x8x128xf32, #tpu.memory_space<vmem>>, vector<1x8x128xf32>
    %33 = vector.shape_cast %32 : vector<1x8x128xf32> to vector<8x128xf32>
    %34 = vector.shape_cast %31 : vector<8x128xf32> to vector<1x8x128xf32>
    tpu.vector_store %arg8[%c0_21, %c0_22, %c0_23], %34 {strides = array<i32>} : memref<1x8x128xf32, #tpu.memory_space<vmem>>, vector<1x8x128xf32>,
    return
  }
  func.func @transform_0(%arg0: i32) -> (i32, i32, i32) {
    %c0_i32 = arith.constant 0 : i32
    %c0_i32_0 = arith.constant 0 : i32
    %c0_i32_1 = arith.constant 0 : i32
    return %arg0, %c0_i32, %c0_i32_0 : i32, i32, i32
  }
  func.func @transform_1(%arg0: i32) -> (i32, i32, i32) {
    %c0_i32 = arith.constant 0 : i32
    %c0_i32_0 = arith.constant 0 : i32
    %c0_i32_1 = arith.constant 0 : i32
    return %arg0, %c0_i32, %c0_i32_0 : i32, i32, i32
  }
  func.func @transform_2(%arg0: i32) -> (i32, i32, i32) {
    %c0_i32 = arith.constant 0 : i32
    %c0_i32_0 = arith.constant 0 : i32
    %c0_i32_1 = arith.constant 0 : i32
    return %arg0, %c0_i32, %c0_i32_0 : i32, i32, i32
  }
  func.func @transform_3(%arg0: i32) -> (i32, i32) {
    %c0_i32 = arith.constant 0 : i32
    %c0_i32_0 = arith.constant 0 : i32
    %c0_i32_1 = arith.constant 0 : i32
    return %c0_i32, %c0_i32_0 : i32, i32
  }
  func.func @transform_4(%arg0: i32) -> (i32, i32) {
    %c0_i32 = arith.constant 0 : i32
    %c0_i32_0 = arith.constant 0 : i32
    %c0_i32_1 = arith.constant 0 : i32
    return %c0_i32, %c0_i32_0 : i32, i32
  }
  func.func @transform_5(%arg0: i32) -> (i32, i32) {
    %c0_i32 = arith.constant 0 : i32
    %c0_i32_0 = arith.constant 0 : i32
    %c0_i32_1 = arith.constant 0 : i32
    return %c0_i32, %c0_i32_0 : i32, i32
  }
  func.func @transform_6(%arg0: i32) -> (i32, i32) {
    %c0_i32 = arith.constant 0 : i32
    %c0_i32_0 = arith.constant 0 : i32
    %c0_i32_1 = arith.constant 0 : i32
    return %c0_i32, %c0_i32_0 : i32, i32
  }
  func.func @transform_7(%arg0: i32) -> (i32, i32, i32) {
    %c0_i32 = arith.constant 0 : i32
    %c0_i32_0 = arith.constant 0 : i32
    %c0_i32_1 = arith.constant 0 : i32
    return %arg0, %c0_i32, %c0_i32_0 : i32, i32, i32
  }
}

module attributes {stable_mosaic.version = 11 : i64} {
  func.func @_encoder_kernel(%arg0: i32, %arg1: memref<1x2x128xf32, #tpu.memory_space<vmem>>, %arg2: memref<256x512xf32, #tpu.memory_space<vmem>>, %arg3: memref<1x512xf32, #tpu.memory_space<vmem>>, %arg4: memref<128x128xf32, #tpu.memory_space<vmem>>, %arg5: memref<1x128xf32, #tpu.memory_space<vmem>>, %arg6: memref<1x2x128xf32, #tpu.memory_space<vmem>>, %arg7: memref<1x2x128xf32, #tpu.memory_space<vmem>>, %arg8: memref<1x2x128xf32, #tpu.memory_space<vmem>>) attributes {dimension_semantics = [#tpu.dimension_semantics<arbitrary>], iteration_bounds = array<i64: 8>, scalar_prefetch = 0 : i64, scratch_operands = 0 : i64, tpu.core_type = #tpu.core_type<tc>, window_params = [{transform_indices = @transform_0, window_bounds = array<i64: 1, 2, 128>}, {pipeline_mode = #tpu.pipeline_mode<synchronous>, transform_indices = @transform_1, window_bounds = array<i64: 256, 512>}, {pipeline_mode = #tpu.pipeline_mode<synchronous>, transform_indices = @transform_2, window_bounds = array<i64: 1, 512>}, {pipeline_mode = #tpu.pipeline_mode<synchronous>, transform_indices = @transform_3, window_bounds = array<i64: 128, 128>}, {pipeline_mode = #tpu.pipeline_mode<synchronous>, transform_indices = @transform_4, window_bounds = array<i64: 1, 128>}, {transform_indices = @transform_5, window_bounds = array<i64: 1, 2, 128>}, {pipeline_mode = #tpu.pipeline_mode<synchronous>, transform_indices = @transform_6, window_bounds = array<i64: 1, 2, 128>}, {pipeline_mode = #tpu.pipeline_mode<synchronous>, transform_indices = @transform_7, window_bounds = array<i64: 1, 2, 128>}]} {
    %c0_i32 = arith.constant 0 : i32
    %0 = arith.cmpi eq, %arg0, %c0_i32 : i32
    %1 = arith.extui %0 : i1 to i32
    %c0_i32_0 = arith.constant 0 : i32
    %2 = arith.cmpi ne, %1, %c0_i32_0 : i32
    scf.if %2 {
      %cst_30 = arith.constant 0.000000e+00 : f32
      %54 = vector.broadcast %cst_30 : f32 to vector<1x2x128xf32>
      %c0_31 = arith.constant 0 : index
      %c0_32 = arith.constant 0 : index
      %c0_33 = arith.constant 0 : index
      %55 = vector.load %arg7[%c0_31, %c0_32, %c0_33] : memref<1x2x128xf32, #tpu.memory_space<vmem>>, vector<1x2x128xf32>
      tpu.vector_store %arg7[%c0_31, %c0_32, %c0_33], %54 {strides = array<i32>} : memref<1x2x128xf32, #tpu.memory_space<vmem>>, vector<1x2x128xf32>,
      %cst_34 = arith.constant 0.000000e+00 : f32
      %56 = vector.broadcast %cst_34 : f32 to vector<1x2x128xf32>
      %c0_35 = arith.constant 0 : index
      %c0_36 = arith.constant 0 : index
      %c0_37 = arith.constant 0 : index
      %57 = vector.load %arg8[%c0_35, %c0_36, %c0_37] : memref<1x2x128xf32, #tpu.memory_space<vmem>>, vector<1x2x128xf32>
      tpu.vector_store %arg8[%c0_35, %c0_36, %c0_37], %56 {strides = array<i32>} : memref<1x2x128xf32, #tpu.memory_space<vmem>>, vector<1x2x128xf32>,
    } else {
    }
    %c0 = arith.constant 0 : index
    %c0_1 = arith.constant 0 : index
    %c0_2 = arith.constant 0 : index
    %3 = vector.load %arg1[%c0, %c0_1, %c0_2] : memref<1x2x128xf32, #tpu.memory_space<vmem>>, vector<1x2x128xf32>
    %4 = vector.shape_cast %3 : vector<1x2x128xf32> to vector<2x128xf32>
    %c0_3 = arith.constant 0 : index
    %c0_4 = arith.constant 0 : index
    %5 = vector.load %arg2[%c0_3, %c0_4] : memref<256x512xf32, #tpu.memory_space<vmem>>, vector<256x512xf32>
    %c0_5 = arith.constant 0 : index
    %c0_6 = arith.constant 0 : index
    %6 = vector.load %arg3[%c0_5, %c0_6] : memref<1x512xf32, #tpu.memory_space<vmem>>, vector<1x512xf32>
    %c0_7 = arith.constant 0 : index
    %c0_8 = arith.constant 0 : index
    %c0_9 = arith.constant 0 : index
    %7 = vector.load %arg7[%c0_7, %c0_8, %c0_9] : memref<1x2x128xf32, #tpu.memory_space<vmem>>, vector<1x2x128xf32>
    %8 = vector.shape_cast %7 : vector<1x2x128xf32> to vector<2x128xf32>
    %c0_10 = arith.constant 0 : index
    %c0_11 = arith.constant 0 : index
    %c0_12 = arith.constant 0 : index
    %9 = vector.load %arg8[%c0_10, %c0_11, %c0_12] : memref<1x2x128xf32, #tpu.memory_space<vmem>>, vector<1x2x128xf32>
    %10 = vector.shape_cast %9 : vector<1x2x128xf32> to vector<2x128xf32>
    %11 = tpu.concatenate %4, %8 in 1 : vector<2x128xf32>, vector<2x128xf32> -> vector<2x256xf32>
    %cst = arith.constant dense<0.000000e+00> : vector<2x512xf32>
    %12 = tpu.matmul %11, %5, %cst {dimension_numbers = #tpu.dot_dimension_numbers<[1], [0], [0], [1], [0, 0, 1, 1], [], []>} : vector<2x256xf32>, vector<256x512xf32>, vector<2x512xf32> -> vector<2x512xf32>
    %13 = vector.broadcast %6 : vector<1x512xf32> to vector<2x512xf32>
    %14 = arith.addf %12, %13 : vector<2x512xf32>
    %15 = vector.extract_strided_slice %14 {offsets = [0, 0], sizes = [2, 128], strides = [1, 1]} : vector<2x512xf32> to vector<2x128xf32>
    %16 = arith.negf %15 : vector<2x128xf32>
    %17 = math.exp %16 : vector<2x128xf32>
    %cst_13 = arith.constant 1.000000e+00 : f32
    %18 = vector.broadcast %cst_13 : f32 to vector<2x128xf32>
    %19 = arith.addf %18, %17 : vector<2x128xf32>
    %20 = arith.divf %18, %19 : vector<2x128xf32>
    %21 = vector.extract_strided_slice %14 {offsets = [0, 128], sizes = [2, 128], strides = [1, 1]} : vector<2x512xf32> to vector<2x128xf32>
    %22 = arith.negf %21 : vector<2x128xf32>
    %23 = math.exp %22 : vector<2x128xf32>
    %cst_14 = arith.constant 1.000000e+00 : f32
    %24 = vector.broadcast %cst_14 : f32 to vector<2x128xf32>
    %25 = arith.addf %24, %23 : vector<2x128xf32>
    %26 = arith.divf %24, %25 : vector<2x128xf32>
    %27 = vector.extract_strided_slice %14 {offsets = [0, 256], sizes = [2, 128], strides = [1, 1]} : vector<2x512xf32> to vector<2x128xf32>
    %28 = math.tanh %27 : vector<2x128xf32>
    %29 = vector.extract_strided_slice %14 {offsets = [0, 384], sizes = [2, 128], strides = [1, 1]} : vector<2x512xf32> to vector<2x128xf32>
    %30 = arith.negf %29 : vector<2x128xf32>
    %31 = math.exp %30 : vector<2x128xf32>
    %cst_15 = arith.constant 1.000000e+00 : f32
    %32 = vector.broadcast %cst_15 : f32 to vector<2x128xf32>
    %33 = arith.addf %32, %31 : vector<2x128xf32>
    %34 = arith.divf %32, %33 : vector<2x128xf32>
    %35 = arith.mulf %26, %10 : vector<2x128xf32>
    %36 = arith.mulf %20, %28 : vector<2x128xf32>
    %37 = arith.addf %35, %36 : vector<2x128xf32>
    %38 = math.tanh %37 : vector<2x128xf32>
    %39 = arith.mulf %34, %38 : vector<2x128xf32>
    %c0_16 = arith.constant 0 : index
    %c0_17 = arith.constant 0 : index
    %c0_18 = arith.constant 0 : index
    %40 = vector.load %arg7[%c0_16, %c0_17, %c0_18] : memref<1x2x128xf32, #tpu.memory_space<vmem>>, vector<1x2x128xf32>
    %41 = vector.shape_cast %40 : vector<1x2x128xf32> to vector<2x128xf32>
    %42 = vector.shape_cast %39 : vector<2x128xf32> to vector<1x2x128xf32>
    tpu.vector_store %arg7[%c0_16, %c0_17, %c0_18], %42 {strides = array<i32>} : memref<1x2x128xf32, #tpu.memory_space<vmem>>, vector<1x2x128xf32>,
    %c0_19 = arith.constant 0 : index
    %c0_20 = arith.constant 0 : index
    %c0_21 = arith.constant 0 : index
    %43 = vector.load %arg8[%c0_19, %c0_20, %c0_21] : memref<1x2x128xf32, #tpu.memory_space<vmem>>, vector<1x2x128xf32>
    %44 = vector.shape_cast %43 : vector<1x2x128xf32> to vector<2x128xf32>
    %45 = vector.shape_cast %37 : vector<2x128xf32> to vector<1x2x128xf32>
    tpu.vector_store %arg8[%c0_19, %c0_20, %c0_21], %45 {strides = array<i32>} : memref<1x2x128xf32, #tpu.memory_space<vmem>>, vector<1x2x128xf32>,
    %c0_22 = arith.constant 0 : index
    %c0_23 = arith.constant 0 : index
    %46 = vector.load %arg4[%c0_22, %c0_23] : memref<128x128xf32, #tpu.memory_space<vmem>>, vector<128x128xf32>
    %cst_24 = arith.constant dense<0.000000e+00> : vector<2x128xf32>
    %47 = tpu.matmul %39, %46, %cst_24 {dimension_numbers = #tpu.dot_dimension_numbers<[1], [0], [0], [1], [0, 0, 1, 1], [], []>} : vector<2x128xf32>, vector<128x128xf32>, vector<2x128xf32> -> vector<2x128xf32>
    %c0_25 = arith.constant 0 : index
    %c0_26 = arith.constant 0 : index
    %48 = vector.load %arg5[%c0_25, %c0_26] : memref<1x128xf32, #tpu.memory_space<vmem>>, vector<1x128xf32>
    %49 = vector.broadcast %48 : vector<1x128xf32> to vector<2x128xf32>
    %50 = arith.addf %47, %49 : vector<2x128xf32>
    %c0_27 = arith.constant 0 : index
    %c0_28 = arith.constant 0 : index
    %c0_29 = arith.constant 0 : index
    %51 = vector.load %arg6[%c0_27, %c0_28, %c0_29] : memref<1x2x128xf32, #tpu.memory_space<vmem>>, vector<1x2x128xf32>
    %52 = vector.shape_cast %51 : vector<1x2x128xf32> to vector<2x128xf32>
    %53 = vector.shape_cast %50 : vector<2x128xf32> to vector<1x2x128xf32>
    tpu.vector_store %arg6[%c0_27, %c0_28, %c0_29], %53 {strides = array<i32>} : memref<1x2x128xf32, #tpu.memory_space<vmem>>, vector<1x2x128xf32>,
    return
  }
  func.func @transform_0(%arg0: i32) -> (i32, i32, i32) {
    %c0_i32 = arith.constant 0 : i32
    %c0_i32_0 = arith.constant 0 : i32
    %c0_i32_1 = arith.constant 0 : i32
    return %arg0, %c0_i32, %c0_i32_0 : i32, i32, i32
  }
  func.func @transform_1(%arg0: i32) -> (i32, i32) {
    %c0_i32 = arith.constant 0 : i32
    %c0_i32_0 = arith.constant 0 : i32
    %c0_i32_1 = arith.constant 0 : i32
    return %c0_i32, %c0_i32_0 : i32, i32
  }
  func.func @transform_2(%arg0: i32) -> (i32, i32) {
    %c0_i32 = arith.constant 0 : i32
    %c0_i32_0 = arith.constant 0 : i32
    %c0_i32_1 = arith.constant 0 : i32
    return %c0_i32, %c0_i32_0 : i32, i32
  }
  func.func @transform_3(%arg0: i32) -> (i32, i32) {
    %c0_i32 = arith.constant 0 : i32
    %c0_i32_0 = arith.constant 0 : i32
    %c0_i32_1 = arith.constant 0 : i32
    return %c0_i32, %c0_i32_0 : i32, i32
  }
  func.func @transform_4(%arg0: i32) -> (i32, i32) {
    %c0_i32 = arith.constant 0 : i32
    %c0_i32_0 = arith.constant 0 : i32
    %c0_i32_1 = arith.constant 0 : i32
    return %c0_i32, %c0_i32_0 : i32, i32
  }
  func.func @transform_5(%arg0: i32) -> (i32, i32, i32) {
    %c0_i32 = arith.constant 0 : i32
    %c0_i32_0 = arith.constant 0 : i32
    %c0_i32_1 = arith.constant 0 : i32
    return %arg0, %c0_i32, %c0_i32_0 : i32, i32, i32
  }
  func.func @transform_6(%arg0: i32) -> (i32, i32, i32) {
    %c0_i32 = arith.constant 0 : i32
    %c0_i32_0 = arith.constant 0 : i32
    %c0_i32_1 = arith.constant 0 : i32
    %c0_i32_2 = arith.constant 0 : i32
    return %c0_i32, %c0_i32_0, %c0_i32_1 : i32, i32, i32
  }
  func.func @transform_7(%arg0: i32) -> (i32, i32, i32) {
    %c0_i32 = arith.constant 0 : i32
    %c0_i32_0 = arith.constant 0 : i32
    %c0_i32_1 = arith.constant 0 : i32
    %c0_i32_2 = arith.constant 0 : i32
    return %c0_i32, %c0_i32_0, %c0_i32_1 : i32, i32, i32
  }
}

module attributes {stable_mosaic.version = 11 : i64} {
  func.func @_decoder_kernel(%arg0: i32, %arg1: memref<8x2x128xf32, #tpu.memory_space<vmem>>, %arg2: memref<8x2x128xf32, #tpu.memory_space<vmem>>, %arg3: memref<8x2xf32, #tpu.memory_space<vmem>>, %arg4: memref<1x8x2xf32, #tpu.memory_space<vmem>>, %arg5: memref<1x2x128xf32, #tpu.memory_space<vmem>>, %arg6: memref<1x2x128xf32, #tpu.memory_space<vmem>>, %arg7: memref<256x512xf32, #tpu.memory_space<vmem>>, %arg8: memref<1x512xf32, #tpu.memory_space<vmem>>, %arg9: memref<128x128xf32, #tpu.memory_space<vmem>>, %arg10: memref<1x1x128xf32, #tpu.memory_space<vmem>>, %arg11: memref<1x128xf32, #tpu.memory_space<vmem>>, %arg12: memref<8x2xi32, #tpu.memory_space<vmem>>, %arg13: memref<1x2xf32, #tpu.memory_space<vmem>>, %arg14: memref<8x2xf32, #tpu.memory_space<vmem>>, %arg15: memref<1x2x128xf32, #tpu.memory_space<vmem>>, %arg16: memref<1x2x128xf32, #tpu.memory_space<vmem>>, %arg17: memref<2x128xf32, #tpu.memory_space<vmem>>) attributes {dimension_semantics = [#tpu.dimension_semantics<arbitrary>], iteration_bounds = array<i64: 8>, scalar_prefetch = 0 : i64, scratch_operands = 4 : i64, tpu.core_type = #tpu.core_type<tc>, window_params = [{pipeline_mode = #tpu.pipeline_mode<synchronous>, transform_indices = @transform_0, window_bounds = array<i64: 8, 2, 128>}, {pipeline_mode = #tpu.pipeline_mode<synchronous>, transform_indices = @transform_1, window_bounds = array<i64: 8, 2, 128>}, {pipeline_mode = #tpu.pipeline_mode<synchronous>, transform_indices = @transform_2, window_bounds = array<i64: 8, 2>}, {transform_indices = @transform_3, window_bounds = array<i64: 1, 8, 2>}, {pipeline_mode = #tpu.pipeline_mode<synchronous>, transform_indices = @transform_4, window_bounds = array<i64: 1, 2, 128>}, {pipeline_mode = #tpu.pipeline_mode<synchronous>, transform_indices = @transform_5, window_bounds = array<i64: 1, 2, 128>}, {pipeline_mode = #tpu.pipeline_mode<synchronous>, transform_indices = @transform_6, window_bounds = array<i64: 256, 512>}, {pipeline_mode = #tpu.pipeline_mode<synchronous>, transform_indices = @transform_7, window_bounds = array<i64: 1, 512>}, {pipeline_mode = #tpu.pipeline_mode<synchronous>, transform_indices = @transform_8, window_bounds = array<i64: 128, 128>}, {pipeline_mode = #tpu.pipeline_mode<synchronous>, transform_indices = @transform_9, window_bounds = array<i64: 1, 1, 128>}, {pipeline_mode = #tpu.pipeline_mode<synchronous>, transform_indices = @transform_10, window_bounds = array<i64: 1, 128>}, {pipeline_mode = #tpu.pipeline_mode<synchronous>, transform_indices = @transform_11, window_bounds = array<i64: 8, 2>}, {pipeline_mode = #tpu.pipeline_mode<synchronous>, transform_indices = @transform_12, window_bounds = array<i64: 1, 2>}]} {
    %c0_i32 = arith.constant 0 : i32
    %0 = arith.cmpi eq, %arg0, %c0_i32 : i32
    %1 = arith.extui %0 : i1 to i32
    %c0_i32_0 = arith.constant 0 : i32
    %2 = arith.cmpi ne, %1, %c0_i32_0 : i32
    scf.if %2 {
      %c0_58 = arith.constant 0 : index
      %c0_59 = arith.constant 0 : index
      %110 = vector.load %arg3[%c0_58, %c0_59] : memref<8x2xf32, #tpu.memory_space<vmem>>, vector<8x2xf32>
      %c0_60 = arith.constant 0 : index
      %c0_61 = arith.constant 0 : index
      %111 = vector.load %arg14[%c0_60, %c0_61] : memref<8x2xf32, #tpu.memory_space<vmem>>, vector<8x2xf32>
      tpu.vector_store %arg14[%c0_60, %c0_61], %110 {strides = array<i32>} : memref<8x2xf32, #tpu.memory_space<vmem>>, vector<8x2xf32>,
      %c0_62 = arith.constant 0 : index
      %c0_63 = arith.constant 0 : index
      %c0_64 = arith.constant 0 : index
      %112 = vector.load %arg5[%c0_62, %c0_63, %c0_64] : memref<1x2x128xf32, #tpu.memory_space<vmem>>, vector<1x2x128xf32>
      %c0_65 = arith.constant 0 : index
      %c0_66 = arith.constant 0 : index
      %c0_67 = arith.constant 0 : index
      %113 = vector.load %arg15[%c0_65, %c0_66, %c0_67] : memref<1x2x128xf32, #tpu.memory_space<vmem>>, vector<1x2x128xf32>
      tpu.vector_store %arg15[%c0_65, %c0_66, %c0_67], %112 {strides = array<i32>} : memref<1x2x128xf32, #tpu.memory_space<vmem>>, vector<1x2x128xf32>,
      %c0_68 = arith.constant 0 : index
      %c0_69 = arith.constant 0 : index
      %c0_70 = arith.constant 0 : index
      %114 = vector.load %arg6[%c0_68, %c0_69, %c0_70] : memref<1x2x128xf32, #tpu.memory_space<vmem>>, vector<1x2x128xf32>
      %c0_71 = arith.constant 0 : index
      %c0_72 = arith.constant 0 : index
      %c0_73 = arith.constant 0 : index
      %115 = vector.load %arg16[%c0_71, %c0_72, %c0_73] : memref<1x2x128xf32, #tpu.memory_space<vmem>>, vector<1x2x128xf32>
      tpu.vector_store %arg16[%c0_71, %c0_72, %c0_73], %114 {strides = array<i32>} : memref<1x2x128xf32, #tpu.memory_space<vmem>>, vector<1x2x128xf32>,
      %c0_74 = arith.constant 0 : index
      %c0_75 = arith.constant 0 : index
      %116 = vector.load %arg11[%c0_74, %c0_75] : memref<1x128xf32, #tpu.memory_space<vmem>>, vector<1x128xf32>
      %117 = vector.shape_cast %116 : vector<1x128xf32> to vector<1x128xf32>
      %118 = vector.broadcast %117 : vector<1x128xf32> to vector<2x128xf32>
      %c0_76 = arith.constant 0 : index
      %c0_77 = arith.constant 0 : index
      %119 = vector.load %arg17[%c0_76, %c0_77] : memref<2x128xf32, #tpu.memory_space<vmem>>, vector<2x128xf32>
      tpu.vector_store %arg17[%c0_76, %c0_77], %118 {strides = array<i32>} : memref<2x128xf32, #tpu.memory_space<vmem>>, vector<2x128xf32>,
      %cst_78 = arith.constant 0.000000e+00 : f32
      %120 = vector.broadcast %cst_78 : f32 to vector<1x2xf32>
      %c0_79 = arith.constant 0 : index
      %c0_80 = arith.constant 0 : index
      %121 = vector.load %arg13[%c0_79, %c0_80] : memref<1x2xf32, #tpu.memory_space<vmem>>, vector<1x2xf32>
      tpu.vector_store %arg13[%c0_79, %c0_80], %120 {strides = array<i32>} : memref<1x2xf32, #tpu.memory_space<vmem>>, vector<1x2xf32>,
    } else {
    }
    %c0 = arith.constant 0 : index
    %c0_1 = arith.constant 0 : index
    %3 = vector.load %arg17[%c0, %c0_1] : memref<2x128xf32, #tpu.memory_space<vmem>>, vector<2x128xf32>
    %c0_2 = arith.constant 0 : index
    %c0_3 = arith.constant 0 : index
    %4 = vector.load %arg7[%c0_2, %c0_3] : memref<256x512xf32, #tpu.memory_space<vmem>>, vector<256x512xf32>
    %c0_4 = arith.constant 0 : index
    %c0_5 = arith.constant 0 : index
    %5 = vector.load %arg8[%c0_4, %c0_5] : memref<1x512xf32, #tpu.memory_space<vmem>>, vector<1x512xf32>
    %c0_6 = arith.constant 0 : index
    %c0_7 = arith.constant 0 : index
    %c0_8 = arith.constant 0 : index
    %6 = vector.load %arg15[%c0_6, %c0_7, %c0_8] : memref<1x2x128xf32, #tpu.memory_space<vmem>>, vector<1x2x128xf32>
    %7 = vector.shape_cast %6 : vector<1x2x128xf32> to vector<2x128xf32>
    %c0_9 = arith.constant 0 : index
    %c0_10 = arith.constant 0 : index
    %c0_11 = arith.constant 0 : index
    %8 = vector.load %arg16[%c0_9, %c0_10, %c0_11] : memref<1x2x128xf32, #tpu.memory_space<vmem>>, vector<1x2x128xf32>
    %9 = vector.shape_cast %8 : vector<1x2x128xf32> to vector<2x128xf32>
    %10 = tpu.concatenate %3, %7 in 1 : vector<2x128xf32>, vector<2x128xf32> -> vector<2x256xf32>
    %cst = arith.constant dense<0.000000e+00> : vector<2x512xf32>
    %11 = tpu.matmul %10, %4, %cst {dimension_numbers = #tpu.dot_dimension_numbers<[1], [0], [0], [1], [0, 0, 1, 1], [], []>} : vector<2x256xf32>, vector<256x512xf32>, vector<2x512xf32> -> vector<2x512xf32>
    %12 = vector.broadcast %5 : vector<1x512xf32> to vector<2x512xf32>
    %13 = arith.addf %11, %12 : vector<2x512xf32>
    %14 = vector.extract_strided_slice %13 {offsets = [0, 0], sizes = [2, 128], strides = [1, 1]} : vector<2x512xf32> to vector<2x128xf32>
    %15 = arith.negf %14 : vector<2x128xf32>
    %16 = math.exp %15 : vector<2x128xf32>
    %cst_12 = arith.constant 1.000000e+00 : f32
    %17 = vector.broadcast %cst_12 : f32 to vector<2x128xf32>
    %18 = arith.addf %17, %16 : vector<2x128xf32>
    %19 = arith.divf %17, %18 : vector<2x128xf32>
    %20 = vector.extract_strided_slice %13 {offsets = [0, 128], sizes = [2, 128], strides = [1, 1]} : vector<2x512xf32> to vector<2x128xf32>
    %21 = arith.negf %20 : vector<2x128xf32>
    %22 = math.exp %21 : vector<2x128xf32>
    %cst_13 = arith.constant 1.000000e+00 : f32
    %23 = vector.broadcast %cst_13 : f32 to vector<2x128xf32>
    %24 = arith.addf %23, %22 : vector<2x128xf32>
    %25 = arith.divf %23, %24 : vector<2x128xf32>
    %26 = vector.extract_strided_slice %13 {offsets = [0, 256], sizes = [2, 128], strides = [1, 1]} : vector<2x512xf32> to vector<2x128xf32>
    %27 = math.tanh %26 : vector<2x128xf32>
    %28 = vector.extract_strided_slice %13 {offsets = [0, 384], sizes = [2, 128], strides = [1, 1]} : vector<2x512xf32> to vector<2x128xf32>
    %29 = arith.negf %28 : vector<2x128xf32>
    %30 = math.exp %29 : vector<2x128xf32>
    %cst_14 = arith.constant 1.000000e+00 : f32
    %31 = vector.broadcast %cst_14 : f32 to vector<2x128xf32>
    %32 = arith.addf %31, %30 : vector<2x128xf32>
    %33 = arith.divf %31, %32 : vector<2x128xf32>
    %34 = arith.mulf %25, %9 : vector<2x128xf32>
    %35 = arith.mulf %19, %27 : vector<2x128xf32>
    %36 = arith.addf %34, %35 : vector<2x128xf32>
    %37 = math.tanh %36 : vector<2x128xf32>
    %38 = arith.mulf %33, %37 : vector<2x128xf32>
    %c0_15 = arith.constant 0 : index
    %c0_16 = arith.constant 0 : index
    %c0_17 = arith.constant 0 : index
    %39 = vector.load %arg15[%c0_15, %c0_16, %c0_17] : memref<1x2x128xf32, #tpu.memory_space<vmem>>, vector<1x2x128xf32>
    %40 = vector.shape_cast %39 : vector<1x2x128xf32> to vector<2x128xf32>
    %41 = vector.shape_cast %38 : vector<2x128xf32> to vector<1x2x128xf32>
    tpu.vector_store %arg15[%c0_15, %c0_16, %c0_17], %41 {strides = array<i32>} : memref<1x2x128xf32, #tpu.memory_space<vmem>>, vector<1x2x128xf32>,
    %c0_18 = arith.constant 0 : index
    %c0_19 = arith.constant 0 : index
    %c0_20 = arith.constant 0 : index
    %42 = vector.load %arg16[%c0_18, %c0_19, %c0_20] : memref<1x2x128xf32, #tpu.memory_space<vmem>>, vector<1x2x128xf32>
    %43 = vector.shape_cast %42 : vector<1x2x128xf32> to vector<2x128xf32>
    %44 = vector.shape_cast %36 : vector<2x128xf32> to vector<1x2x128xf32>
    tpu.vector_store %arg16[%c0_18, %c0_19, %c0_20], %44 {strides = array<i32>} : memref<1x2x128xf32, #tpu.memory_space<vmem>>, vector<1x2x128xf32>,
    %c0_21 = arith.constant 0 : index
    %c0_22 = arith.constant 0 : index
    %45 = vector.load %arg9[%c0_21, %c0_22] : memref<128x128xf32, #tpu.memory_space<vmem>>, vector<128x128xf32>
    %cst_23 = arith.constant dense<0.000000e+00> : vector<2x128xf32>
    %46 = tpu.matmul %38, %45, %cst_23 {dimension_numbers = #tpu.dot_dimension_numbers<[1], [0], [0], [1], [0, 0, 1, 1], [], []>} : vector<2x128xf32>, vector<128x128xf32>, vector<2x128xf32> -> vector<2x128xf32>
    %c0_24 = arith.constant 0 : index
    %c0_25 = arith.constant 0 : index
    %c0_26 = arith.constant 0 : index
    %47 = vector.load %arg1[%c0_24, %c0_25, %c0_26] : memref<8x2x128xf32, #tpu.memory_space<vmem>>, vector<8x2x128xf32>
    %48 = vector.shape_cast %46 : vector<2x128xf32> to vector<1x2x128xf32>
    %49 = vector.broadcast %48 : vector<1x2x128xf32> to vector<8x2x128xf32>
    %50 = arith.addf %47, %49 : vector<8x2x128xf32>
    %51 = math.tanh %50 : vector<8x2x128xf32>
    %c0_27 = arith.constant 0 : index
    %c0_28 = arith.constant 0 : index
    %c0_29 = arith.constant 0 : index
    %52 = vector.load %arg10[%c0_27, %c0_28, %c0_29] : memref<1x1x128xf32, #tpu.memory_space<vmem>>, vector<1x1x128xf32>
    %53 = vector.broadcast %52 : vector<1x1x128xf32> to vector<8x2x128xf32>
    %54 = arith.mulf %51, %53 : vector<8x2x128xf32>
    %cst_30 = arith.constant dense<0.000000e+00> : vector<8x2xf32>
    %55 = vector.multi_reduction <add>, %54, %cst_30 [2] : vector<8x2x128xf32> to vector<8x2xf32>
    %56 = math.tanh %55 : vector<8x2xf32>
    %cst_31 = arith.constant 1.000000e+01 : f32
    %57 = vector.broadcast %cst_31 : f32 to vector<8x2xf32>
    %58 = arith.mulf %57, %56 : vector<8x2xf32>
    %c0_32 = arith.constant 0 : index
    %c0_33 = arith.constant 0 : index
    %59 = vector.load %arg14[%c0_32, %c0_33] : memref<8x2xf32, #tpu.memory_space<vmem>>, vector<8x2xf32>
    %cst_34 = arith.constant 5.000000e-01 : f32
    %60 = vector.broadcast %cst_34 : f32 to vector<8x2xf32>
    %61 = arith.cmpf ogt, %59, %60 : vector<8x2xf32>
    %cst_35 = arith.constant -1.000000e+09 : f32
    %62 = vector.broadcast %cst_35 : f32 to vector<8x2xf32>
    %63 = arith.select %61, %58, %62 : vector<8x2xi1>, vector<8x2xf32>
    %cst_36 = arith.constant dense<0xFF800000> : vector<2xf32>
    %64 = vector.multi_reduction <maximumf>, %63, %cst_36 [0] : vector<8x2xf32> to vector<2xf32>
    %65 = vector.shape_cast %64 : vector<2xf32> to vector<1x2xf32>
    %66 = vector.broadcast %65 : vector<1x2xf32> to vector<8x2xf32>
    %67 = arith.subf %63, %66 : vector<8x2xf32>
    %68 = math.exp %67 : vector<8x2xf32>
    %cst_37 = arith.constant dense<0.000000e+00> : vector<2xf32>
    %69 = vector.multi_reduction <add>, %68, %cst_37 [0] : vector<8x2xf32> to vector<2xf32>
    %70 = vector.shape_cast %69 : vector<2xf32> to vector<1x2xf32>
    %71 = vector.broadcast %65 : vector<1x2xf32> to vector<8x2xf32>
    %72 = arith.subf %63, %71 : vector<8x2xf32>
    %73 = math.log %70 : vector<1x2xf32>
    %74 = vector.broadcast %73 : vector<1x2xf32> to vector<8x2xf32>
    %75 = arith.subf %72, %74 : vector<8x2xf32>
    %c0_38 = arith.constant 0 : index
    %c0_39 = arith.constant 0 : index
    %c0_40 = arith.constant 0 : index
    %76 = vector.load %arg4[%c0_38, %c0_39, %c0_40] : memref<1x8x2xf32, #tpu.memory_space<vmem>>, vector<1x8x2xf32>
    %77 = vector.shape_cast %76 : vector<1x8x2xf32> to vector<8x2xf32>
    %78 = arith.addf %63, %77 : vector<8x2xf32>
    %cst_41 = arith.constant dense<0xFF800000> : vector<2xf32>
    %79 = vector.multi_reduction <maximumf>, %78, %cst_41 [0] : vector<8x2xf32> to vector<2xf32>
    %80 = vector.shape_cast %79 : vector<2xf32> to vector<1x2xf32>
    %81 = tpu.iota {dimensions = array<i32: 0>} : vector<8x2xi32>
    %82 = vector.broadcast %80 : vector<1x2xf32> to vector<8x2xf32>
    %83 = arith.cmpf oge, %78, %82 : vector<8x2xf32>
    %c8_i32 = arith.constant 8 : i32
    %84 = vector.broadcast %c8_i32 : i32 to vector<8x2xi32>
    %85 = arith.select %83, %81, %84 : vector<8x2xi1>, vector<8x2xi32>
    %cst_42 = arith.constant dense<2147483647> : vector<2xi32>
    %86 = vector.multi_reduction <minsi>, %85, %cst_42 [0] : vector<8x2xi32> to vector<2xi32>
    %87 = vector.shape_cast %86 : vector<2xi32> to vector<1x2xi32>
    %88 = vector.broadcast %87 : vector<1x2xi32> to vector<8x2xi32>
    %89 = arith.cmpi eq, %81, %88 : vector<8x2xi32>
    %90 = arith.extui %89 : vector<8x2xi1> to vector<8x2xi32>
    %91 = arith.sitofp %90 : vector<8x2xi32> to vector<8x2xf32>
    %c0_43 = arith.constant 0 : index
    %c0_44 = arith.constant 0 : index
    %92 = vector.load %arg13[%c0_43, %c0_44] : memref<1x2xf32, #tpu.memory_space<vmem>>, vector<1x2xf32>
    %93 = arith.mulf %91, %75 : vector<8x2xf32>
    %cst_45 = arith.constant dense<0.000000e+00> : vector<2xf32>
    %94 = vector.multi_reduction <add>, %93, %cst_45 [0] : vector<8x2xf32> to vector<2xf32>
    %95 = vector.shape_cast %94 : vector<2xf32> to vector<1x2xf32>
    %96 = arith.addf %92, %95 : vector<1x2xf32>
    %c0_46 = arith.constant 0 : index
    %c0_47 = arith.constant 0 : index
    %97 = vector.load %arg13[%c0_46, %c0_47] : memref<1x2xf32, #tpu.memory_space<vmem>>, vector<1x2xf32>
    tpu.vector_store %arg13[%c0_46, %c0_47], %96 {strides = array<i32>} : memref<1x2xf32, #tpu.memory_space<vmem>>, vector<1x2xf32>,
    %cst_48 = arith.constant 1.000000e+00 : f32
    %98 = vector.broadcast %cst_48 : f32 to vector<8x2xf32>
    %99 = arith.subf %98, %91 : vector<8x2xf32>
    %100 = arith.mulf %59, %99 : vector<8x2xf32>
    %c0_49 = arith.constant 0 : index
    %c0_50 = arith.constant 0 : index
    %101 = vector.load %arg14[%c0_49, %c0_50] : memref<8x2xf32, #tpu.memory_space<vmem>>, vector<8x2xf32>
    tpu.vector_store %arg14[%c0_49, %c0_50], %100 {strides = array<i32>} : memref<8x2xf32, #tpu.memory_space<vmem>>, vector<8x2xf32>,
    %c0_51 = arith.constant 0 : index
    %c0_52 = arith.constant 0 : index
    %c0_53 = arith.constant 0 : index
    %102 = vector.load %arg2[%c0_51, %c0_52, %c0_53] : memref<8x2x128xf32, #tpu.memory_space<vmem>>, vector<8x2x128xf32>
    %103 = vector.shape_cast %91 : vector<8x2xf32> to vector<8x2x1xf32>
    %104 = vector.broadcast %103 : vector<8x2x1xf32> to vector<8x2x128xf32>
    %105 = arith.mulf %102, %104 : vector<8x2x128xf32>
    %cst_54 = arith.constant dense<0.000000e+00> : vector<2x128xf32>
    %106 = vector.multi_reduction <add>, %105, %cst_54 [0] : vector<8x2x128xf32> to vector<2x128xf32>
    %c0_55 = arith.constant 0 : index
    %c0_56 = arith.constant 0 : index
    %107 = vector.load %arg17[%c0_55, %c0_56] : memref<2x128xf32, #tpu.memory_space<vmem>>, vector<2x128xf32>
    tpu.vector_store %arg17[%c0_55, %c0_56], %106 {strides = array<i32>} : memref<2x128xf32, #tpu.memory_space<vmem>>, vector<2x128xf32>,
    %108 = arith.index_cast %arg0 : i32 to index
    %c0_57 = arith.constant 0 : index
    %109 = vector.load %arg12[%108, %c0_57] : memref<8x2xi32, #tpu.memory_space<vmem>>, vector<1x2xi32>
    tpu.vector_store %arg12[%108, %c0_57], %87 {strides = array<i32>} : memref<8x2xi32, #tpu.memory_space<vmem>>, vector<1x2xi32>,
    return
  }
  func.func @transform_0(%arg0: i32) -> (i32, i32, i32) {
    %c0_i32 = arith.constant 0 : i32
    %c0_i32_0 = arith.constant 0 : i32
    %c0_i32_1 = arith.constant 0 : i32
    %c0_i32_2 = arith.constant 0 : i32
    return %c0_i32, %c0_i32_0, %c0_i32_1 : i32, i32, i32
  }
  func.func @transform_1(%arg0: i32) -> (i32, i32, i32) {
    %c0_i32 = arith.constant 0 : i32
    %c0_i32_0 = arith.constant 0 : i32
    %c0_i32_1 = arith.constant 0 : i32
    %c0_i32_2 = arith.constant 0 : i32
    return %c0_i32, %c0_i32_0, %c0_i32_1 : i32, i32, i32
  }
  func.func @transform_2(%arg0: i32) -> (i32, i32) {
    %c0_i32 = arith.constant 0 : i32
    %c0_i32_0 = arith.constant 0 : i32
    %c0_i32_1 = arith.constant 0 : i32
    return %c0_i32, %c0_i32_0 : i32, i32
  }
  func.func @transform_3(%arg0: i32) -> (i32, i32, i32) {
    %c0_i32 = arith.constant 0 : i32
    %c0_i32_0 = arith.constant 0 : i32
    %c0_i32_1 = arith.constant 0 : i32
    return %arg0, %c0_i32, %c0_i32_0 : i32, i32, i32
  }
  func.func @transform_4(%arg0: i32) -> (i32, i32, i32) {
    %c0_i32 = arith.constant 0 : i32
    %c0_i32_0 = arith.constant 0 : i32
    %c0_i32_1 = arith.constant 0 : i32
    %c0_i32_2 = arith.constant 0 : i32
    return %c0_i32, %c0_i32_0, %c0_i32_1 : i32, i32, i32
  }
  func.func @transform_5(%arg0: i32) -> (i32, i32, i32) {
    %c0_i32 = arith.constant 0 : i32
    %c0_i32_0 = arith.constant 0 : i32
    %c0_i32_1 = arith.constant 0 : i32
    %c0_i32_2 = arith.constant 0 : i32
    return %c0_i32, %c0_i32_0, %c0_i32_1 : i32, i32, i32
  }
  func.func @transform_6(%arg0: i32) -> (i32, i32) {
    %c0_i32 = arith.constant 0 : i32
    %c0_i32_0 = arith.constant 0 : i32
    %c0_i32_1 = arith.constant 0 : i32
    return %c0_i32, %c0_i32_0 : i32, i32
  }
  func.func @transform_7(%arg0: i32) -> (i32, i32) {
    %c0_i32 = arith.constant 0 : i32
    %c0_i32_0 = arith.constant 0 : i32
    %c0_i32_1 = arith.constant 0 : i32
    return %c0_i32, %c0_i32_0 : i32, i32
  }
  func.func @transform_8(%arg0: i32) -> (i32, i32) {
    %c0_i32 = arith.constant 0 : i32
    %c0_i32_0 = arith.constant 0 : i32
    %c0_i32_1 = arith.constant 0 : i32
    return %c0_i32, %c0_i32_0 : i32, i32
  }
  func.func @transform_9(%arg0: i32) -> (i32, i32, i32) {
    %c0_i32 = arith.constant 0 : i32
    %c0_i32_0 = arith.constant 0 : i32
    %c0_i32_1 = arith.constant 0 : i32
    %c0_i32_2 = arith.constant 0 : i32
    return %c0_i32, %c0_i32_0, %c0_i32_1 : i32, i32, i32
  }
  func.func @transform_10(%arg0: i32) -> (i32, i32) {
    %c0_i32 = arith.constant 0 : i32
    %c0_i32_0 = arith.constant 0 : i32
    %c0_i32_1 = arith.constant 0 : i32
    return %c0_i32, %c0_i32_0 : i32, i32
  }
  func.func @transform_11(%arg0: i32) -> (i32, i32) {
    %c0_i32 = arith.constant 0 : i32
    %c0_i32_0 = arith.constant 0 : i32
    %c0_i32_1 = arith.constant 0 : i32
    return %c0_i32, %c0_i32_0 : i32, i32
  }
  func.func @transform_12(%arg0: i32) -> (i32, i32) {
    %c0_i32 = arith.constant 0 : i32
    %c0_i32_0 = arith.constant 0 : i32
    %c0_i32_1 = arith.constant 0 : i32
    return %c0_i32, %c0_i32_0 : i32, i32
  }
}

</mosaic_0001>

<llo_original>
// kernel: _forward_impl.4
$region0: #{_forward_impl.4}
  #allocation0 [shape = 'u32[]', space=smem, size = 0x4, offset = 0x4, fixed_abs, tag = 'smem constant byte address 0x4 - core index']
  #allocation1 [shape = 'u32[72,128]{1,0:T(1,128)}', space=vmem, size = 0x9000, scoped, tag = 'internal scratch']
  %s0 = inlined_call_operand.vmem [shape: f32[16,4], index: 0, kind: input, shape index: {}]
  %s1 = inlined_call_operand.vmem [shape: f32[4,128], index: 1, kind: input, shape index: {}]
  %s2 = inlined_call_operand.vmem [shape: f32[1,128], index: 2, kind: input, shape index: {}]
  %s3 = inlined_call_operand.vmem [shape: f32[16,128], index: 3, kind: output, shape index: {}]
  %s4 = sld [smem:[#allocation0]]
  $region22: #{_forward_impl.4} parent=0
    _
  %s6 = ssub.s32 1, %s4
  %s7 = scalar_select 0, %s6, %s4
  // Predicated region
  $region2: #{_forward_impl.4} parent=0 // pred_check
    _
  $region3: #{_forward_impl.4} parent=0 // pred_check_branch
    %9 = sbr.rel (0) target = $region5
  $region4: #{_forward_impl.4} parent=0 // pred_region
    _
  $region5: #{_forward_impl.4} parent=0 // pred_fallthru
    _
  // Predicated region
  $region6: #{_forward_impl.4} parent=0 // pred_check
    _
  $region7: #{_forward_impl.4} parent=0 // pred_check_branch
    %11 = sbr.rel (0) target = $region9
  $region8: #{_forward_impl.4} parent=0 // pred_region
    _
  $region9: #{_forward_impl.4} parent=0 // pred_fallthru
    _
  // Predicated region
  $region10: #{_forward_impl.4} parent=0 // pred_check
    _
  $region11: #{_forward_impl.4} parent=0 // pred_check_branch
    %13 = sbr.rel (0) target = $region13
  $region12: #{_forward_impl.4} parent=0 // pred_region
    _
  $region13: #{_forward_impl.4} parent=0 // pred_fallthru
    _
  %v14 = vld [vmem:[%s0] sm:$0xff]
  %v15 = vld [vmem:[%s0 + $0x8] sm:$0xff]
  %v16 = vld [vmem:[%s1] sm:$0xf]
  %v17 = vld [vmem:[%s2] sm:$0x1]
  %v19 = vperm.slane %v17, 0
  %vm21 = vcmask 31744
  %v23 = vsel %vm21, %v14, 0
  %v26 = vsel %vm21, %v15, 0
  %vm28 = vcmask 1043456
  %v30 = vsel %vm28, %v16, 0
  %32 = vmatpush.msra.mxu0 0.0
  %33 = vmatpush.msra.mxu0 0.0
  %34 = vmatpush.msra.mxu0 0.0
  %35 = vmatpush.msra.mxu0 0.0
  %36 = vmatpush.msra.mxu0 0.0
  %37 = vmatpush.msra.mxu0 0.0
  %38 = vmatpush.msra.mxu0 0.0
  %39 = vmatpush.msra.mxu0 0.0
  %40 = vmatpush.msra.mxu0 0.0
  %41 = vmatpush.msra.mxu0 0.0
  %42 = vmatpush.msra.mxu0 0.0
  %43 = vmatpush.msra.mxu0 0.0
  %44 = vmatpush.msra.mxu0 0.0
  %45 = vmatpush.msra.mxu0 0.0
  %46 = vmatpush.msra.mxu0 0.0
  %47 = vmatpush.msra.mxu0 %v30
  %48 = vmatmul.f32.gmra.mxu0 %v23
  %v49 = vpop.f32.mrf.mxu0
  %v50 = vadd.f32 %v19, %v49
  %51 = vmatmul.f32.gmra.mxu0 %v26
  %v52 = vpop.f32.mrf.mxu0
  %v53 = vadd.f32 %v19, %v52
  %54 = vdwg.mxu0
  %55 = vst [vmem:[%s3] sm:$0xff] %v50
  %56 = vst [vmem:[%s3 + $0x8] sm:$0xff] %v53
  // Predicated region
  $region14: #{_forward_impl.4} parent=0 // pred_check
    _
  $region15: #{_forward_impl.4} parent=0 // pred_check_branch
    %58 = sbr.rel (0) target = $region17
  $region16: #{_forward_impl.4} parent=0 // pred_region
    _
  $region17: #{_forward_impl.4} parent=0 // pred_fallthru
    _
  // Predicated region
  $region18: #{_forward_impl.4} parent=0 // pred_check
    _
  $region19: #{_forward_impl.4} parent=0 // pred_check_branch
    %60 = sbr.rel (0) target = $region21
  $region20: #{_forward_impl.4} parent=0 // pred_region
    _
  $region21: #{_forward_impl.4} parent=0 // pred_fallthru
    _

// kernel: _forward_impl.5
$region0: #{_forward_impl.5}
  #allocation0 [shape = 'u32[]', space=smem, size = 0x4, offset = 0x4, fixed_abs, tag = 'smem constant byte address 0x4 - core index']
  #allocation1 [shape = 'u32[72,128]{1,0:T(1,128)}', space=vmem, size = 0x9000, scoped, tag = 'internal scratch']
  %s0 = inlined_call_operand.vmem [shape: f32[2,8,128], index: 0, kind: input, shape index: {}]
  %s1 = inlined_call_operand.vmem [shape: f32[2,8,8], index: 1, kind: input, shape index: {}]
  %s2 = inlined_call_operand.vmem [shape: f32[2,8,1], index: 2, kind: input, shape index: {}]
  %s3 = inlined_call_operand.vmem [shape: f32[128,256], index: 3, kind: input, shape index: {}]
  %s4 = inlined_call_operand.vmem [shape: f32[1,128], index: 4, kind: input, shape index: {}, may-alias: {4,6}]
  %s5 = inlined_call_operand.vmem [shape: f32[128,256], index: 5, kind: input, shape index: {}]
  %s6 = inlined_call_operand.vmem [shape: f32[1,128], index: 6, kind: input, shape index: {}, may-alias: {4,6}]
  %s7 = inlined_call_operand.vmem [shape: f32[2,8,128], index: 7, kind: output, shape index: {}]
  %s8 = sld [smem:[#allocation0]]
  $region61: #{_forward_impl.5} parent=0
    _
  %s10 = ssub.s32 1, %s8
  %s11 = scalar_select 0, %s10, %s8
  loop: start=0, step=1, limit=4
  $region2: #{_forward_impl.5} parent=0 // loop_pre_header
    _
  $region3: #{_forward_impl.5} parent=0 // loop_header
    %s13 = sphi 0, %s17
    %p14 = scmp.ge.s32.totalorder %s13, 4
    %s23 = sphi 0, %s25
    %s26 = sphi 0, %s23
    %s27 = sphi 0, %s26
    %s43 = sphi 0, %s27
    %s49 = sphi 0, %s51
    %s52 = sphi 0, %s49
    %s53 = sphi 0, %s52
    %s69 = sphi 0, %s53
    %s75 = sphi 0, %s77
    %s78 = sphi 0, %s75
    %s79 = sphi 0, %s78
    %s95 = sphi 0, %s79
    %s99 = sphi 0, %s99
    %s101 = sphi 0, %s99
    %s102 = sphi 0, %s101
    %s116 = sphi 0, %s102
    %s120 = sphi 0, %s120
    %s122 = sphi 0, %s120
    %s123 = sphi 0, %s122
    %s137 = sphi 0, %s123
    %s141 = sphi 0, %s141
    %s143 = sphi 0, %s141
    %s144 = sphi 0, %s143
    %s158 = sphi 0, %s144
    %s162 = sphi 0, %s162
    %s164 = sphi 0, %s162
    %s165 = sphi 0, %s164
    %s179 = sphi 0, %s165
    %s185 = sphi 0, %s187
    %s188 = sphi 0, %s185
    %s189 = sphi 0, %s188
    %s205 = sphi 0, %s189
  $region4: #{_forward_impl.5} parent=0 // loop_header_branch
    %16 = sbr.rel (%p14) target = $region8
  $region5: #{_forward_impl.5} parent=0 // loop_body
    %s18 = ssub.s32 %s13, 1
    %s19 = ssub.s32 %s13, 2
    %s20 = sadd.s32 %s13, 1
    %s21 = ssub.s32 %s13, %s20
    %p22 = scmp.eq.s32.totalorder %s21, 0
    %s24 = sadd.s32 %s23, 1
    %s25 = scalar_select %p22, %s23, %s24
    %p28 = pneg %p22
    %p29 = scmp.eq.s32.totalorder %s13, 1
    %p30 = por %p28, %p29
    %p31 = scmp.ne.s32.totalorder %s23, %s26
    %p32 = scmp.eq.s32.totalorder %s13, 0
    %p33 = por %p31, %p32
    %p34 = scmp.ne.s32.totalorder %s23, %s26
    %p35 = scmp.eq.s32.totalorder %s18, 1
    %p36 = por %p34, %p35
    %p37 = scmp.ne.s32.totalorder %s26, %s27
    %p38 = scmp.eq.s32.totalorder %s18, 0
    %p39 = por %p37, %p38
    %p40 = scmp.ne.s32.totalorder %s26, %s27
    %p41 = scmp.eq.s32.totalorder %s19, 1
    %p42 = por %p40, %p41
    %p44 = scmp.ne.s32.totalorder %s27, %s43
    %p45 = scmp.eq.s32.totalorder %s19, 0
    %p46 = por %p44, %p45
    %s47 = ssub.s32 %s13, %s20
    %p48 = scmp.eq.s32.totalorder %s47, 0
    %s50 = sadd.s32 %s49, 1
    %s51 = scalar_select %p48, %s49, %s50
    %p54 = pneg %p48
    %p55 = scmp.eq.s32.totalorder %s13, 1
    %p56 = por %p54, %p55
    %p57 = scmp.ne.s32.totalorder %s49, %s52
    %p58 = scmp.eq.s32.totalorder %s13, 0
    %p59 = por %p57, %p58
    %p60 = scmp.ne.s32.totalorder %s49, %s52
    %p61 = scmp.eq.s32.totalorder %s18, 1
    %p62 = por %p60, %p61
    %p63 = scmp.ne.s32.totalorder %s52, %s53
    %p64 = scmp.eq.s32.totalorder %s18, 0
    %p65 = por %p63, %p64
    %p66 = scmp.ne.s32.totalorder %s52, %s53
    %p67 = scmp.eq.s32.totalorder %s19, 1
    %p68 = por %p66, %p67
    %p70 = scmp.ne.s32.totalorder %s53, %s69
    %p71 = scmp.eq.s32.totalorder %s19, 0
    %p72 = por %p70, %p71
    %s73 = ssub.s32 %s13, %s20
    %p74 = scmp.eq.s32.totalorder %s73, 0
    %s76 = sadd.s32 %s75, 1
    %s77 = scalar_select %p74, %s75, %s76
    %p80 = pneg %p74
    %p81 = scmp.eq.s32.totalorder %s13, 1
    %p82 = por %p80, %p81
    %p83 = scmp.ne.s32.totalorder %s75, %s78
    %p84 = scmp.eq.s32.totalorder %s13, 0
    %p85 = por %p83, %p84
    %p86 = scmp.ne.s32.totalorder %s75, %s78
    %p87 = scmp.eq.s32.totalorder %s18, 1
    %p88 = por %p86, %p87
    %p89 = scmp.ne.s32.totalorder %s78, %s79
    %p90 = scmp.eq.s32.totalorder %s18, 0
    %p91 = por %p89, %p90
    %p92 = scmp.ne.s32.totalorder %s78, %s79
    %p93 = scmp.eq.s32.totalorder %s19, 1
    %p94 = por %p92, %p93
    %p96 = scmp.ne.s32.totalorder %s79, %s95
    %p97 = scmp.eq.s32.totalorder %s19, 0
    %p98 = por %p96, %p97
    %s100 = sadd.s32 %s99, 1
    %p103 = scmp.eq.s32.totalorder %s13, 1
    %p104 = scmp.ne.s32.totalorder %s99, %s101
    %p105 = scmp.eq.s32.totalorder %s13, 0
    %p106 = por %p104, %p105
    %p107 = scmp.ne.s32.totalorder %s99, %s101
    %p108 = scmp.eq.s32.totalorder %s18, 1
    %p109 = por %p107, %p108
    %p110 = scmp.ne.s32.totalorder %s101, %s102
    %p111 = scmp.eq.s32.totalorder %s18, 0
    %p112 = por %p110, %p111
    %p113 = scmp.ne.s32.totalorder %s101, %s102
    %p114 = scmp.eq.s32.totalorder %s19, 1
    %p115 = por %p113, %p114
    %p117 = scmp.ne.s32.totalorder %s102, %s116
    %p118 = scmp.eq.s32.totalorder %s19, 0
    %p119 = por %p117, %p118
    %s121 = sadd.s32 %s120, 1
    %p124 = scmp.eq.s32.totalorder %s13, 1
    %p125 = scmp.ne.s32.totalorder %s120, %s122
    %p126 = scmp.eq.s32.totalorder %s13, 0
    %p127 = por %p125, %p126
    %p128 = scmp.ne.s32.totalorder %s120, %s122
    %p129 = scmp.eq.s32.totalorder %s18, 1
    %p130 = por %p128, %p129
    %p131 = scmp.ne.s32.totalorder %s122, %s123
    %p132 = scmp.eq.s32.totalorder %s18, 0
    %p133 = por %p131, %p132
    %p134 = scmp.ne.s32.totalorder %s122, %s123
    %p135 = scmp.eq.s32.totalorder %s19, 1
    %p136 = por %p134, %p135
    %p138 = scmp.ne.s32.totalorder %s123, %s137
    %p139 = scmp.eq.s32.totalorder %s19, 0
    %p140 = por %p138, %p139
    %s142 = sadd.s32 %s141, 1
    %p145 = scmp.eq.s32.totalorder %s13, 1
    %p146 = scmp.ne.s32.totalorder %s141, %s143
    %p147 = scmp.eq.s32.totalorder %s13, 0
    %p148 = por %p146, %p147
    %p149 = scmp.ne.s32.totalorder %s141, %s143
    %p150 = scmp.eq.s32.totalorder %s18, 1
    %p151 = por %p149, %p150
    %p152 = scmp.ne.s32.totalorder %s143, %s144
    %p153 = scmp.eq.s32.totalorder %s18, 0
    %p154 = por %p152, %p153
    %p155 = scmp.ne.s32.totalorder %s143, %s144
    %p156 = scmp.eq.s32.totalorder %s19, 1
    %p157 = por %p155, %p156
    %p159 = scmp.ne.s32.totalorder %s144, %s158
    %p160 = scmp.eq.s32.totalorder %s19, 0
    %p161 = por %p159, %p160
    %s163 = sadd.s32 %s162, 1
    %p166 = scmp.eq.s32.totalorder %s13, 1
    %p167 = scmp.ne.s32.totalorder %s162, %s164
    %p168 = scmp.eq.s32.totalorder %s13, 0
    %p169 = por %p167, %p168
    %p170 = scmp.ne.s32.totalorder %s162, %s164
    %p171 = scmp.eq.s32.totalorder %s18, 1
    %p172 = por %p170, %p171
    %p173 = scmp.ne.s32.totalorder %s164, %s165
    %p174 = scmp.eq.s32.totalorder %s18, 0
    %p175 = por %p173, %p174
    %p176 = scmp.ne.s32.totalorder %s164, %s165
    %p177 = scmp.eq.s32.totalorder %s19, 1
    %p178 = por %p176, %p177
    %p180 = scmp.ne.s32.totalorder %s165, %s179
    %p181 = scmp.eq.s32.totalorder %s19, 0
    %p182 = por %p180, %p181
    %s183 = ssub.s32 %s13, %s20
    %p184 = scmp.eq.s32.totalorder %s183, 0
    %s186 = sadd.s32 %s185, 1
    %s187 = scalar_select %p184, %s185, %s186
    %p190 = pneg %p184
    %p191 = scmp.eq.s32.totalorder %s13, 1
    %p192 = por %p190, %p191
    %p193 = scmp.ne.s32.totalorder %s185, %s188
    %p194 = scmp.eq.s32.totalorder %s13, 0
    %p195 = por %p193, %p194
    %p196 = scmp.ne.s32.totalorder %s185, %s188
    %p197 = scmp.eq.s32.totalorder %s18, 1
    %p198 = por %p196, %p197
    %p199 = scmp.ne.s32.totalorder %s188, %s189
    %p200 = scmp.eq.s32.totalorder %s18, 0
    %p201 = por %p199, %p200
    %p202 = scmp.ne.s32.totalorder %s188, %s189
    %p203 = scmp.eq.s32.totalorder %s19, 1
    %p204 = por %p202, %p203
    %p206 = scmp.ne.s32.totalorder %s189, %s205
    %p207 = scmp.eq.s32.totalorder %s19, 0
    %p208 = por %p206, %p207
    %p209 = scmp.le.s32.totalorder 1, %s13
    %p210 = scmp.lt.s32.totalorder %s13, 3
    %p211 = pnand %p209, %p210
    %p212 = pneg %p211
    // Predicated region
    $region9: #{_forward_impl.5} parent=5 // pred_check
      _
    $region10: #{_forward_impl.5} parent=5 // pred_check_branch
      %214 = sbr.rel (%p211) target = $region12
    $region11: #{_forward_impl.5} parent=5 // pred_region
      %s215 = ssub.s32 %s13, 1
      // Predicated region
      $region13: #{_forward_impl.5} parent=11 // pred_check
        %p216 = pneg %p112
      $region14: #{_forward_impl.5} parent=11 // pred_check_branch
        %218 = sbr.rel (%p216) target = $region16
      $region15: #{_forward_impl.5} parent=11 // pred_region
        _
      $region16: #{_forward_impl.5} parent=11 // pred_fallthru
        _
      // Predicated region
      $region17: #{_forward_impl.5} parent=11 // pred_check
        %p219 = pneg %p133
      $region18: #{_forward_impl.5} parent=11 // pred_check_branch
        %221 = sbr.rel (%p219) target = $region20
      $region19: #{_forward_impl.5} parent=11 // pred_region
        _
      $region20: #{_forward_impl.5} parent=11 // pred_fallthru
        _
      // Predicated region
      $region21: #{_forward_impl.5} parent=11 // pred_check
        %p222 = pneg %p154
      $region22: #{_forward_impl.5} parent=11 // pred_check_branch
        %224 = sbr.rel (%p222) target = $region24
      $region23: #{_forward_impl.5} parent=11 // pred_region
        _
      $region24: #{_forward_impl.5} parent=11 // pred_fallthru
        _
      // Predicated region
      $region25: #{_forward_impl.5} parent=11 // pred_check
        %p225 = pneg %p175
      $region26: #{_forward_impl.5} parent=11 // pred_check_branch
        %227 = sbr.rel (%p225) target = $region28
      $region27: #{_forward_impl.5} parent=11 // pred_region
        _
      $region28: #{_forward_impl.5} parent=11 // pred_fallthru
        _
    $region12: #{_forward_impl.5} parent=5 // pred_fallthru
      _
    %p228 = scmp.lt.s32.totalorder %s13, 2
    // Predicated region
    $region29: #{_forward_impl.5} parent=5 // pred_check
      %p229 = pneg %p228
    $region30: #{_forward_impl.5} parent=5 // pred_check_branch
      %231 = sbr.rel (%p229) target = $region32
    $region31: #{_forward_impl.5} parent=5 // pred_region
      // Predicated region
      $region33: #{_forward_impl.5} parent=31 // pred_check
        %p232 = pneg %p33
      $region34: #{_forward_impl.5} parent=31 // pred_check_branch
        %234 = sbr.rel (%p232) target = $region36
      $region35: #{_forward_impl.5} parent=31 // pred_region
        %p235 = scmp.lt.s32.totalorder %s13, 1
        %s236 = scalar_select %p235, %s13, 1
        %s237 = smul.addr %s236, 8
        %s238 = scalar_lea.vmem %s0, %s237
      $region36: #{_forward_impl.5} parent=31 // pred_fallthru
        _
      // Predicated region
      $region37: #{_forward_impl.5} parent=31 // pred_check
        %p239 = pneg %p59
      $region38: #{_forward_impl.5} parent=31 // pred_check_branch
        %241 = sbr.rel (%p239) target = $region40
      $region39: #{_forward_impl.5} parent=31 // pred_region
        %p242 = scmp.lt.s32.totalorder %s13, 1
        %s243 = scalar_select %p242, %s13, 1
        %s244 = smul.addr %s243, 8
        %s245 = scalar_lea.vmem %s1, %s244
      $region40: #{_forward_impl.5} parent=31 // pred_fallthru
        _
      // Predicated region
      $region41: #{_forward_impl.5} parent=31 // pred_check
        %p246 = pneg %p85
      $region42: #{_forward_impl.5} parent=31 // pred_check_branch
        %248 = sbr.rel (%p246) target = $region44
      $region43: #{_forward_impl.5} parent=31 // pred_region
        %p249 = scmp.lt.s32.totalorder %s13, 1
        %s250 = scalar_select %p249, %s13, 1
        %s251 = smul.addr %s250, 8
        %s252 = scalar_lea.vmem %s2, %s251
      $region44: #{_forward_impl.5} parent=31 // pred_fallthru
        _
    $region32: #{_forward_impl.5} parent=5 // pred_fallthru
      _
    %p253 = scmp.le.s32.totalorder 1, %s13
    %p254 = scmp.lt.s32.totalorder %s13, 3
    %p255 = pnand %p253, %p254
    %p256 = pneg %p255
    // Predicated region
    $region45: #{_forward_impl.5} parent=5 // pred_check
      _
    $region46: #{_forward_impl.5} parent=5 // pred_check_branch
      %258 = sbr.rel (%p255) target = $region48
    $region47: #{_forward_impl.5} parent=5 // pred_region
      %s259 = ssub.s32 %s13, 1
      %p260 = scmp.lt.s32.totalorder %s18, 1
      %s261 = scalar_select %p260, %s18, 1
      %s262 = smul.addr %s261, 8
      %s263 = scalar_lea.vmem %s0, %s262
      %p264 = pneg %p39
      %p265 = pneg %p36
      %p266 = scmp.lt.s32.totalorder %s18, 1
      %s267 = scalar_select %p266, %s18, 1
      %s268 = smul.addr %s267, 8
      %s269 = scalar_lea.vmem %s1, %s268
      %p270 = pneg %p65
      %p271 = pneg %p62
      %p272 = scmp.lt.s32.totalorder %s18, 1
      %s273 = scalar_select %p272, %s18, 1
      %s274 = smul.addr %s273, 8
      %s275 = scalar_lea.vmem %s2, %s274
      %p276 = pneg %p91
      %p277 = pneg %p88
      %p278 = pneg %p112
      %p279 = pneg %p109
      %p280 = pneg %p133
      %p281 = pneg %p130
      %p282 = pneg %p154
      %p283 = pneg %p151
      %p284 = pneg %p175
      %p285 = pneg %p172
      %p286 = pneg %p201
      %p287 = pneg %p198
      %p288 = scmp.lt.s32.totalorder %s18, 1
      %s289 = scalar_select %p288, %s18, 1
      %s290 = smul.addr %s289, 8
      %s291 = scalar_lea.vmem %s7, %s290
      %p292 = scmp.lt.s32.totalorder %s18, 1
      %s293 = scalar_select %p292, %s18, 1
      %s294 = smul.addr %s293, 8
      %s295 = scalar_lea.vmem %s0, %s294
      %p296 = scmp.lt.s32.totalorder %s18, 1
      %s297 = scalar_select %p296, %s18, 1
      %s298 = smul.addr %s297, 8
      %s299 = scalar_lea.vmem %s1, %s298
      %p300 = scmp.lt.s32.totalorder %s18, 1
      %s301 = scalar_select %p300, %s18, 1
      %s302 = smul.addr %s301, 8
      %s303 = scalar_lea.vmem %s2, %s302
      %p304 = scmp.lt.s32.totalorder %s18, 1
      %s305 = scalar_select %p304, %s18, 1
      %s306 = smul.addr %s305, 8
      %s307 = scalar_lea.vmem %s7, %s306
      %v308 = vld [vmem:[%s295] sm:$0xff]
      %v309 = vld [vmem:[%s299] sm:$0xff]
      %v310 = vld [vmem:[%s303] sm:$0xff]
      %v311 = vld [vmem:[%s3] sm:$0xff]
      %v312 = vld [vmem:[%s3 + $0x8] sm:$0xff]
      %v313 = vld [vmem:[%s3 + $0x10] sm:$0xff]
      %v314 = vld [vmem:[%s3 + $0x18] sm:$0xff]
      %v315 = vld [vmem:[%s3 + $0x20] sm:$0xff]
      %v316 = vld [vmem:[%s3 + $0x28] sm:$0xff]
      %v317 = vld [vmem:[%s3 + $0x30] sm:$0xff]
      %v318 = vld [vmem:[%s3 + $0x38] sm:$0xff]
      %v319 = vld [vmem:[%s3 + $0x40] sm:$0xff]
      %v320 = vld [vmem:[%s3 + $0x48] sm:$0xff]
      %v321 = vld [vmem:[%s3 + $0x50] sm:$0xff]
      %v322 = vld [vmem:[%s3 + $0x58] sm:$0xff]
      %v323 = vld [vmem:[%s3 + $0x60] sm:$0xff]
      %v324 = vld [vmem:[%s3 + $0x68] sm:$0xff]
      %v325 = vld [vmem:[%s3 + $0x70] sm:$0xff]
      %v326 = vld [vmem:[%s3 + $0x78] sm:$0xff]
      %v327 = vld [vmem:[%s3 + $0x80] sm:$0xff]
      %v328 = vld [vmem:[%s3 + $0x88] sm:$0xff]
      %v329 = vld [vmem:[%s3 + $0x90] sm:$0xff]
      %v330 = vld [vmem:[%s3 + $0x98] sm:$0xff]
      %v331 = vld [vmem:[%s3 + $0xa0] sm:$0xff]
      %v332 = vld [vmem:[%s3 + $0xa8] sm:$0xff]
      %v333 = vld [vmem:[%s3 + $0xb0] sm:$0xff]
      %v334 = vld [vmem:[%s3 + $0xb8] sm:$0xff]
      %v335 = vld [vmem:[%s3 + $0xc0] sm:$0xff]
      %v336 = vld [vmem:[%s3 + $0xc8] sm:$0xff]
      %v337 = vld [vmem:[%s3 + $0xd0] sm:$0xff]
      %v338 = vld [vmem:[%s3 + $0xd8] sm:$0xff]
      %v339 = vld [vmem:[%s3 + $0xe0] sm:$0xff]
      %v340 = vld [vmem:[%s3 + $0xe8] sm:$0xff]
      %v341 = vld [vmem:[%s3 + $0xf0] sm:$0xff]
      %v342 = vld [vmem:[%s3 + $0xf8] sm:$0xff]
      %v343 = vld [vmem:[%s4] sm:$0x1]
      %344 = vmatpush.msra.mxu0 %v341
      %345 = vmatpush.msra.mxu0 %v339
      %346 = vmatpush.msra.mxu0 %v337
      %347 = vmatpush.msra.mxu0 %v335
      %348 = vmatpush.msra.mxu0 %v333
      %349 = vmatpush.msra.mxu0 %v331
      %350 = vmatpush.msra.mxu0 %v329
      %351 = vmatpush.msra.mxu0 %v327
      %352 = vmatpush.msra.mxu0 %v325
      %353 = vmatpush.msra.mxu0 %v323
      %354 = vmatpush.msra.mxu0 %v321
      %355 = vmatpush.msra.mxu0 %v319
      %356 = vmatpush.msra.mxu0 %v317
      %357 = vmatpush.msra.mxu0 %v315
      %358 = vmatpush.msra.mxu0 %v313
      %359 = vmatpush.msra.mxu0 %v311
      %360 = vmatmul.f32.gmra.mxu0 %v308
      %v361 = vpop.f32.mrf.mxu0
      %v362 = vadd.f32 0.0, %v361
      %363 = vdwg.mxu0
      %364 = vmatpush.msra.mxu0 %v342
      %365 = vmatpush.msra.mxu0 %v340
      %366 = vmatpush.msra.mxu0 %v338
      %367 = vmatpush.msra.mxu0 %v336
      %368 = vmatpush.msra.mxu0 %v334
      %369 = vmatpush.msra.mxu0 %v332
      %370 = vmatpush.msra.mxu0 %v330
      %371 = vmatpush.msra.mxu0 %v328
      %372 = vmatpush.msra.mxu0 %v326
      %373 = vmatpush.msra.mxu0 %v324
      %374 = vmatpush.msra.mxu0 %v322
      %375 = vmatpush.msra.mxu0 %v320
      %376 = vmatpush.msra.mxu0 %v318
      %377 = vmatpush.msra.mxu0 %v316
      %378 = vmatpush.msra.mxu0 %v314
      %379 = vmatpush.msra.mxu0 %v312
      %380 = vmatmul.f32.gmra.mxu0 %v308
      %v381 = vpop.f32.mrf.mxu0
      %v382 = vadd.f32 0.0, %v381
      %383 = vdwg.mxu0
      %vm384 = vcmask 64512
      %v386 = vsel %vm384, %v309, 0
      %388 = vmatpush.msra.mxu0 0.0
      %389 = vmatpush.msra.mxu0 0.0
      %390 = vmatpush.msra.mxu0 0.0
      %391 = vmatpush.msra.mxu0 0.0
      %392 = vmatpush.msra.mxu0 0.0
      %393 = vmatpush.msra.mxu0 0.0
      %394 = vmatpush.msra.mxu0 0.0
      %395 = vmatpush.msra.mxu0 0.0
      %396 = vmatpush.msra.mxu0 0.0
      %397 = vmatpush.msra.mxu0 0.0
      %398 = vmatpush.msra.mxu0 0.0
      %399 = vmatpush.msra.mxu0 0.0
      %400 = vmatpush.msra.mxu0 0.0
      %401 = vmatpush.msra.mxu0 0.0
      %402 = vmatpush.msra.mxu0 0.0
      %403 = vmatpush.msra.mxu0 %v382
      %404 = vmatmul.f32.gmra.mxu0 %v386
      %v405 = vpop.f32.mrf.mxu0
      %v406 = vadd.f32 0.0, %v405
      %407 = vdwg.mxu0
      %v408 = vadd.f32 %v362, %v406
      %v410 = vperm.slane %v343, 0
      %v412 = vadd.f32 %v408, %v410
      %v413 = vmax.f32 %v412, 0.0
      %415 = vset.pattern.permute.xlu0 0
      %416 = vperm.xlu0 %415, %v310
      %v417 = vpop.permute.xlu0 %416
      %v419 = vmul.f32 %v413, %v417
      %v420 = vld [vmem:[%s5] sm:$0xff]
      %v421 = vld [vmem:[%s5 + $0x8] sm:$0xff]
      %v422 = vld [vmem:[%s5 + $0x10] sm:$0xff]
      %v423 = vld [vmem:[%s5 + $0x18] sm:$0xff]
      %v424 = vld [vmem:[%s5 + $0x20] sm:$0xff]
      %v425 = vld [vmem:[%s5 + $0x28] sm:$0xff]
      %v426 = vld [vmem:[%s5 + $0x30] sm:$0xff]
      %v427 = vld [vmem:[%s5 + $0x38] sm:$0xff]
      %v428 = vld [vmem:[%s5 + $0x40] sm:$0xff]
      %v429 = vld [vmem:[%s5 + $0x48] sm:$0xff]
      %v430 = vld [vmem:[%s5 + $0x50] sm:$0xff]
      %v431 = vld [vmem:[%s5 + $0x58] sm:$0xff]
      %v432 = vld [vmem:[%s5 + $0x60] sm:$0xff]
      %v433 = vld [vmem:[%s5 + $0x68] sm:$0xff]
      %v434 = vld [vmem:[%s5 + $0x70] sm:$0xff]
      %v435 = vld [vmem:[%s5 + $0x78] sm:$0xff]
      %v436 = vld [vmem:[%s5 + $0x80] sm:$0xff]
      %v437 = vld [vmem:[%s5 + $0x88] sm:$0xff]
      %v438 = vld [vmem:[%s5 + $0x90] sm:$0xff]
      %v439 = vld [vmem:[%s5 + $0x98] sm:$0xff]
      %v440 = vld [vmem:[%s5 + $0xa0] sm:$0xff]
      %v441 = vld [vmem:[%s5 + $0xa8] sm:$0xff]
      %v442 = vld [vmem:[%s5 + $0xb0] sm:$0xff]
      %v443 = vld [vmem:[%s5 + $0xb8] sm:$0xff]
      %v444 = vld [vmem:[%s5 + $0xc0] sm:$0xff]
      %v445 = vld [vmem:[%s5 + $0xc8] sm:$0xff]
      %v446 = vld [vmem:[%s5 + $0xd0] sm:$0xff]
      %v447 = vld [vmem:[%s5 + $0xd8] sm:$0xff]
      %v448 = vld [vmem:[%s5 + $0xe0] sm:$0xff]
      %v449 = vld [vmem:[%s5 + $0xe8] sm:$0xff]
      %v450 = vld [vmem:[%s5 + $0xf0] sm:$0xff]
      %v451 = vld [vmem:[%s5 + $0xf8] sm:$0xff]
      %v452 = vld [vmem:[%s6] sm:$0x1]
      %453 = vmatpush.msra.mxu0 %v450
      %454 = vmatpush.msra.mxu0 %v448
      %455 = vmatpush.msra.mxu0 %v446
      %456 = vmatpush.msra.mxu0 %v444
      %457 = vmatpush.msra.mxu0 %v442
      %458 = vmatpush.msra.mxu0 %v440
      %459 = vmatpush.msra.mxu0 %v438
      %460 = vmatpush.msra.mxu0 %v436
      %461 = vmatpush.msra.mxu0 %v434
      %462 = vmatpush.msra.mxu0 %v432
      %463 = vmatpush.msra.mxu0 %v430
      %464 = vmatpush.msra.mxu0 %v428
      %465 = vmatpush.msra.mxu0 %v426
      %466 = vmatpush.msra.mxu0 %v424
      %467 = vmatpush.msra.mxu0 %v422
      %468 = vmatpush.msra.mxu0 %v420
      %469 = vmatmul.f32.gmra.mxu0 %v419
      %v470 = vpop.f32.mrf.mxu0
      %v471 = vadd.f32 0.0, %v470
      %472 = vdwg.mxu0
      %473 = vmatpush.msra.mxu0 %v451
      %474 = vmatpush.msra.mxu0 %v449
      %475 = vmatpush.msra.mxu0 %v447
      %476 = vmatpush.msra.mxu0 %v445
      %477 = vmatpush.msra.mxu0 %v443
      %478 = vmatpush.msra.mxu0 %v441
      %479 = vmatpush.msra.mxu0 %v439
      %480 = vmatpush.msra.mxu0 %v437
      %481 = vmatpush.msra.mxu0 %v435
      %482 = vmatpush.msra.mxu0 %v433
      %483 = vmatpush.msra.mxu0 %v431
      %484 = vmatpush.msra.mxu0 %v429
      %485 = vmatpush.msra.mxu0 %v427
      %486 = vmatpush.msra.mxu0 %v425
      %487 = vmatpush.msra.mxu0 %v423
      %488 = vmatpush.msra.mxu0 %v421
      %489 = vmatmul.f32.gmra.mxu0 %v419
      %v490 = vpop.f32.mrf.mxu0
      %v491 = vadd.f32 0.0, %v490
      %492 = vdwg.mxu0
      %493 = vmatpush.msra.mxu0 0.0
      %494 = vmatpush.msra.mxu0 0.0
      %495 = vmatpush.msra.mxu0 0.0
      %496 = vmatpush.msra.mxu0 0.0
      %497 = vmatpush.msra.mxu0 0.0
      %498 = vmatpush.msra.mxu0 0.0
      %499 = vmatpush.msra.mxu0 0.0
      %500 = vmatpush.msra.mxu0 0.0
      %501 = vmatpush.msra.mxu0 0.0
      %502 = vmatpush.msra.mxu0 0.0
      %503 = vmatpush.msra.mxu0 0.0
      %504 = vmatpush.msra.mxu0 0.0
      %505 = vmatpush.msra.mxu0 0.0
      %506 = vmatpush.msra.mxu0 0.0
      %507 = vmatpush.msra.mxu0 0.0
      %508 = vmatpush.msra.mxu0 %v491
      %509 = vmatmul.f32.gmra.mxu0 %v386
      %v510 = vpop.f32.mrf.mxu0
      %v511 = vadd.f32 0.0, %v510
      %512 = vdwg.mxu0
      %v513 = vadd.f32 %v471, %v511
      %v515 = vperm.slane %v452, 0
      %v517 = vadd.f32 %v513, %v515
      %v518 = vmax.f32 %v517, 0.0
      %v519 = vmul.f32 %v518, %v417
      %520 = vst [vmem:[%s307] sm:$0xff] %v519
      %p521 = scmp.lt.s32.totalorder %s18, 1
      %s522 = scalar_select %p521, %s18, 1
      %s523 = smul.addr %s522, 8
      %s524 = scalar_lea.vmem %s7, %s523
      // Predicated region
      $region49: #{_forward_impl.5} parent=47 // pred_check
        %p525 = pneg %p198
      $region50: #{_forward_impl.5} parent=47 // pred_check_branch
        %527 = sbr.rel (%p525) target = $region52
      $region51: #{_forward_impl.5} parent=47 // pred_region
        _
      $region52: #{_forward_impl.5} parent=47 // pred_fallthru
        _
    $region48: #{_forward_impl.5} parent=5 // pred_fallthru
      _
    %p528 = scmp.le.s32.totalorder 2, %s13
    // Predicated region
    $region53: #{_forward_impl.5} parent=5 // pred_check
      %p529 = pneg %p528
    $region54: #{_forward_impl.5} parent=5 // pred_check_branch
      %531 = sbr.rel (%p529) target = $region56
    $region55: #{_forward_impl.5} parent=5 // pred_region
      %s532 = ssub.s32 %s13, 2
      // Predicated region
      $region57: #{_forward_impl.5} parent=55 // pred_check
        %p533 = pneg %p204
      $region58: #{_forward_impl.5} parent=55 // pred_check_branch
        %535 = sbr.rel (%p533) target = $region60
      $region59: #{_forward_impl.5} parent=55 // pred_region
        %p536 = scmp.lt.s32.totalorder %s19, 1
        %s537 = scalar_select %p536, %s19, 1
        %s538 = smul.addr %s537, 8
        %s539 = scalar_lea.vmem %s7, %s538
      $region60: #{_forward_impl.5} parent=55 // pred_fallthru
        _
    $region56: #{_forward_impl.5} parent=5 // pred_fallthru
      _
  $region6: #{_forward_impl.5} parent=0 // loop_footer
    %s17 = sadd.s32 1, %s13
  $region7: #{_forward_impl.5} parent=0 // loop_footer_branch
    %12 = sbr.rel target = $region3
  $region8: #{_forward_impl.5} parent=0 // loop_exit
    _

// kernel: _forward_impl.6
$region0: #{_forward_impl.6}
  #allocation0 [shape = 'u32[]', space=smem, size = 0x4, offset = 0x4, fixed_abs, tag = 'smem constant byte address 0x4 - core index']
  #allocation1 [shape = 'u32[72,128]{1,0:T(1,128)}', space=vmem, size = 0x9000, scoped, tag = 'internal scratch']
  %s0 = inlined_call_operand.vmem [shape: f32[8,2,128], index: 0, kind: input, shape index: {}]
  %s1 = inlined_call_operand.vmem [shape: f32[256,512], index: 1, kind: input, shape index: {}]
  %s2 = inlined_call_operand.vmem [shape: f32[1,512], index: 2, kind: input, shape index: {}]
  %s3 = inlined_call_operand.vmem [shape: f32[128,128], index: 3, kind: input, shape index: {}]
  %s4 = inlined_call_operand.vmem [shape: f32[1,128], index: 4, kind: input, shape index: {}]
  %s5 = inlined_call_operand.vmem [shape: f32[8,2,128], index: 5, kind: output, shape index: {0}]
  %s6 = inlined_call_operand.vmem [shape: f32[1,2,128], index: 6, kind: output, shape index: {1}]
  %s7 = inlined_call_operand.vmem [shape: f32[1,2,128], index: 7, kind: output, shape index: {2}]
  %8 = xla_tuple %s5, %s6, %s7
  %s9 = sld [smem:[#allocation0]]
  $region73: #{_forward_impl.6} parent=0
    _
  %s11 = ssub.s32 1, %s9
  %s12 = scalar_select 0, %s11, %s9
  loop: start=0, step=1, limit=10
  $region2: #{_forward_impl.6} parent=0 // loop_pre_header
    _
  $region3: #{_forward_impl.6} parent=0 // loop_header
    %s14 = sphi 0, %s18
    %p15 = scmp.ge.s32.totalorder %s14, 10
    %s24 = sphi 0, %s26
    %s27 = sphi 0, %s24
    %s28 = sphi 0, %s27
    %s44 = sphi 0, %s28
    %s48 = sphi 0, %s48
    %s50 = sphi 0, %s48
    %s51 = sphi 0, %s50
    %s65 = sphi 0, %s51
    %s69 = sphi 0, %s69
    %s71 = sphi 0, %s69
    %s72 = sphi 0, %s71
    %s86 = sphi 0, %s72
    %s90 = sphi 0, %s90
    %s92 = sphi 0, %s90
    %s93 = sphi 0, %s92
    %s107 = sphi 0, %s93
    %s111 = sphi 0, %s111
    %s113 = sphi 0, %s111
    %s114 = sphi 0, %s113
    %s128 = sphi 0, %s114
    %s134 = sphi 0, %s136
    %s137 = sphi 0, %s134
    %s138 = sphi 0, %s137
    %s154 = sphi 0, %s138
    %s158 = sphi 0, %s158
    %s160 = sphi 0, %s158
    %s161 = sphi 0, %s160
    %s175 = sphi 0, %s161
    %s179 = sphi 0, %s179
    %s181 = sphi 0, %s179
    %s182 = sphi 0, %s181
    %s196 = sphi 0, %s182
  $region4: #{_forward_impl.6} parent=0 // loop_header_branch
    %17 = sbr.rel (%p15) target = $region8
  $region5: #{_forward_impl.6} parent=0 // loop_body
    %s19 = ssub.s32 %s14, 1
    %s20 = ssub.s32 %s14, 2
    %s21 = sadd.s32 %s14, 1
    %s22 = ssub.s32 %s14, %s21
    %p23 = scmp.eq.s32.totalorder %s22, 0
    %s25 = sadd.s32 %s24, 1
    %s26 = scalar_select %p23, %s24, %s25
    %p29 = pneg %p23
    %p30 = scmp.eq.s32.totalorder %s14, 7
    %p31 = por %p29, %p30
    %p32 = scmp.ne.s32.totalorder %s24, %s27
    %p33 = scmp.eq.s32.totalorder %s14, 0
    %p34 = por %p32, %p33
    %p35 = scmp.ne.s32.totalorder %s24, %s27
    %p36 = scmp.eq.s32.totalorder %s19, 7
    %p37 = por %p35, %p36
    %p38 = scmp.ne.s32.totalorder %s27, %s28
    %p39 = scmp.eq.s32.totalorder %s19, 0
    %p40 = por %p38, %p39
    %p41 = scmp.ne.s32.totalorder %s27, %s28
    %p42 = scmp.eq.s32.totalorder %s20, 7
    %p43 = por %p41, %p42
    %p45 = scmp.ne.s32.totalorder %s28, %s44
    %p46 = scmp.eq.s32.totalorder %s20, 0
    %p47 = por %p45, %p46
    %s49 = sadd.s32 %s48, 1
    %p52 = scmp.eq.s32.totalorder %s14, 7
    %p53 = scmp.ne.s32.totalorder %s48, %s50
    %p54 = scmp.eq.s32.totalorder %s14, 0
    %p55 = por %p53, %p54
    %p56 = scmp.ne.s32.totalorder %s48, %s50
    %p57 = scmp.eq.s32.totalorder %s19, 7
    %p58 = por %p56, %p57
    %p59 = scmp.ne.s32.totalorder %s50, %s51
    %p60 = scmp.eq.s32.totalorder %s19, 0
    %p61 = por %p59, %p60
    %p62 = scmp.ne.s32.totalorder %s50, %s51
    %p63 = scmp.eq.s32.totalorder %s20, 7
    %p64 = por %p62, %p63
    %p66 = scmp.ne.s32.totalorder %s51, %s65
    %p67 = scmp.eq.s32.totalorder %s20, 0
    %p68 = por %p66, %p67
    %s70 = sadd.s32 %s69, 1
    %p73 = scmp.eq.s32.totalorder %s14, 7
    %p74 = scmp.ne.s32.totalorder %s69, %s71
    %p75 = scmp.eq.s32.totalorder %s14, 0
    %p76 = por %p74, %p75
    %p77 = scmp.ne.s32.totalorder %s69, %s71
    %p78 = scmp.eq.s32.totalorder %s19, 7
    %p79 = por %p77, %p78
    %p80 = scmp.ne.s32.totalorder %s71, %s72
    %p81 = scmp.eq.s32.totalorder %s19, 0
    %p82 = por %p80, %p81
    %p83 = scmp.ne.s32.totalorder %s71, %s72
    %p84 = scmp.eq.s32.totalorder %s20, 7
    %p85 = por %p83, %p84
    %p87 = scmp.ne.s32.totalorder %s72, %s86
    %p88 = scmp.eq.s32.totalorder %s20, 0
    %p89 = por %p87, %p88
    %s91 = sadd.s32 %s90, 1
    %p94 = scmp.eq.s32.totalorder %s14, 7
    %p95 = scmp.ne.s32.totalorder %s90, %s92
    %p96 = scmp.eq.s32.totalorder %s14, 0
    %p97 = por %p95, %p96
    %p98 = scmp.ne.s32.totalorder %s90, %s92
    %p99 = scmp.eq.s32.totalorder %s19, 7
    %p100 = por %p98, %p99
    %p101 = scmp.ne.s32.totalorder %s92, %s93
    %p102 = scmp.eq.s32.totalorder %s19, 0
    %p103 = por %p101, %p102
    %p104 = scmp.ne.s32.totalorder %s92, %s93
    %p105 = scmp.eq.s32.totalorder %s20, 7
    %p106 = por %p104, %p105
    %p108 = scmp.ne.s32.totalorder %s93, %s107
    %p109 = scmp.eq.s32.totalorder %s20, 0
    %p110 = por %p108, %p109
    %s112 = sadd.s32 %s111, 1
    %p115 = scmp.eq.s32.totalorder %s14, 7
    %p116 = scmp.ne.s32.totalorder %s111, %s113
    %p117 = scmp.eq.s32.totalorder %s14, 0
    %p118 = por %p116, %p117
    %p119 = scmp.ne.s32.totalorder %s111, %s113
    %p120 = scmp.eq.s32.totalorder %s19, 7
    %p121 = por %p119, %p120
    %p122 = scmp.ne.s32.totalorder %s113, %s114
    %p123 = scmp.eq.s32.totalorder %s19, 0
    %p124 = por %p122, %p123
    %p125 = scmp.ne.s32.totalorder %s113, %s114
    %p126 = scmp.eq.s32.totalorder %s20, 7
    %p127 = por %p125, %p126
    %p129 = scmp.ne.s32.totalorder %s114, %s128
    %p130 = scmp.eq.s32.totalorder %s20, 0
    %p131 = por %p129, %p130
    %s132 = ssub.s32 %s14, %s21
    %p133 = scmp.eq.s32.totalorder %s132, 0
    %s135 = sadd.s32 %s134, 1
    %s136 = scalar_select %p133, %s134, %s135
    %p139 = pneg %p133
    %p140 = scmp.eq.s32.totalorder %s14, 7
    %p141 = por %p139, %p140
    %p142 = scmp.ne.s32.totalorder %s134, %s137
    %p143 = scmp.eq.s32.totalorder %s14, 0
    %p144 = por %p142, %p143
    %p145 = scmp.ne.s32.totalorder %s134, %s137
    %p146 = scmp.eq.s32.totalorder %s19, 7
    %p147 = por %p145, %p146
    %p148 = scmp.ne.s32.totalorder %s137, %s138
    %p149 = scmp.eq.s32.totalorder %s19, 0
    %p150 = por %p148, %p149
    %p151 = scmp.ne.s32.totalorder %s137, %s138
    %p152 = scmp.eq.s32.totalorder %s20, 7
    %p153 = por %p151, %p152
    %p155 = scmp.ne.s32.totalorder %s138, %s154
    %p156 = scmp.eq.s32.totalorder %s20, 0
    %p157 = por %p155, %p156
    %s159 = sadd.s32 %s158, 1
    %p162 = scmp.eq.s32.totalorder %s14, 7
    %p163 = scmp.ne.s32.totalorder %s158, %s160
    %p164 = scmp.eq.s32.totalorder %s14, 0
    %p165 = por %p163, %p164
    %p166 = scmp.ne.s32.totalorder %s158, %s160
    %p167 = scmp.eq.s32.totalorder %s19, 7
    %p168 = por %p166, %p167
    %p169 = scmp.ne.s32.totalorder %s160, %s161
    %p170 = scmp.eq.s32.totalorder %s19, 0
    %p171 = por %p169, %p170
    %p172 = scmp.ne.s32.totalorder %s160, %s161
    %p173 = scmp.eq.s32.totalorder %s20, 7
    %p174 = por %p172, %p173
    %p176 = scmp.ne.s32.totalorder %s161, %s175
    %p177 = scmp.eq.s32.totalorder %s20, 0
    %p178 = por %p176, %p177
    %s180 = sadd.s32 %s179, 1
    %p183 = scmp.eq.s32.totalorder %s14, 7
    %p184 = scmp.ne.s32.totalorder %s179, %s181
    %p185 = scmp.eq.s32.totalorder %s14, 0
    %p186 = por %p184, %p185
    %p187 = scmp.ne.s32.totalorder %s179, %s181
    %p188 = scmp.eq.s32.totalorder %s19, 7
    %p189 = por %p187, %p188
    %p190 = scmp.ne.s32.totalorder %s181, %s182
    %p191 = scmp.eq.s32.totalorder %s19, 0
    %p192 = por %p190, %p191
    %p193 = scmp.ne.s32.totalorder %s181, %s182
    %p194 = scmp.eq.s32.totalorder %s20, 7
    %p195 = por %p193, %p194
    %p197 = scmp.ne.s32.totalorder %s182, %s196
    %p198 = scmp.eq.s32.totalorder %s20, 0
    %p199 = por %p197, %p198
    %p200 = scmp.le.s32.totalorder 1, %s14
    %p201 = scmp.lt.s32.totalorder %s14, 9
    %p202 = pnand %p200, %p201
    %p203 = pneg %p202
    // Predicated region
    $region9: #{_forward_impl.6} parent=5 // pred_check
      _
    $region10: #{_forward_impl.6} parent=5 // pred_check_branch
      %205 = sbr.rel (%p202) target = $region12
    $region11: #{_forward_impl.6} parent=5 // pred_region
      %s206 = ssub.s32 %s14, 1
      // Predicated region
      $region13: #{_forward_impl.6} parent=11 // pred_check
        %p207 = pneg %p61
      $region14: #{_forward_impl.6} parent=11 // pred_check_branch
        %209 = sbr.rel (%p207) target = $region16
      $region15: #{_forward_impl.6} parent=11 // pred_region
        _
      $region16: #{_forward_impl.6} parent=11 // pred_fallthru
        _
      // Predicated region
      $region17: #{_forward_impl.6} parent=11 // pred_check
        %p210 = pneg %p82
      $region18: #{_forward_impl.6} parent=11 // pred_check_branch
        %212 = sbr.rel (%p210) target = $region20
      $region19: #{_forward_impl.6} parent=11 // pred_region
        _
      $region20: #{_forward_impl.6} parent=11 // pred_fallthru
        _
      // Predicated region
      $region21: #{_forward_impl.6} parent=11 // pred_check
        %p213 = pneg %p103
      $region22: #{_forward_impl.6} parent=11 // pred_check_branch
        %215 = sbr.rel (%p213) target = $region24
      $region23: #{_forward_impl.6} parent=11 // pred_region
        _
      $region24: #{_forward_impl.6} parent=11 // pred_fallthru
        _
      // Predicated region
      $region25: #{_forward_impl.6} parent=11 // pred_check
        %p216 = pneg %p124
      $region26: #{_forward_impl.6} parent=11 // pred_check_branch
        %218 = sbr.rel (%p216) target = $region28
      $region27: #{_forward_impl.6} parent=11 // pred_region
        _
      $region28: #{_forward_impl.6} parent=11 // pred_fallthru
        _
    $region12: #{_forward_impl.6} parent=5 // pred_fallthru
      _
    %p219 = scmp.lt.s32.totalorder %s14, 8
    // Predicated region
    $region29: #{_forward_impl.6} parent=5 // pred_check
      %p220 = pneg %p219
    $region30: #{_forward_impl.6} parent=5 // pred_check_branch
      %222 = sbr.rel (%p220) target = $region32
    $region31: #{_forward_impl.6} parent=5 // pred_region
      // Predicated region
      $region33: #{_forward_impl.6} parent=31 // pred_check
        %p223 = pneg %p34
      $region34: #{_forward_impl.6} parent=31 // pred_check_branch
        %225 = sbr.rel (%p223) target = $region36
      $region35: #{_forward_impl.6} parent=31 // pred_region
        %p226 = scmp.lt.s32.totalorder %s14, 7
        %s227 = scalar_select %p226, %s14, 7
        %s228 = smul.addr %s227, 2
        %s229 = scalar_lea.vmem %s0, %s228
      $region36: #{_forward_impl.6} parent=31 // pred_fallthru
        _
    $region32: #{_forward_impl.6} parent=5 // pred_fallthru
      _
    %p230 = scmp.le.s32.totalorder 1, %s14
    %p231 = scmp.lt.s32.totalorder %s14, 9
    %p232 = pnand %p230, %p231
    %p233 = pneg %p232
    // Predicated region
    $region37: #{_forward_impl.6} parent=5 // pred_check
      _
    $region38: #{_forward_impl.6} parent=5 // pred_check_branch
      %235 = sbr.rel (%p232) target = $region40
    $region39: #{_forward_impl.6} parent=5 // pred_region
      %s236 = ssub.s32 %s14, 1
      %p237 = scmp.lt.s32.totalorder %s19, 7
      %s238 = scalar_select %p237, %s19, 7
      %s239 = smul.addr %s238, 2
      %s240 = scalar_lea.vmem %s0, %s239
      %p241 = pneg %p40
      %p242 = pneg %p37
      %p243 = pneg %p61
      %p244 = pneg %p58
      %p245 = pneg %p82
      %p246 = pneg %p79
      %p247 = pneg %p103
      %p248 = pneg %p100
      %p249 = pneg %p124
      %p250 = pneg %p121
      %p251 = pneg %p150
      %p252 = pneg %p147
      %p253 = scmp.lt.s32.totalorder %s19, 7
      %s254 = scalar_select %p253, %s19, 7
      %s255 = smul.addr %s254, 2
      %s256 = scalar_lea.vmem %s5, %s255
      %p257 = pneg %p171
      %p258 = pneg %p168
      %p259 = pneg %p192
      %p260 = pneg %p189
      %p261 = scmp.lt.s32.totalorder %s19, 7
      %s262 = scalar_select %p261, %s19, 7
      %s263 = smul.addr %s262, 2
      %s264 = scalar_lea.vmem %s0, %s263
      %p265 = scmp.lt.s32.totalorder %s19, 7
      %s266 = scalar_select %p265, %s19, 7
      %s267 = smul.addr %s266, 2
      %s268 = scalar_lea.vmem %s5, %s267
      %p269 = scmp.eq.s32.totalorder %s19, 0
      // Predicated region
      $region41: #{_forward_impl.6} parent=39 // pred_check
        %p270 = pneg %p269
      $region42: #{_forward_impl.6} parent=39 // pred_check_branch
        %272 = sbr.rel (%p270) target = $region44
      $region43: #{_forward_impl.6} parent=39 // pred_region
        %273 = vst [vmem:[%s6] sm:$0x3] 0.0
        %274 = vst [vmem:[%s7] sm:$0x3] 0.0
      $region44: #{_forward_impl.6} parent=39 // pred_fallthru
        _
      %v275 = vld [vmem:[%s264] sm:$0x3]
      %v276 = vld [vmem:[%s1] sm:$0xff]
      %v277 = vld [vmem:[%s1 + $0x8] sm:$0xff]
      %v278 = vld [vmem:[%s1 + $0x10] sm:$0xff]
      %v279 = vld [vmem:[%s1 + $0x18] sm:$0xff]
      %v280 = vld [vmem:[%s1 + $0x20] sm:$0xff]
      %v281 = vld [vmem:[%s1 + $0x28] sm:$0xff]
      %v282 = vld [vmem:[%s1 + $0x30] sm:$0xff]
      %v283 = vld [vmem:[%s1 + $0x38] sm:$0xff]
      %v284 = vld [vmem:[%s1 + $0x40] sm:$0xff]
      %v285 = vld [vmem:[%s1 + $0x48] sm:$0xff]
      %v286 = vld [vmem:[%s1 + $0x50] sm:$0xff]
      %v287 = vld [vmem:[%s1 + $0x58] sm:$0xff]
      %v288 = vld [vmem:[%s1 + $0x60] sm:$0xff]
      %v289 = vld [vmem:[%s1 + $0x68] sm:$0xff]
      %v290 = vld [vmem:[%s1 + $0x70] sm:$0xff]
      %v291 = vld [vmem:[%s1 + $0x78] sm:$0xff]
      %v292 = vld [vmem:[%s1 + $0x80] sm:$0xff]
      %v293 = vld [vmem:[%s1 + $0x88] sm:$0xff]
      %v294 = vld [vmem:[%s1 + $0x90] sm:$0xff]
      %v295 = vld [vmem:[%s1 + $0x98] sm:$0xff]
      %v296 = vld [vmem:[%s1 + $0xa0] sm:$0xff]
      %v297 = vld [vmem:[%s1 + $0xa8] sm:$0xff]
      %v298 = vld [vmem:[%s1 + $0xb0] sm:$0xff]
      %v299 = vld [vmem:[%s1 + $0xb8] sm:$0xff]
      %v300 = vld [vmem:[%s1 + $0xc0] sm:$0xff]
      %v301 = vld [vmem:[%s1 + $0xc8] sm:$0xff]
      %v302 = vld [vmem:[%s1 + $0xd0] sm:$0xff]
      %v303 = vld [vmem:[%s1 + $0xd8] sm:$0xff]
      %v304 = vld [vmem:[%s1 + $0xe0] sm:$0xff]
      %v305 = vld [vmem:[%s1 + $0xe8] sm:$0xff]
      %v306 = vld [vmem:[%s1 + $0xf0] sm:$0xff]
      %v307 = vld [vmem:[%s1 + $0xf8] sm:$0xff]
      %v308 = vld [vmem:[%s1 + $0x100] sm:$0xff]
      %v309 = vld [vmem:[%s1 + $0x108] sm:$0xff]
      %v310 = vld [vmem:[%s1 + $0x110] sm:$0xff]
      %v311 = vld [vmem:[%s1 + $0x118] sm:$0xff]
      %v312 = vld [vmem:[%s1 + $0x120] sm:$0xff]
      %v313 = vld [vmem:[%s1 + $0x128] sm:$0xff]
      %v314 = vld [vmem:[%s1 + $0x130] sm:$0xff]
      %v315 = vld [vmem:[%s1 + $0x138] sm:$0xff]
      %v316 = vld [vmem:[%s1 + $0x140] sm:$0xff]
      %v317 = vld [vmem:[%s1 + $0x148] sm:$0xff]
      %v318 = vld [vmem:[%s1 + $0x150] sm:$0xff]
      %v319 = vld [vmem:[%s1 + $0x158] sm:$0xff]
      %v320 = vld [vmem:[%s1 + $0x160] sm:$0xff]
      %v321 = vld [vmem:[%s1 + $0x168] sm:$0xff]
      %v322 = vld [vmem:[%s1 + $0x170] sm:$0xff]
      %v323 = vld [vmem:[%s1 + $0x178] sm:$0xff]
      %v324 = vld [vmem:[%s1 + $0x180] sm:$0xff]
      %v325 = vld [vmem:[%s1 + $0x188] sm:$0xff]
      %v326 = vld [vmem:[%s1 + $0x190] sm:$0xff]
      %v327 = vld [vmem:[%s1 + $0x198] sm:$0xff]
      %v328 = vld [vmem:[%s1 + $0x1a0] sm:$0xff]
      %v329 = vld [vmem:[%s1 + $0x1a8] sm:$0xff]
      %v330 = vld [vmem:[%s1 + $0x1b0] sm:$0xff]
      %v331 = vld [vmem:[%s1 + $0x1b8] sm:$0xff]
      %v332 = vld [vmem:[%s1 + $0x1c0] sm:$0xff]
      %v333 = vld [vmem:[%s1 + $0x1c8] sm:$0xff]
      %v334 = vld [vmem:[%s1 + $0x1d0] sm:$0xff]
      %v335 = vld [vmem:[%s1 + $0x1d8] sm:$0xff]
      %v336 = vld [vmem:[%s1 + $0x1e0] sm:$0xff]
      %v337 = vld [vmem:[%s1 + $0x1e8] sm:$0xff]
      %v338 = vld [vmem:[%s1 + $0x1f0] sm:$0xff]
      %v339 = vld [vmem:[%s1 + $0x1f8] sm:$0xff]
      %v340 = vld [vmem:[%s1 + $0x200] sm:$0xff]
      %v341 = vld [vmem:[%s1 + $0x208] sm:$0xff]
      %v342 = vld [vmem:[%s1 + $0x210] sm:$0xff]
      %v343 = vld [vmem:[%s1 + $0x218] sm:$0xff]
      %v344 = vld [vmem:[%s1 + $0x220] sm:$0xff]
      %v345 = vld [vmem:[%s1 + $0x228] sm:$0xff]
      %v346 = vld [vmem:[%s1 + $0x230] sm:$0xff]
      %v347 = vld [vmem:[%s1 + $0x238] sm:$0xff]
      %v348 = vld [vmem:[%s1 + $0x240] sm:$0xff]
      %v349 = vld [vmem:[%s1 + $0x248] sm:$0xff]
      %v350 = vld [vmem:[%s1 + $0x250] sm:$0xff]
      %v351 = vld [vmem:[%s1 + $0x258] sm:$0xff]
      %v352 = vld [vmem:[%s1 + $0x260] sm:$0xff]
      %v353 = vld [vmem:[%s1 + $0x268] sm:$0xff]
      %v354 = vld [vmem:[%s1 + $0x270] sm:$0xff]
      %v355 = vld [vmem:[%s1 + $0x278] sm:$0xff]
      %v356 = vld [vmem:[%s1 + $0x280] sm:$0xff]
      %v357 = vld [vmem:[%s1 + $0x288] sm:$0xff]
      %v358 = vld [vmem:[%s1 + $0x290] sm:$0xff]
      %v359 = vld [vmem:[%s1 + $0x298] sm:$0xff]
      %v360 = vld [vmem:[%s1 + $0x2a0] sm:$0xff]
      %v361 = vld [vmem:[%s1 + $0x2a8] sm:$0xff]
      %v362 = vld [vmem:[%s1 + $0x2b0] sm:$0xff]
      %v363 = vld [vmem:[%s1 + $0x2b8] sm:$0xff]
      %v364 = vld [vmem:[%s1 + $0x2c0] sm:$0xff]
      %v365 = vld [vmem:[%s1 + $0x2c8] sm:$0xff]
      %v366 = vld [vmem:[%s1 + $0x2d0] sm:$0xff]
      %v367 = vld [vmem:[%s1 + $0x2d8] sm:$0xff]
      %v368 = vld [vmem:[%s1 + $0x2e0] sm:$0xff]
      %v369 = vld [vmem:[%s1 + $0x2e8] sm:$0xff]
      %v370 = vld [vmem:[%s1 + $0x2f0] sm:$0xff]
      %v371 = vld [vmem:[%s1 + $0x2f8] sm:$0xff]
      %v372 = vld [vmem:[%s1 + $0x300] sm:$0xff]
      %v373 = vld [vmem:[%s1 + $0x308] sm:$0xff]
      %v374 = vld [vmem:[%s1 + $0x310] sm:$0xff]
      %v375 = vld [vmem:[%s1 + $0x318] sm:$0xff]
      %v376 = vld [vmem:[%s1 + $0x320] sm:$0xff]
      %v377 = vld [vmem:[%s1 + $0x328] sm:$0xff]
      %v378 = vld [vmem:[%s1 + $0x330] sm:$0xff]
      %v379 = vld [vmem:[%s1 + $0x338] sm:$0xff]
      %v380 = vld [vmem:[%s1 + $0x340] sm:$0xff]
      %v381 = vld [vmem:[%s1 + $0x348] sm:$0xff]
      %v382 = vld [vmem:[%s1 + $0x350] sm:$0xff]
      %v383 = vld [vmem:[%s1 + $0x358] sm:$0xff]
      %v384 = vld [vmem:[%s1 + $0x360] sm:$0xff]
      %v385 = vld [vmem:[%s1 + $0x368] sm:$0xff]
      %v386 = vld [vmem:[%s1 + $0x370] sm:$0xff]
      %v387 = vld [vmem:[%s1 + $0x378] sm:$0xff]
      %v388 = vld [vmem:[%s1 + $0x380] sm:$0xff]
      %v389 = vld [vmem:[%s1 + $0x388] sm:$0xff]
      %v390 = vld [vmem:[%s1 + $0x390] sm:$0xff]
      %v391 = vld [vmem:[%s1 + $0x398] sm:$0xff]
      %v392 = vld [vmem:[%s1 + $0x3a0] sm:$0xff]
      %v393 = vld [vmem:[%s1 + $0x3a8] sm:$0xff]
      %v394 = vld [vmem:[%s1 + $0x3b0] sm:$0xff]
      %v395 = vld [vmem:[%s1 + $0x3b8] sm:$0xff]
      %v396 = vld [vmem:[%s1 + $0x3c0] sm:$0xff]
      %v397 = vld [vmem:[%s1 + $0x3c8] sm:$0xff]
      %v398 = vld [vmem:[%s1 + $0x3d0] sm:$0xff]
      %v399 = vld [vmem:[%s1 + $0x3d8] sm:$0xff]
      %v400 = vld [vmem:[%s1 + $0x3e0] sm:$0xff]
      %v401 = vld [vmem:[%s1 + $0x3e8] sm:$0xff]
      %v402 = vld [vmem:[%s1 + $0x3f0] sm:$0xff]
      %v403 = vld [vmem:[%s1 + $0x3f8] sm:$0xff]
      %v404 = vld [vmem:[%s2] sm:$0xf]
      %v405 = vld [vmem:[%s6] sm:$0x3]
      %v406 = vld [vmem:[%s7] sm:$0x3]
      %v408 = vperm.slane %v404, 0
      %v409 = vperm.slane %v404, 1
      %v410 = vperm.slane %v404, 2
      %v411 = vperm.slane %v404, 3
      %416 = vmatpush.msra.mxu0 %v336
      %417 = vmatpush.msra.mxu0 %v332
      %418 = vmatpush.msra.mxu0 %v328
      %419 = vmatpush.msra.mxu0 %v324
      %420 = vmatpush.msra.mxu0 %v320
      %421 = vmatpush.msra.mxu0 %v316
      %422 = vmatpush.msra.mxu0 %v312
      %423 = vmatpush.msra.mxu0 %v308
      %424 = vmatpush.msra.mxu0 %v304
      %425 = vmatpush.msra.mxu0 %v300
      %426 = vmatpush.msra.mxu0 %v296
      %427 = vmatpush.msra.mxu0 %v292
      %428 = vmatpush.msra.mxu0 %v288
      %429 = vmatpush.msra.mxu0 %v284
      %430 = vmatpush.msra.mxu0 %v280
      %431 = vmatpush.msra.mxu0 %v276
      %432 = vmatmul.f32.gmra.mxu0 %v275
      %v433 = vpop.f32.mrf.mxu0
      %v434 = vadd.f32 %v408, %v433
      %435 = vdwg.mxu0
      %436 = vmatpush.msra.mxu0 %v400
      %437 = vmatpush.msra.mxu0 %v396
      %438 = vmatpush.msra.mxu0 %v392
      %439 = vmatpush.msra.mxu0 %v388
      %440 = vmatpush.msra.mxu0 %v384
      %441 = vmatpush.msra.mxu0 %v380
      %442 = vmatpush.msra.mxu0 %v376
      %443 = vmatpush.msra.mxu0 %v372
      %444 = vmatpush.msra.mxu0 %v368
      %445 = vmatpush.msra.mxu0 %v364
      %446 = vmatpush.msra.mxu0 %v360
      %447 = vmatpush.msra.mxu0 %v356
      %448 = vmatpush.msra.mxu0 %v352
      %449 = vmatpush.msra.mxu0 %v348
      %450 = vmatpush.msra.mxu0 %v344
      %451 = vmatpush.msra.mxu0 %v340
      %452 = vmatmul.f32.gmra.mxu0 %v405
      %v453 = vpop.f32.mrf.mxu0
      %v454 = vadd.f32 %v434, %v453
      %455 = vdwg.mxu0
      %456 = vmatpush.msra.mxu0 %v337
      %457 = vmatpush.msra.mxu0 %v333
      %458 = vmatpush.msra.mxu0 %v329
      %459 = vmatpush.msra.mxu0 %v325
      %460 = vmatpush.msra.mxu0 %v321
      %461 = vmatpush.msra.mxu0 %v317
      %462 = vmatpush.msra.mxu0 %v313
      %463 = vmatpush.msra.mxu0 %v309
      %464 = vmatpush.msra.mxu0 %v305
      %465 = vmatpush.msra.mxu0 %v301
      %466 = vmatpush.msra.mxu0 %v297
      %467 = vmatpush.msra.mxu0 %v293
      %468 = vmatpush.msra.mxu0 %v289
      %469 = vmatpush.msra.mxu0 %v285
      %470 = vmatpush.msra.mxu0 %v281
      %471 = vmatpush.msra.mxu0 %v277
      %472 = vmatmul.f32.gmra.mxu0 %v275
      %v473 = vpop.f32.mrf.mxu0
      %v474 = vadd.f32 %v409, %v473
      %475 = vdwg.mxu0
      %476 = vmatpush.msra.mxu0 %v401
      %477 = vmatpush.msra.mxu0 %v397
      %478 = vmatpush.msra.mxu0 %v393
      %479 = vmatpush.msra.mxu0 %v389
      %480 = vmatpush.msra.mxu0 %v385
      %481 = vmatpush.msra.mxu0 %v381
      %482 = vmatpush.msra.mxu0 %v377
      %483 = vmatpush.msra.mxu0 %v373
      %484 = vmatpush.msra.mxu0 %v369
      %485 = vmatpush.msra.mxu0 %v365
      %486 = vmatpush.msra.mxu0 %v361
      %487 = vmatpush.msra.mxu0 %v357
      %488 = vmatpush.msra.mxu0 %v353
      %489 = vmatpush.msra.mxu0 %v349
      %490 = vmatpush.msra.mxu0 %v345
      %491 = vmatpush.msra.mxu0 %v341
      %492 = vmatmul.f32.gmra.mxu0 %v405
      %v493 = vpop.f32.mrf.mxu0
      %v494 = vadd.f32 %v474, %v493
      %495 = vdwg.mxu0
      %496 = vmatpush.msra.mxu0 %v338
      %497 = vmatpush.msra.mxu0 %v334
      %498 = vmatpush.msra.mxu0 %v330
      %499 = vmatpush.msra.mxu0 %v326
      %500 = vmatpush.msra.mxu0 %v322
      %501 = vmatpush.msra.mxu0 %v318
      %502 = vmatpush.msra.mxu0 %v314
      %503 = vmatpush.msra.mxu0 %v310
      %504 = vmatpush.msra.mxu0 %v306
      %505 = vmatpush.msra.mxu0 %v302
      %506 = vmatpush.msra.mxu0 %v298
      %507 = vmatpush.msra.mxu0 %v294
      %508 = vmatpush.msra.mxu0 %v290
      %509 = vmatpush.msra.mxu0 %v286
      %510 = vmatpush.msra.mxu0 %v282
      %511 = vmatpush.msra.mxu0 %v278
      %512 = vmatmul.f32.gmra.mxu0 %v275
      %v513 = vpop.f32.mrf.mxu0
      %v514 = vadd.f32 %v410, %v513
      %515 = vdwg.mxu0
      %516 = vmatpush.msra.mxu0 %v402
      %517 = vmatpush.msra.mxu0 %v398
      %518 = vmatpush.msra.mxu0 %v394
      %519 = vmatpush.msra.mxu0 %v390
      %520 = vmatpush.msra.mxu0 %v386
      %521 = vmatpush.msra.mxu0 %v382
      %522 = vmatpush.msra.mxu0 %v378
      %523 = vmatpush.msra.mxu0 %v374
      %524 = vmatpush.msra.mxu0 %v370
      %525 = vmatpush.msra.mxu0 %v366
      %526 = vmatpush.msra.mxu0 %v362
      %527 = vmatpush.msra.mxu0 %v358
      %528 = vmatpush.msra.mxu0 %v354
      %529 = vmatpush.msra.mxu0 %v350
      %530 = vmatpush.msra.mxu0 %v346
      %531 = vmatpush.msra.mxu0 %v342
      %532 = vmatmul.f32.gmra.mxu0 %v405
      %v533 = vpop.f32.mrf.mxu0
      %v534 = vadd.f32 %v514, %v533
      %535 = vdwg.mxu0
      %536 = vmatpush.msra.mxu0 %v339
      %537 = vmatpush.msra.mxu0 %v335
      %538 = vmatpush.msra.mxu0 %v331
      %539 = vmatpush.msra.mxu0 %v327
      %540 = vmatpush.msra.mxu0 %v323
      %541 = vmatpush.msra.mxu0 %v319
      %542 = vmatpush.msra.mxu0 %v315
      %543 = vmatpush.msra.mxu0 %v311
      %544 = vmatpush.msra.mxu0 %v307
      %545 = vmatpush.msra.mxu0 %v303
      %546 = vmatpush.msra.mxu0 %v299
      %547 = vmatpush.msra.mxu0 %v295
      %548 = vmatpush.msra.mxu0 %v291
      %549 = vmatpush.msra.mxu0 %v287
      %550 = vmatpush.msra.mxu0 %v283
      %551 = vmatpush.msra.mxu0 %v279
      %552 = vmatmul.f32.gmra.mxu0 %v275
      %v553 = vpop.f32.mrf.mxu0
      %v554 = vadd.f32 %v411, %v553
      %555 = vdwg.mxu0
      %556 = vmatpush.msra.mxu0 %v403
      %557 = vmatpush.msra.mxu0 %v399
      %558 = vmatpush.msra.mxu0 %v395
      %559 = vmatpush.msra.mxu0 %v391
      %560 = vmatpush.msra.mxu0 %v387
      %561 = vmatpush.msra.mxu0 %v383
      %562 = vmatpush.msra.mxu0 %v379
      %563 = vmatpush.msra.mxu0 %v375
      %564 = vmatpush.msra.mxu0 %v371
      %565 = vmatpush.msra.mxu0 %v367
      %566 = vmatpush.msra.mxu0 %v363
      %567 = vmatpush.msra.mxu0 %v359
      %568 = vmatpush.msra.mxu0 %v355
      %569 = vmatpush.msra.mxu0 %v351
      %570 = vmatpush.msra.mxu0 %v347
      %571 = vmatpush.msra.mxu0 %v343
      %572 = vmatmul.f32.gmra.mxu0 %v405
      %v573 = vpop.f32.mrf.mxu0
      %v574 = vadd.f32 %v554, %v573
      %575 = vdwg.mxu0
      %v576 = vxor.u32 %v454, 2147483648
      %v577 = vmul.f32 %v576, 1.442695
      %v578 = vpow.pop %v577
      %v579 = vadd.f32 %v578, 1.0
      %v580 = vrcp.pop %v579
      %v581 = vmul.f32 %v579, %v580
      %v582 = vsub.f32 1.0, %v581
      %v583 = vmul.f32 %v580, %v582
      %v584 = vadd.f32 %v580, %v583
      %vm585 = vweird.f32 %v579
      %vm586 = vweird.f32 %v580
      %vm587 = vmor %vm585, %vm586
      %v588 = vsel %vm587, %v580, %v584
      %v589 = vand.u32 2147483647, %v579
      %vm590 = vcmp.eq.f32.partialorder %v589, 8.507059e+37
      %v591 = vand.u32 %v579, 2147483648
      %v592 = vor.u32 1.1754944e-38, %v591
      %v593 = vsel %vm590, %v592, %v588
      %v594 = vmul.f32 1.0, %v593
      %v595 = vxor.u32 %v494, 2147483648
      %v596 = vmul.f32 %v595, 1.442695
      %v597 = vpow.pop %v596
      %v598 = vadd.f32 %v597, 1.0
      %v599 = vrcp.pop %v598
      %v600 = vmul.f32 %v598, %v599
      %v601 = vsub.f32 1.0, %v600
      %v602 = vmul.f32 %v599, %v601
      %v603 = vadd.f32 %v599, %v602
      %vm604 = vweird.f32 %v598
      %vm605 = vweird.f32 %v599
      %vm606 = vmor %vm604, %vm605
      %v607 = vsel %vm606, %v599, %v603
      %v608 = vand.u32 2147483647, %v598
      %vm609 = vcmp.eq.f32.partialorder %v608, 8.507059e+37
      %v610 = vand.u32 %v598, 2147483648
      %v611 = vor.u32 1.1754944e-38, %v610
      %v612 = vsel %vm609, %v611, %v607
      %v613 = vmul.f32 1.0, %v612
      %v614 = vtanh.pop %v534
      %v615 = vxor.u32 %v574, 2147483648
      %v616 = vmul.f32 %v615, 1.442695
      %v617 = vpow.pop %v616
      %v618 = vadd.f32 %v617, 1.0
      %v619 = vrcp.pop %v618
      %v620 = vmul.f32 %v618, %v619
      %v621 = vsub.f32 1.0, %v620
      %v622 = vmul.f32 %v619, %v621
      %v623 = vadd.f32 %v619, %v622
      %vm624 = vweird.f32 %v618
      %vm625 = vweird.f32 %v619
      %vm626 = vmor %vm624, %vm625
      %v627 = vsel %vm626, %v619, %v623
      %v628 = vand.u32 2147483647, %v618
      %vm629 = vcmp.eq.f32.partialorder %v628, 8.507059e+37
      %v630 = vand.u32 %v618, 2147483648
      %v631 = vor.u32 1.1754944e-38, %v630
      %v632 = vsel %vm629, %v631, %v627
      %v633 = vmul.f32 1.0, %v632
      %v634 = vmul.f32 %v613, %v406
      %v635 = vmul.f32 %v594, %v614
      %v636 = vadd.f32 %v634, %v635
      %v637 = vtanh.pop %v636
      %v638 = vmul.f32 %v633, %v637
      %639 = vst [vmem:[%s6] sm:$0x3] %v638
      %640 = vst [vmem:[%s7] sm:$0x3] %v636
      %v641 = vld [vmem:[%s3] sm:$0xff]
      %v642 = vld [vmem:[%s3 + $0x8] sm:$0xff]
      %v643 = vld [vmem:[%s3 + $0x10] sm:$0xff]
      %v644 = vld [vmem:[%s3 + $0x18] sm:$0xff]
      %v645 = vld [vmem:[%s3 + $0x20] sm:$0xff]
      %v646 = vld [vmem:[%s3 + $0x28] sm:$0xff]
      %v647 = vld [vmem:[%s3 + $0x30] sm:$0xff]
      %v648 = vld [vmem:[%s3 + $0x38] sm:$0xff]
      %v649 = vld [vmem:[%s3 + $0x40] sm:$0xff]
      %v650 = vld [vmem:[%s3 + $0x48] sm:$0xff]
      %v651 = vld [vmem:[%s3 + $0x50] sm:$0xff]
      %v652 = vld [vmem:[%s3 + $0x58] sm:$0xff]
      %v653 = vld [vmem:[%s3 + $0x60] sm:$0xff]
      %v654 = vld [vmem:[%s3 + $0x68] sm:$0xff]
      %v655 = vld [vmem:[%s3 + $0x70] sm:$0xff]
      %v656 = vld [vmem:[%s3 + $0x78] sm:$0xff]
      %v657 = vld [vmem:[%s4] sm:$0x1]
      %v659 = vperm.slane %v657, 0
      %661 = vmatpush.msra.mxu0 %v656
      %662 = vmatpush.msra.mxu0 %v655
      %663 = vmatpush.msra.mxu0 %v654
      %664 = vmatpush.msra.mxu0 %v653
      %665 = vmatpush.msra.mxu0 %v652
      %666 = vmatpush.msra.mxu0 %v651
      %667 = vmatpush.msra.mxu0 %v650
      %668 = vmatpush.msra.mxu0 %v649
      %669 = vmatpush.msra.mxu0 %v648
      %670 = vmatpush.msra.mxu0 %v647
      %671 = vmatpush.msra.mxu0 %v646
      %672 = vmatpush.msra.mxu0 %v645
      %673 = vmatpush.msra.mxu0 %v644
      %674 = vmatpush.msra.mxu0 %v643
      %675 = vmatpush.msra.mxu0 %v642
      %676 = vmatpush.msra.mxu0 %v641
      %677 = vmatmul.f32.gmra.mxu0 %v638
      %v678 = vpop.f32.mrf.mxu0
      %v679 = vadd.f32 %v659, %v678
      %680 = vdwg.mxu0
      %681 = vst [vmem:[%s268] sm:$0x3] %v679
      %p682 = scmp.lt.s32.totalorder %s19, 7
      %s683 = scalar_select %p682, %s19, 7
      %s684 = smul.addr %s683, 2
      %s685 = scalar_lea.vmem %s5, %s684
      // Predicated region
      $region45: #{_forward_impl.6} parent=39 // pred_check
        %p686 = pneg %p147
      $region46: #{_forward_impl.6} parent=39 // pred_check_branch
        %688 = sbr.rel (%p686) target = $region48
      $region47: #{_forward_impl.6} parent=39 // pred_region
        _
      $region48: #{_forward_impl.6} parent=39 // pred_fallthru
        _
      // Predicated region
      $region49: #{_forward_impl.6} parent=39 // pred_check
        %p689 = pneg %p168
      $region50: #{_forward_impl.6} parent=39 // pred_check_branch
        %691 = sbr.rel (%p689) target = $region52
      $region51: #{_forward_impl.6} parent=39 // pred_region
        _
      $region52: #{_forward_impl.6} parent=39 // pred_fallthru
        _
      // Predicated region
      $region53: #{_forward_impl.6} parent=39 // pred_check
        %p692 = pneg %p189
      $region54: #{_forward_impl.6} parent=39 // pred_check_branch
        %694 = sbr.rel (%p692) target = $region56
      $region55: #{_forward_impl.6} parent=39 // pred_region
        _
      $region56: #{_forward_impl.6} parent=39 // pred_fallthru
        _
      // Predicated region
      $region57: #{_forward_impl.6} parent=39 // pred_check
        %p695 = pneg %p168
      $region58: #{_forward_impl.6} parent=39 // pred_check_branch
        %697 = sbr.rel (%p695) target = $region60
      $region59: #{_forward_impl.6} parent=39 // pred_region
        _
      $region60: #{_forward_impl.6} parent=39 // pred_fallthru
        _
      // Predicated region
      $region61: #{_forward_impl.6} parent=39 // pred_check
        %p698 = pneg %p189
      $region62: #{_forward_impl.6} parent=39 // pred_check_branch
        %700 = sbr.rel (%p698) target = $region64
      $region63: #{_forward_impl.6} parent=39 // pred_region
        _
      $region64: #{_forward_impl.6} parent=39 // pred_fallthru
        _
    $region40: #{_forward_impl.6} parent=5 // pred_fallthru
      _
    %p701 = scmp.le.s32.totalorder 2, %s14
    // Predicated region
    $region65: #{_forward_impl.6} parent=5 // pred_check
      %p702 = pneg %p701
    $region66: #{_forward_impl.6} parent=5 // pred_check_branch
      %704 = sbr.rel (%p702) target = $region68
    $region67: #{_forward_impl.6} parent=5 // pred_region
      %s705 = ssub.s32 %s14, 2
      // Predicated region
      $region69: #{_forward_impl.6} parent=67 // pred_check
        %p706 = pneg %p153
      $region70: #{_forward_impl.6} parent=67 // pred_check_branch
        %708 = sbr.rel (%p706) target = $region72
      $region71: #{_forward_impl.6} parent=67 // pred_region
        %p709 = scmp.lt.s32.totalorder %s20, 7
        %s710 = scalar_select %p709, %s20, 7
        %s711 = smul.addr %s710, 2
        %s712 = scalar_lea.vmem %s5, %s711
      $region72: #{_forward_impl.6} parent=67 // pred_fallthru
        _
    $region68: #{_forward_impl.6} parent=5 // pred_fallthru
      _
  $region6: #{_forward_impl.6} parent=0 // loop_footer
    %s18 = sadd.s32 1, %s14
  $region7: #{_forward_impl.6} parent=0 // loop_footer_branch
    %13 = sbr.rel target = $region3
  $region8: #{_forward_impl.6} parent=0 // loop_exit
    _

// kernel: _forward_impl.7
$region0: #{_forward_impl.7}
  #allocation0 [shape = 'u32[]', space=smem, size = 0x4, offset = 0x4, fixed_abs, tag = 'smem constant byte address 0x4 - core index']
  #allocation1 [shape = 'u32[72,128]{1,0:T(1,128)}', space=vmem, size = 0x9000, scoped, tag = 'internal scratch']
  #allocation2 [shape = 'f32[8,2]{1,0:T(8,128)}', space=vmem, size = 0x1000, scoped, tag = 'scratch operand']
  #allocation3 [shape = 'f32[1,2,128]{2,1,0:T(2,128)}', space=vmem, size = 0x400, scoped, tag = 'scratch operand']
  #allocation4 [shape = 'f32[1,2,128]{2,1,0:T(2,128)}', space=vmem, size = 0x400, scoped, tag = 'scratch operand']
  #allocation5 [shape = 'f32[2,128]{1,0:T(2,128)}', space=vmem, size = 0x400, scoped, tag = 'scratch operand']
  %s0 = inlined_call_operand.vmem [shape: f32[8,2,128], index: 0, kind: input, shape index: {}]
  %s1 = inlined_call_operand.vmem [shape: f32[8,2,128], index: 1, kind: input, shape index: {}]
  %s2 = inlined_call_operand.vmem [shape: f32[8,2], index: 2, kind: input, shape index: {}]
  %s3 = inlined_call_operand.vmem [shape: f32[8,8,2], index: 3, kind: input, shape index: {}]
  %s4 = inlined_call_operand.vmem [shape: f32[1,2,128], index: 4, kind: input, shape index: {}]
  %s5 = inlined_call_operand.vmem [shape: f32[1,2,128], index: 5, kind: input, shape index: {}]
  %s6 = inlined_call_operand.vmem [shape: f32[256,512], index: 6, kind: input, shape index: {}]
  %s7 = inlined_call_operand.vmem [shape: f32[1,512], index: 7, kind: input, shape index: {}]
  %s8 = inlined_call_operand.vmem [shape: f32[128,128], index: 8, kind: input, shape index: {}]
  %s9 = inlined_call_operand.vmem [shape: f32[1,1,128], index: 9, kind: input, shape index: {}]
  %s10 = inlined_call_operand.vmem [shape: f32[1,128], index: 10, kind: input, shape index: {}]
  %s11 = inlined_call_operand.vmem [shape: s32[8,2], index: 11, kind: output, shape index: {0}]
  %s12 = inlined_call_operand.hbm [shape: f32[1,2], index: 12, kind: output, shape index: {1}]
  %13 = xla_tuple %s11, %s12
  %s14 = sld [smem:[#allocation0]]
  $region89: #{_forward_impl.7} parent=0
    _
  %s16 = ssub.s32 1, %s14
  %s17 = scalar_select 0, %s16, %s14
  $region1: #{_forward_impl.7} parent=0
    #allocation6 [shape = 'u8[512]{0}', space=vmem, size = 0x400, scoped, tag = 'output window, operand 1, single buffered']
    #allocation7 [shape = 's32[2]{0}', space=sflag, size = 0x8, scoped, tag = 'scoped memory for _forward_impl.7']
    %18 = vsyncpa [#allocation7], 0
    loop: start=0, step=1, limit=10
    $region2: #{_forward_impl.7} parent=1 // loop_pre_header
      _
    $region3: #{_forward_impl.7} parent=1 // loop_header
      %s20 = sphi 0, %s24
      %p21 = scmp.ge.s32.totalorder %s20, 10
      %s28 = sphi 0, %s28
      %s30 = sphi 0, %s28
      %s31 = sphi 0, %s30
      %s45 = sphi 0, %s31
      %s49 = sphi 0, %s49
      %s51 = sphi 0, %s49
      %s52 = sphi 0, %s51
      %s66 = sphi 0, %s52
      %s70 = sphi 0, %s70
      %s72 = sphi 0, %s70
      %s73 = sphi 0, %s72
      %s87 = sphi 0, %s73
      %s93 = sphi 0, %s95
      %s96 = sphi 0, %s93
      %s97 = sphi 0, %s96
      %s113 = sphi 0, %s97
      %s117 = sphi 0, %s117
      %s119 = sphi 0, %s117
      %s120 = sphi 0, %s119
      %s134 = sphi 0, %s120
      %s138 = sphi 0, %s138
      %s140 = sphi 0, %s138
      %s141 = sphi 0, %s140
      %s155 = sphi 0, %s141
      %s159 = sphi 0, %s159
      %s161 = sphi 0, %s159
      %s162 = sphi 0, %s161
      %s176 = sphi 0, %s162
      %s180 = sphi 0, %s180
      %s182 = sphi 0, %s180
      %s183 = sphi 0, %s182
      %s197 = sphi 0, %s183
      %s201 = sphi 0, %s201
      %s203 = sphi 0, %s201
      %s204 = sphi 0, %s203
      %s218 = sphi 0, %s204
      %s222 = sphi 0, %s222
      %s224 = sphi 0, %s222
      %s225 = sphi 0, %s224
      %s239 = sphi 0, %s225
      %s243 = sphi 0, %s243
      %s245 = sphi 0, %s243
      %s246 = sphi 0, %s245
      %s260 = sphi 0, %s246
      %s264 = sphi 0, %s264
      %s266 = sphi 0, %s264
      %s267 = sphi 0, %s266
      %s281 = sphi 0, %s267
      %s285 = sphi 0, %s285
      %s287 = sphi 0, %s285
      %s288 = sphi 0, %s287
      %s302 = sphi 0, %s288
    $region4: #{_forward_impl.7} parent=1 // loop_header_branch
      %23 = sbr.rel (%p21) target = $region8
    $region5: #{_forward_impl.7} parent=1 // loop_body
      %s25 = ssub.s32 %s20, 1
      %s26 = ssub.s32 %s20, 2
      %s27 = sadd.s32 %s20, 1
      %s29 = sadd.s32 %s28, 1
      %p32 = scmp.eq.s32.totalorder %s20, 7
      %p33 = scmp.ne.s32.totalorder %s28, %s30
      %p34 = scmp.eq.s32.totalorder %s20, 0
      %p35 = por %p33, %p34
      %p36 = scmp.ne.s32.totalorder %s28, %s30
      %p37 = scmp.eq.s32.totalorder %s25, 7
      %p38 = por %p36, %p37
      %p39 = scmp.ne.s32.totalorder %s30, %s31
      %p40 = scmp.eq.s32.totalorder %s25, 0
      %p41 = por %p39, %p40
      %p42 = scmp.ne.s32.totalorder %s30, %s31
      %p43 = scmp.eq.s32.totalorder %s26, 7
      %p44 = por %p42, %p43
      %p46 = scmp.ne.s32.totalorder %s31, %s45
      %p47 = scmp.eq.s32.totalorder %s26, 0
      %p48 = por %p46, %p47
      %s50 = sadd.s32 %s49, 1
      %p53 = scmp.eq.s32.totalorder %s20, 7
      %p54 = scmp.ne.s32.totalorder %s49, %s51
      %p55 = scmp.eq.s32.totalorder %s20, 0
      %p56 = por %p54, %p55
      %p57 = scmp.ne.s32.totalorder %s49, %s51
      %p58 = scmp.eq.s32.totalorder %s25, 7
      %p59 = por %p57, %p58
      %p60 = scmp.ne.s32.totalorder %s51, %s52
      %p61 = scmp.eq.s32.totalorder %s25, 0
      %p62 = por %p60, %p61
      %p63 = scmp.ne.s32.totalorder %s51, %s52
      %p64 = scmp.eq.s32.totalorder %s26, 7
      %p65 = por %p63, %p64
      %p67 = scmp.ne.s32.totalorder %s52, %s66
      %p68 = scmp.eq.s32.totalorder %s26, 0
      %p69 = por %p67, %p68
      %s71 = sadd.s32 %s70, 1
      %p74 = scmp.eq.s32.totalorder %s20, 7
      %p75 = scmp.ne.s32.totalorder %s70, %s72
      %p76 = scmp.eq.s32.totalorder %s20, 0
      %p77 = por %p75, %p76
      %p78 = scmp.ne.s32.totalorder %s70, %s72
      %p79 = scmp.eq.s32.totalorder %s25, 7
      %p80 = por %p78, %p79
      %p81 = scmp.ne.s32.totalorder %s72, %s73
      %p82 = scmp.eq.s32.totalorder %s25, 0
      %p83 = por %p81, %p82
      %p84 = scmp.ne.s32.totalorder %s72, %s73
      %p85 = scmp.eq.s32.totalorder %s26, 7
      %p86 = por %p84, %p85
      %p88 = scmp.ne.s32.totalorder %s73, %s87
      %p89 = scmp.eq.s32.totalorder %s26, 0
      %p90 = por %p88, %p89
      %s91 = ssub.s32 %s20, %s27
      %p92 = scmp.eq.s32.totalorder %s91, 0
      %s94 = sadd.s32 %s93, 1
      %s95 = scalar_select %p92, %s93, %s94
      %p98 = pneg %p92
      %p99 = scmp.eq.s32.totalorder %s20, 7
      %p100 = por %p98, %p99
      %p101 = scmp.ne.s32.totalorder %s93, %s96
      %p102 = scmp.eq.s32.totalorder %s20, 0
      %p103 = por %p101, %p102
      %p104 = scmp.ne.s32.totalorder %s93, %s96
      %p105 = scmp.eq.s32.totalorder %s25, 7
      %p106 = por %p104, %p105
      %p107 = scmp.ne.s32.totalorder %s96, %s97
      %p108 = scmp.eq.s32.totalorder %s25, 0
      %p109 = por %p107, %p108
      %p110 = scmp.ne.s32.totalorder %s96, %s97
      %p111 = scmp.eq.s32.totalorder %s26, 7
      %p112 = por %p110, %p111
      %p114 = scmp.ne.s32.totalorder %s97, %s113
      %p115 = scmp.eq.s32.totalorder %s26, 0
      %p116 = por %p114, %p115
      %s118 = sadd.s32 %s117, 1
      %p121 = scmp.eq.s32.totalorder %s20, 7
      %p122 = scmp.ne.s32.totalorder %s117, %s119
      %p123 = scmp.eq.s32.totalorder %s20, 0
      %p124 = por %p122, %p123
      %p125 = scmp.ne.s32.totalorder %s117, %s119
      %p126 = scmp.eq.s32.totalorder %s25, 7
      %p127 = por %p125, %p126
      %p128 = scmp.ne.s32.totalorder %s119, %s120
      %p129 = scmp.eq.s32.totalorder %s25, 0
      %p130 = por %p128, %p129
      %p131 = scmp.ne.s32.totalorder %s119, %s120
      %p132 = scmp.eq.s32.totalorder %s26, 7
      %p133 = por %p131, %p132
      %p135 = scmp.ne.s32.totalorder %s120, %s134
      %p136 = scmp.eq.s32.totalorder %s26, 0
      %p137 = por %p135, %p136
      %s139 = sadd.s32 %s138, 1
      %p142 = scmp.eq.s32.totalorder %s20, 7
      %p143 = scmp.ne.s32.totalorder %s138, %s140
      %p144 = scmp.eq.s32.totalorder %s20, 0
      %p145 = por %p143, %p144
      %p146 = scmp.ne.s32.totalorder %s138, %s140
      %p147 = scmp.eq.s32.totalorder %s25, 7
      %p148 = por %p146, %p147
      %p149 = scmp.ne.s32.totalorder %s140, %s141
      %p150 = scmp.eq.s32.totalorder %s25, 0
      %p151 = por %p149, %p150
      %p152 = scmp.ne.s32.totalorder %s140, %s141
      %p153 = scmp.eq.s32.totalorder %s26, 7
      %p154 = por %p152, %p153
      %p156 = scmp.ne.s32.totalorder %s141, %s155
      %p157 = scmp.eq.s32.totalorder %s26, 0
      %p158 = por %p156, %p157
      %s160 = sadd.s32 %s159, 1
      %p163 = scmp.eq.s32.totalorder %s20, 7
      %p164 = scmp.ne.s32.totalorder %s159, %s161
      %p165 = scmp.eq.s32.totalorder %s20, 0
      %p166 = por %p164, %p165
      %p167 = scmp.ne.s32.totalorder %s159, %s161
      %p168 = scmp.eq.s32.totalorder %s25, 7
      %p169 = por %p167, %p168
      %p170 = scmp.ne.s32.totalorder %s161, %s162
      %p171 = scmp.eq.s32.totalorder %s25, 0
      %p172 = por %p170, %p171
      %p173 = scmp.ne.s32.totalorder %s161, %s162
      %p174 = scmp.eq.s32.totalorder %s26, 7
      %p175 = por %p173, %p174
      %p177 = scmp.ne.s32.totalorder %s162, %s176
      %p178 = scmp.eq.s32.totalorder %s26, 0
      %p179 = por %p177, %p178
      %s181 = sadd.s32 %s180, 1
      %p184 = scmp.eq.s32.totalorder %s20, 7
      %p185 = scmp.ne.s32.totalorder %s180, %s182
      %p186 = scmp.eq.s32.totalorder %s20, 0
      %p187 = por %p185, %p186
      %p188 = scmp.ne.s32.totalorder %s180, %s182
      %p189 = scmp.eq.s32.totalorder %s25, 7
      %p190 = por %p188, %p189
      %p191 = scmp.ne.s32.totalorder %s182, %s183
      %p192 = scmp.eq.s32.totalorder %s25, 0
      %p193 = por %p191, %p192
      %p194 = scmp.ne.s32.totalorder %s182, %s183
      %p195 = scmp.eq.s32.totalorder %s26, 7
      %p196 = por %p194, %p195
      %p198 = scmp.ne.s32.totalorder %s183, %s197
      %p199 = scmp.eq.s32.totalorder %s26, 0
      %p200 = por %p198, %p199
      %s202 = sadd.s32 %s201, 1
      %p205 = scmp.eq.s32.totalorder %s20, 7
      %p206 = scmp.ne.s32.totalorder %s201, %s203
      %p207 = scmp.eq.s32.totalorder %s20, 0
      %p208 = por %p206, %p207
      %p209 = scmp.ne.s32.totalorder %s201, %s203
      %p210 = scmp.eq.s32.totalorder %s25, 7
      %p211 = por %p209, %p210
      %p212 = scmp.ne.s32.totalorder %s203, %s204
      %p213 = scmp.eq.s32.totalorder %s25, 0
      %p214 = por %p212, %p213
      %p215 = scmp.ne.s32.totalorder %s203, %s204
      %p216 = scmp.eq.s32.totalorder %s26, 7
      %p217 = por %p215, %p216
      %p219 = scmp.ne.s32.totalorder %s204, %s218
      %p220 = scmp.eq.s32.totalorder %s26, 0
      %p221 = por %p219, %p220
      %s223 = sadd.s32 %s222, 1
      %p226 = scmp.eq.s32.totalorder %s20, 7
      %p227 = scmp.ne.s32.totalorder %s222, %s224
      %p228 = scmp.eq.s32.totalorder %s20, 0
      %p229 = por %p227, %p228
      %p230 = scmp.ne.s32.totalorder %s222, %s224
      %p231 = scmp.eq.s32.totalorder %s25, 7
      %p232 = por %p230, %p231
      %p233 = scmp.ne.s32.totalorder %s224, %s225
      %p234 = scmp.eq.s32.totalorder %s25, 0
      %p235 = por %p233, %p234
      %p236 = scmp.ne.s32.totalorder %s224, %s225
      %p237 = scmp.eq.s32.totalorder %s26, 7
      %p238 = por %p236, %p237
      %p240 = scmp.ne.s32.totalorder %s225, %s239
      %p241 = scmp.eq.s32.totalorder %s26, 0
      %p242 = por %p240, %p241
      %s244 = sadd.s32 %s243, 1
      %p247 = scmp.eq.s32.totalorder %s20, 7
      %p248 = scmp.ne.s32.totalorder %s243, %s245
      %p249 = scmp.eq.s32.totalorder %s20, 0
      %p250 = por %p248, %p249
      %p251 = scmp.ne.s32.totalorder %s243, %s245
      %p252 = scmp.eq.s32.totalorder %s25, 7
      %p253 = por %p251, %p252
      %p254 = scmp.ne.s32.totalorder %s245, %s246
      %p255 = scmp.eq.s32.totalorder %s25, 0
      %p256 = por %p254, %p255
      %p257 = scmp.ne.s32.totalorder %s245, %s246
      %p258 = scmp.eq.s32.totalorder %s26, 7
      %p259 = por %p257, %p258
      %p261 = scmp.ne.s32.totalorder %s246, %s260
      %p262 = scmp.eq.s32.totalorder %s26, 0
      %p263 = por %p261, %p262
      %s265 = sadd.s32 %s264, 1
      %p268 = scmp.eq.s32.totalorder %s20, 7
      %p269 = scmp.ne.s32.totalorder %s264, %s266
      %p270 = scmp.eq.s32.totalorder %s20, 0
      %p271 = por %p269, %p270
      %p272 = scmp.ne.s32.totalorder %s264, %s266
      %p273 = scmp.eq.s32.totalorder %s25, 7
      %p274 = por %p272, %p273
      %p275 = scmp.ne.s32.totalorder %s266, %s267
      %p276 = scmp.eq.s32.totalorder %s25, 0
      %p277 = por %p275, %p276
      %p278 = scmp.ne.s32.totalorder %s266, %s267
      %p279 = scmp.eq.s32.totalorder %s26, 7
      %p280 = por %p278, %p279
      %p282 = scmp.ne.s32.totalorder %s267, %s281
      %p283 = scmp.eq.s32.totalorder %s26, 0
      %p284 = por %p282, %p283
      %s286 = sadd.s32 %s285, 1
      %p289 = scmp.eq.s32.totalorder %s20, 7
      %p290 = scmp.ne.s32.totalorder %s285, %s287
      %p291 = scmp.eq.s32.totalorder %s20, 0
      %p292 = por %p290, %p291
      %p293 = scmp.ne.s32.totalorder %s285, %s287
      %p294 = scmp.eq.s32.totalorder %s25, 7
      %p295 = por %p293, %p294
      %p296 = scmp.ne.s32.totalorder %s287, %s288
      %p297 = scmp.eq.s32.totalorder %s25, 0
      %p298 = por %p296, %p297
      %p299 = scmp.ne.s32.totalorder %s287, %s288
      %p300 = scmp.eq.s32.totalorder %s26, 7
      %p301 = por %p299, %p300
      %p303 = scmp.ne.s32.totalorder %s288, %s302
      %p304 = scmp.eq.s32.totalorder %s26, 0
      %p305 = por %p303, %p304
      %p306 = scmp.le.s32.totalorder 1, %s20
      %p307 = scmp.lt.s32.totalorder %s20, 9
      %p308 = pnand %p306, %p307
      %p309 = pneg %p308
      // Predicated region
      $region9: #{_forward_impl.7} parent=5 // pred_check
        _
      $region10: #{_forward_impl.7} parent=5 // pred_check_branch
        %311 = sbr.rel (%p308) target = $region12
      $region11: #{_forward_impl.7} parent=5 // pred_region
        %s312 = ssub.s32 %s20, 1
        // Predicated region
        $region13: #{_forward_impl.7} parent=11 // pred_check
          %p313 = pneg %p41
        $region14: #{_forward_impl.7} parent=11 // pred_check_branch
          %315 = sbr.rel (%p313) target = $region16
        $region15: #{_forward_impl.7} parent=11 // pred_region
          _
        $region16: #{_forward_impl.7} parent=11 // pred_fallthru
          _
        // Predicated region
        $region17: #{_forward_impl.7} parent=11 // pred_check
          %p316 = pneg %p62
        $region18: #{_forward_impl.7} parent=11 // pred_check_branch
          %318 = sbr.rel (%p316) target = $region20
        $region19: #{_forward_impl.7} parent=11 // pred_region
          _
        $region20: #{_forward_impl.7} parent=11 // pred_fallthru
          _
        // Predicated region
        $region21: #{_forward_impl.7} parent=11 // pred_check
          %p319 = pneg %p83
        $region22: #{_forward_impl.7} parent=11 // pred_check_branch
          %321 = sbr.rel (%p319) target = $region24
        $region23: #{_forward_impl.7} parent=11 // pred_region
          _
        $region24: #{_forward_impl.7} parent=11 // pred_fallthru
          _
        // Predicated region
        $region25: #{_forward_impl.7} parent=11 // pred_check
          %p322 = pneg %p130
        $region26: #{_forward_impl.7} parent=11 // pred_check_branch
          %324 = sbr.rel (%p322) target = $region28
        $region27: #{_forward_impl.7} parent=11 // pred_region
          _
        $region28: #{_forward_impl.7} parent=11 // pred_fallthru
          _
        // Predicated region
        $region29: #{_forward_impl.7} parent=11 // pred_check
          %p325 = pneg %p151
        $region30: #{_forward_impl.7} parent=11 // pred_check_branch
          %327 = sbr.rel (%p325) target = $region32
        $region31: #{_forward_impl.7} parent=11 // pred_region
          _
        $region32: #{_forward_impl.7} parent=11 // pred_fallthru
          _
        // Predicated region
        $region33: #{_forward_impl.7} parent=11 // pred_check
          %p328 = pneg %p172
        $region34: #{_forward_impl.7} parent=11 // pred_check_branch
          %330 = sbr.rel (%p328) target = $region36
        $region35: #{_forward_impl.7} parent=11 // pred_region
          _
        $region36: #{_forward_impl.7} parent=11 // pred_fallthru
          _
        // Predicated region
        $region37: #{_forward_impl.7} parent=11 // pred_check
          %p331 = pneg %p193
        $region38: #{_forward_impl.7} parent=11 // pred_check_branch
          %333 = sbr.rel (%p331) target = $region40
        $region39: #{_forward_impl.7} parent=11 // pred_region
          _
        $region40: #{_forward_impl.7} parent=11 // pred_fallthru
          _
        // Predicated region
        $region41: #{_forward_impl.7} parent=11 // pred_check
          %p334 = pneg %p214
        $region42: #{_forward_impl.7} parent=11 // pred_check_branch
          %336 = sbr.rel (%p334) target = $region44
        $region43: #{_forward_impl.7} parent=11 // pred_region
          _
        $region44: #{_forward_impl.7} parent=11 // pred_fallthru
          _
        // Predicated region
        $region45: #{_forward_impl.7} parent=11 // pred_check
          %p337 = pneg %p235
        $region46: #{_forward_impl.7} parent=11 // pred_check_branch
          %339 = sbr.rel (%p337) target = $region48
        $region47: #{_forward_impl.7} parent=11 // pred_region
          _
        $region48: #{_forward_impl.7} parent=11 // pred_fallthru
          _
        // Predicated region
        $region49: #{_forward_impl.7} parent=11 // pred_check
          %p340 = pneg %p256
        $region50: #{_forward_impl.7} parent=11 // pred_check_branch
          %342 = sbr.rel (%p340) target = $region52
        $region51: #{_forward_impl.7} parent=11 // pred_region
          _
        $region52: #{_forward_impl.7} parent=11 // pred_fallthru
          _
      $region12: #{_forward_impl.7} parent=5 // pred_fallthru
        _
      %p343 = scmp.lt.s32.totalorder %s20, 8
      // Predicated region
      $region53: #{_forward_impl.7} parent=5 // pred_check
        %p344 = pneg %p343
      $region54: #{_forward_impl.7} parent=5 // pred_check_branch
        %346 = sbr.rel (%p344) target = $region56
      $region55: #{_forward_impl.7} parent=5 // pred_region
        // Predicated region
        $region57: #{_forward_impl.7} parent=55 // pred_check
          %p347 = pneg %p103
        $region58: #{_forward_impl.7} parent=55 // pred_check_branch
          %349 = sbr.rel (%p347) target = $region60
        $region59: #{_forward_impl.7} parent=55 // pred_region
          %p350 = scmp.lt.s32.totalorder %s20, 7
          %s351 = scalar_select %p350, %s20, 7
          %s352 = smul.addr %s351, 8
          %s353 = scalar_lea.vmem %s3, %s352
        $region60: #{_forward_impl.7} parent=55 // pred_fallthru
          _
      $region56: #{_forward_impl.7} parent=5 // pred_fallthru
        _
      %p354 = scmp.le.s32.totalorder 1, %s20
      %p355 = scmp.lt.s32.totalorder %s20, 9
      %p356 = pnand %p354, %p355
      %p357 = pneg %p356
      // Predicated region
      $region61: #{_forward_impl.7} parent=5 // pred_check
        _
      $region62: #{_forward_impl.7} parent=5 // pred_check_branch
        %359 = sbr.rel (%p356) target = $region64
      $region63: #{_forward_impl.7} parent=5 // pred_region
        %s360 = ssub.s32 %s20, 1
        %p361 = pneg %p41
        %p362 = pneg %p38
        %p363 = pneg %p62
        %p364 = pneg %p59
        %p365 = pneg %p83
        %p366 = pneg %p80
        %p367 = scmp.lt.s32.totalorder %s25, 7
        %s368 = scalar_select %p367, %s25, 7
        %s369 = smul.addr %s368, 8
        %s370 = scalar_lea.vmem %s3, %s369
        %p371 = pneg %p109
        %p372 = pneg %p106
        %p373 = pneg %p130
        %p374 = pneg %p127
        %p375 = pneg %p151
        %p376 = pneg %p148
        %p377 = pneg %p172
        %p378 = pneg %p169
        %p379 = pneg %p193
        %p380 = pneg %p190
        %p381 = pneg %p214
        %p382 = pneg %p211
        %p383 = pneg %p235
        %p384 = pneg %p232
        %p385 = pneg %p256
        %p386 = pneg %p253
        %p387 = pneg %p277
        %p388 = pneg %p274
        %p389 = pneg %p298
        %p390 = pneg %p295
        %p391 = scmp.lt.s32.totalorder %s25, 7
        %s392 = scalar_select %p391, %s25, 7
        %s393 = smul.addr %s392, 8
        %s394 = scalar_lea.vmem %s3, %s393
        %p395 = scmp.eq.s32.totalorder %s25, 0
        // Predicated region
        $region65: #{_forward_impl.7} parent=63 // pred_check
          %p396 = pneg %p395
        $region66: #{_forward_impl.7} parent=63 // pred_check_branch
          %398 = sbr.rel (%p396) target = $region68
        $region67: #{_forward_impl.7} parent=63 // pred_region
          %v399 = vld [vmem:[%s2] sm:$0xff]
          %vm400 = vcmask 15360
          %401 = vst.msk [vmem:[#allocation2] sm:$0xff] %vm400, %v399
          %v402 = vld [vmem:[%s4] sm:$0x3]
          %403 = vst [vmem:[#allocation3] sm:$0x3] %v402
          %v404 = vld [vmem:[%s5] sm:$0x3]
          %405 = vst [vmem:[#allocation4] sm:$0x3] %v404
          %v406 = vld [vmem:[%s10] sm:$0x1]
          %v408 = vperm.slane %v406, 0
          %410 = vst [vmem:[#allocation5] sm:$0x3] %v408
          %vm411 = vcmask 8192
          %412 = vst.msk [vmem:[#allocation6] sm:$0x1] %vm411, 0.0
        $region68: #{_forward_impl.7} parent=63 // pred_fallthru
          _
        %v413 = vld [vmem:[#allocation5] sm:$0x3]
        %v414 = vld [vmem:[%s6] sm:$0xff]
        %v415 = vld [vmem:[%s6 + $0x8] sm:$0xff]
        %v416 = vld [vmem:[%s6 + $0x10] sm:$0xff]
        %v417 = vld [vmem:[%s6 + $0x18] sm:$0xff]
        %v418 = vld [vmem:[%s6 + $0x20] sm:$0xff]
        %v419 = vld [vmem:[%s6 + $0x28] sm:$0xff]
        %v420 = vld [vmem:[%s6 + $0x30] sm:$0xff]
        %v421 = vld [vmem:[%s6 + $0x38] sm:$0xff]
        %v422 = vld [vmem:[%s6 + $0x40] sm:$0xff]
        %v423 = vld [vmem:[%s6 + $0x48] sm:$0xff]
        %v424 = vld [vmem:[%s6 + $0x50] sm:$0xff]
        %v425 = vld [vmem:[%s6 + $0x58] sm:$0xff]
        %v426 = vld [vmem:[%s6 + $0x60] sm:$0xff]
        %v427 = vld [vmem:[%s6 + $0x68] sm:$0xff]
        %v428 = vld [vmem:[%s6 + $0x70] sm:$0xff]
        %v429 = vld [vmem:[%s6 + $0x78] sm:$0xff]
        %v430 = vld [vmem:[%s6 + $0x80] sm:$0xff]
        %v431 = vld [vmem:[%s6 + $0x88] sm:$0xff]
        %v432 = vld [vmem:[%s6 + $0x90] sm:$0xff]
        %v433 = vld [vmem:[%s6 + $0x98] sm:$0xff]
        %v434 = vld [vmem:[%s6 + $0xa0] sm:$0xff]
        %v435 = vld [vmem:[%s6 + $0xa8] sm:$0xff]
        %v436 = vld [vmem:[%s6 + $0xb0] sm:$0xff]
        %v437 = vld [vmem:[%s6 + $0xb8] sm:$0xff]
        %v438 = vld [vmem:[%s6 + $0xc0] sm:$0xff]
        %v439 = vld [vmem:[%s6 + $0xc8] sm:$0xff]
        %v440 = vld [vmem:[%s6 + $0xd0] sm:$0xff]
        %v441 = vld [vmem:[%s6 + $0xd8] sm:$0xff]
        %v442 = vld [vmem:[%s6 + $0xe0] sm:$0xff]
        %v443 = vld [vmem:[%s6 + $0xe8] sm:$0xff]
        %v444 = vld [vmem:[%s6 + $0xf0] sm:$0xff]
        %v445 = vld [vmem:[%s6 + $0xf8] sm:$0xff]
        %v446 = vld [vmem:[%s6 + $0x100] sm:$0xff]
        %v447 = vld [vmem:[%s6 + $0x108] sm:$0xff]
        %v448 = vld [vmem:[%s6 + $0x110] sm:$0xff]
        %v449 = vld [vmem:[%s6 + $0x118] sm:$0xff]
        %v450 = vld [vmem:[%s6 + $0x120] sm:$0xff]
        %v451 = vld [vmem:[%s6 + $0x128] sm:$0xff]
        %v452 = vld [vmem:[%s6 + $0x130] sm:$0xff]
        %v453 = vld [vmem:[%s6 + $0x138] sm:$0xff]
        %v454 = vld [vmem:[%s6 + $0x140] sm:$0xff]
        %v455 = vld [vmem:[%s6 + $0x148] sm:$0xff]
        %v456 = vld [vmem:[%s6 + $0x150] sm:$0xff]
        %v457 = vld [vmem:[%s6 + $0x158] sm:$0xff]
        %v458 = vld [vmem:[%s6 + $0x160] sm:$0xff]
        %v459 = vld [vmem:[%s6 + $0x168] sm:$0xff]
        %v460 = vld [vmem:[%s6 + $0x170] sm:$0xff]
        %v461 = vld [vmem:[%s6 + $0x178] sm:$0xff]
        %v462 = vld [vmem:[%s6 + $0x180] sm:$0xff]
        %v463 = vld [vmem:[%s6 + $0x188] sm:$0xff]
        %v464 = vld [vmem:[%s6 + $0x190] sm:$0xff]
        %v465 = vld [vmem:[%s6 + $0x198] sm:$0xff]
        %v466 = vld [vmem:[%s6 + $0x1a0] sm:$0xff]
        %v467 = vld [vmem:[%s6 + $0x1a8] sm:$0xff]
        %v468 = vld [vmem:[%s6 + $0x1b0] sm:$0xff]
        %v469 = vld [vmem:[%s6 + $0x1b8] sm:$0xff]
        %v470 = vld [vmem:[%s6 + $0x1c0] sm:$0xff]
        %v471 = vld [vmem:[%s6 + $0x1c8] sm:$0xff]
        %v472 = vld [vmem:[%s6 + $0x1d0] sm:$0xff]
        %v473 = vld [vmem:[%s6 + $0x1d8] sm:$0xff]
        %v474 = vld [vmem:[%s6 + $0x1e0] sm:$0xff]
        %v475 = vld [vmem:[%s6 + $0x1e8] sm:$0xff]
        %v476 = vld [vmem:[%s6 + $0x1f0] sm:$0xff]
        %v477 = vld [vmem:[%s6 + $0x1f8] sm:$0xff]
        %v478 = vld [vmem:[%s6 + $0x200] sm:$0xff]
        %v479 = vld [vmem:[%s6 + $0x208] sm:$0xff]
        %v480 = vld [vmem:[%s6 + $0x210] sm:$0xff]
        %v481 = vld [vmem:[%s6 + $0x218] sm:$0xff]
        %v482 = vld [vmem:[%s6 + $0x220] sm:$0xff]
        %v483 = vld [vmem:[%s6 + $0x228] sm:$0xff]
        %v484 = vld [vmem:[%s6 + $0x230] sm:$0xff]
        %v485 = vld [vmem:[%s6 + $0x238] sm:$0xff]
        %v486 = vld [vmem:[%s6 + $0x240] sm:$0xff]
        %v487 = vld [vmem:[%s6 + $0x248] sm:$0xff]
        %v488 = vld [vmem:[%s6 + $0x250] sm:$0xff]
        %v489 = vld [vmem:[%s6 + $0x258] sm:$0xff]
        %v490 = vld [vmem:[%s6 + $0x260] sm:$0xff]
        %v491 = vld [vmem:[%s6 + $0x268] sm:$0xff]
        %v492 = vld [vmem:[%s6 + $0x270] sm:$0xff]
        %v493 = vld [vmem:[%s6 + $0x278] sm:$0xff]
        %v494 = vld [vmem:[%s6 + $0x280] sm:$0xff]
        %v495 = vld [vmem:[%s6 + $0x288] sm:$0xff]
        %v496 = vld [vmem:[%s6 + $0x290] sm:$0xff]
        %v497 = vld [vmem:[%s6 + $0x298] sm:$0xff]
        %v498 = vld [vmem:[%s6 + $0x2a0] sm:$0xff]
        %v499 = vld [vmem:[%s6 + $0x2a8] sm:$0xff]
        %v500 = vld [vmem:[%s6 + $0x2b0] sm:$0xff]
        %v501 = vld [vmem:[%s6 + $0x2b8] sm:$0xff]
        %v502 = vld [vmem:[%s6 + $0x2c0] sm:$0xff]
        %v503 = vld [vmem:[%s6 + $0x2c8] sm:$0xff]
        %v504 = vld [vmem:[%s6 + $0x2d0] sm:$0xff]
        %v505 = vld [vmem:[%s6 + $0x2d8] sm:$0xff]
        %v506 = vld [vmem:[%s6 + $0x2e0] sm:$0xff]
        %v507 = vld [vmem:[%s6 + $0x2e8] sm:$0xff]
        %v508 = vld [vmem:[%s6 + $0x2f0] sm:$0xff]
        %v509 = vld [vmem:[%s6 + $0x2f8] sm:$0xff]
        %v510 = vld [vmem:[%s6 + $0x300] sm:$0xff]
        %v511 = vld [vmem:[%s6 + $0x308] sm:$0xff]
        %v512 = vld [vmem:[%s6 + $0x310] sm:$0xff]
        %v513 = vld [vmem:[%s6 + $0x318] sm:$0xff]
        %v514 = vld [vmem:[%s6 + $0x320] sm:$0xff]
        %v515 = vld [vmem:[%s6 + $0x328] sm:$0xff]
        %v516 = vld [vmem:[%s6 + $0x330] sm:$0xff]
        %v517 = vld [vmem:[%s6 + $0x338] sm:$0xff]
        %v518 = vld [vmem:[%s6 + $0x340] sm:$0xff]
        %v519 = vld [vmem:[%s6 + $0x348] sm:$0xff]
        %v520 = vld [vmem:[%s6 + $0x350] sm:$0xff]
        %v521 = vld [vmem:[%s6 + $0x358] sm:$0xff]
        %v522 = vld [vmem:[%s6 + $0x360] sm:$0xff]
        %v523 = vld [vmem:[%s6 + $0x368] sm:$0xff]
        %v524 = vld [vmem:[%s6 + $0x370] sm:$0xff]
        %v525 = vld [vmem:[%s6 + $0x378] sm:$0xff]
        %v526 = vld [vmem:[%s6 + $0x380] sm:$0xff]
        %v527 = vld [vmem:[%s6 + $0x388] sm:$0xff]
        %v528 = vld [vmem:[%s6 + $0x390] sm:$0xff]
        %v529 = vld [vmem:[%s6 + $0x398] sm:$0xff]
        %v530 = vld [vmem:[%s6 + $0x3a0] sm:$0xff]
        %v531 = vld [vmem:[%s6 + $0x3a8] sm:$0xff]
        %v532 = vld [vmem:[%s6 + $0x3b0] sm:$0xff]
        %v533 = vld [vmem:[%s6 + $0x3b8] sm:$0xff]
        %v534 = vld [vmem:[%s6 + $0x3c0] sm:$0xff]
        %v535 = vld [vmem:[%s6 + $0x3c8] sm:$0xff]
        %v536 = vld [vmem:[%s6 + $0x3d0] sm:$0xff]
        %v537 = vld [vmem:[%s6 + $0x3d8] sm:$0xff]
        %v538 = vld [vmem:[%s6 + $0x3e0] sm:$0xff]
        %v539 = vld [vmem:[%s6 + $0x3e8] sm:$0xff]
        %v540 = vld [vmem:[%s6 + $0x3f0] sm:$0xff]
        %v541 = vld [vmem:[%s6 + $0x3f8] sm:$0xff]
        %v542 = vld [vmem:[%s7] sm:$0xf]
        %v543 = vld [vmem:[#allocation3] sm:$0x3]
        %v544 = vld [vmem:[#allocation4] sm:$0x3]
        %v546 = vperm.slane %v542, 0
        %v547 = vperm.slane %v542, 1
        %v548 = vperm.slane %v542, 2
        %v549 = vperm.slane %v542, 3
        %554 = vmatpush.msra.mxu0 %v474
        %555 = vmatpush.msra.mxu0 %v470
        %556 = vmatpush.msra.mxu0 %v466
        %557 = vmatpush.msra.mxu0 %v462
        %558 = vmatpush.msra.mxu0 %v458
        %559 = vmatpush.msra.mxu0 %v454
        %560 = vmatpush.msra.mxu0 %v450
        %561 = vmatpush.msra.mxu0 %v446
        %562 = vmatpush.msra.mxu0 %v442
        %563 = vmatpush.msra.mxu0 %v438
        %564 = vmatpush.msra.mxu0 %v434
        %565 = vmatpush.msra.mxu0 %v430
        %566 = vmatpush.msra.mxu0 %v426
        %567 = vmatpush.msra.mxu0 %v422
        %568 = vmatpush.msra.mxu0 %v418
        %569 = vmatpush.msra.mxu0 %v414
        %570 = vmatmul.f32.gmra.mxu0 %v413
        %v571 = vpop.f32.mrf.mxu0
        %v572 = vadd.f32 %v546, %v571
        %573 = vdwg.mxu0
        %574 = vmatpush.msra.mxu0 %v538
        %575 = vmatpush.msra.mxu0 %v534
        %576 = vmatpush.msra.mxu0 %v530
        %577 = vmatpush.msra.mxu0 %v526
        %578 = vmatpush.msra.mxu0 %v522
        %579 = vmatpush.msra.mxu0 %v518
        %580 = vmatpush.msra.mxu0 %v514
        %581 = vmatpush.msra.mxu0 %v510
        %582 = vmatpush.msra.mxu0 %v506
        %583 = vmatpush.msra.mxu0 %v502
        %584 = vmatpush.msra.mxu0 %v498
        %585 = vmatpush.msra.mxu0 %v494
        %586 = vmatpush.msra.mxu0 %v490
        %587 = vmatpush.msra.mxu0 %v486
        %588 = vmatpush.msra.mxu0 %v482
        %589 = vmatpush.msra.mxu0 %v478
        %590 = vmatmul.f32.gmra.mxu0 %v543
        %v591 = vpop.f32.mrf.mxu0
        %v592 = vadd.f32 %v572, %v591
        %593 = vdwg.mxu0
        %594 = vmatpush.msra.mxu0 %v475
        %595 = vmatpush.msra.mxu0 %v471
        %596 = vmatpush.msra.mxu0 %v467
        %597 = vmatpush.msra.mxu0 %v463
        %598 = vmatpush.msra.mxu0 %v459
        %599 = vmatpush.msra.mxu0 %v455
        %600 = vmatpush.msra.mxu0 %v451
        %601 = vmatpush.msra.mxu0 %v447
        %602 = vmatpush.msra.mxu0 %v443
        %603 = vmatpush.msra.mxu0 %v439
        %604 = vmatpush.msra.mxu0 %v435
        %605 = vmatpush.msra.mxu0 %v431
        %606 = vmatpush.msra.mxu0 %v427
        %607 = vmatpush.msra.mxu0 %v423
        %608 = vmatpush.msra.mxu0 %v419
        %609 = vmatpush.msra.mxu0 %v415
        %610 = vmatmul.f32.gmra.mxu0 %v413
        %v611 = vpop.f32.mrf.mxu0
        %v612 = vadd.f32 %v547, %v611
        %613 = vdwg.mxu0
        %614 = vmatpush.msra.mxu0 %v539
        %615 = vmatpush.msra.mxu0 %v535
        %616 = vmatpush.msra.mxu0 %v531
        %617 = vmatpush.msra.mxu0 %v527
        %618 = vmatpush.msra.mxu0 %v523
        %619 = vmatpush.msra.mxu0 %v519
        %620 = vmatpush.msra.mxu0 %v515
        %621 = vmatpush.msra.mxu0 %v511
        %622 = vmatpush.msra.mxu0 %v507
        %623 = vmatpush.msra.mxu0 %v503
        %624 = vmatpush.msra.mxu0 %v499
        %625 = vmatpush.msra.mxu0 %v495
        %626 = vmatpush.msra.mxu0 %v491
        %627 = vmatpush.msra.mxu0 %v487
        %628 = vmatpush.msra.mxu0 %v483
        %629 = vmatpush.msra.mxu0 %v479
        %630 = vmatmul.f32.gmra.mxu0 %v543
        %v631 = vpop.f32.mrf.mxu0
        %v632 = vadd.f32 %v612, %v631
        %633 = vdwg.mxu0
        %634 = vmatpush.msra.mxu0 %v476
        %635 = vmatpush.msra.mxu0 %v472
        %636 = vmatpush.msra.mxu0 %v468
        %637 = vmatpush.msra.mxu0 %v464
        %638 = vmatpush.msra.mxu0 %v460
        %639 = vmatpush.msra.mxu0 %v456
        %640 = vmatpush.msra.mxu0 %v452
        %641 = vmatpush.msra.mxu0 %v448
        %642 = vmatpush.msra.mxu0 %v444
        %643 = vmatpush.msra.mxu0 %v440
        %644 = vmatpush.msra.mxu0 %v436
        %645 = vmatpush.msra.mxu0 %v432
        %646 = vmatpush.msra.mxu0 %v428
        %647 = vmatpush.msra.mxu0 %v424
        %648 = vmatpush.msra.mxu0 %v420
        %649 = vmatpush.msra.mxu0 %v416
        %650 = vmatmul.f32.gmra.mxu0 %v413
        %v651 = vpop.f32.mrf.mxu0
        %v652 = vadd.f32 %v548, %v651
        %653 = vdwg.mxu0
        %654 = vmatpush.msra.mxu0 %v540
        %655 = vmatpush.msra.mxu0 %v536
        %656 = vmatpush.msra.mxu0 %v532
        %657 = vmatpush.msra.mxu0 %v528
        %658 = vmatpush.msra.mxu0 %v524
        %659 = vmatpush.msra.mxu0 %v520
        %660 = vmatpush.msra.mxu0 %v516
        %661 = vmatpush.msra.mxu0 %v512
        %662 = vmatpush.msra.mxu0 %v508
        %663 = vmatpush.msra.mxu0 %v504
        %664 = vmatpush.msra.mxu0 %v500
        %665 = vmatpush.msra.mxu0 %v496
        %666 = vmatpush.msra.mxu0 %v492
        %667 = vmatpush.msra.mxu0 %v488
        %668 = vmatpush.msra.mxu0 %v484
        %669 = vmatpush.msra.mxu0 %v480
        %670 = vmatmul.f32.gmra.mxu0 %v543
        %v671 = vpop.f32.mrf.mxu0
        %v672 = vadd.f32 %v652, %v671
        %673 = vdwg.mxu0
        %674 = vmatpush.msra.mxu0 %v477
        %675 = vmatpush.msra.mxu0 %v473
        %676 = vmatpush.msra.mxu0 %v469
        %677 = vmatpush.msra.mxu0 %v465
        %678 = vmatpush.msra.mxu0 %v461
        %679 = vmatpush.msra.mxu0 %v457
        %680 = vmatpush.msra.mxu0 %v453
        %681 = vmatpush.msra.mxu0 %v449
        %682 = vmatpush.msra.mxu0 %v445
        %683 = vmatpush.msra.mxu0 %v441
        %684 = vmatpush.msra.mxu0 %v437
        %685 = vmatpush.msra.mxu0 %v433
        %686 = vmatpush.msra.mxu0 %v429
        %687 = vmatpush.msra.mxu0 %v425
        %688 = vmatpush.msra.mxu0 %v421
        %689 = vmatpush.msra.mxu0 %v417
        %690 = vmatmul.f32.gmra.mxu0 %v413
        %v691 = vpop.f32.mrf.mxu0
        %v692 = vadd.f32 %v549, %v691
        %693 = vdwg.mxu0
        %694 = vmatpush.msra.mxu0 %v541
        %695 = vmatpush.msra.mxu0 %v537
        %696 = vmatpush.msra.mxu0 %v533
        %697 = vmatpush.msra.mxu0 %v529
        %698 = vmatpush.msra.mxu0 %v525
        %699 = vmatpush.msra.mxu0 %v521
        %700 = vmatpush.msra.mxu0 %v517
        %701 = vmatpush.msra.mxu0 %v513
        %702 = vmatpush.msra.mxu0 %v509
        %703 = vmatpush.msra.mxu0 %v505
        %704 = vmatpush.msra.mxu0 %v501
        %705 = vmatpush.msra.mxu0 %v497
        %706 = vmatpush.msra.mxu0 %v493
        %707 = vmatpush.msra.mxu0 %v489
        %708 = vmatpush.msra.mxu0 %v485
        %709 = vmatpush.msra.mxu0 %v481
        %710 = vmatmul.f32.gmra.mxu0 %v543
        %v711 = vpop.f32.mrf.mxu0
        %v712 = vadd.f32 %v692, %v711
        %713 = vdwg.mxu0
        %v714 = vxor.u32 %v592, 2147483648
        %v715 = vmul.f32 %v714, 1.442695
        %v716 = vpow.pop %v715
        %v717 = vadd.f32 %v716, 1.0
        %v718 = vrcp.pop %v717
        %v719 = vmul.f32 %v717, %v718
        %v720 = vsub.f32 1.0, %v719
        %v721 = vmul.f32 %v718, %v720
        %v722 = vadd.f32 %v718, %v721
        %vm723 = vweird.f32 %v717
        %vm724 = vweird.f32 %v718
        %vm725 = vmor %vm723, %vm724
        %v726 = vsel %vm725, %v718, %v722
        %v727 = vand.u32 2147483647, %v717
        %vm728 = vcmp.eq.f32.partialorder %v727, 8.507059e+37
        %v729 = vand.u32 %v717, 2147483648
        %v730 = vor.u32 1.1754944e-38, %v729
        %v731 = vsel %vm728, %v730, %v726
        %v732 = vmul.f32 1.0, %v731
        %v733 = vxor.u32 %v632, 2147483648
        %v734 = vmul.f32 %v733, 1.442695
        %v735 = vpow.pop %v734
        %v736 = vadd.f32 %v735, 1.0
        %v737 = vrcp.pop %v736
        %v738 = vmul.f32 %v736, %v737
        %v739 = vsub.f32 1.0, %v738
        %v740 = vmul.f32 %v737, %v739
        %v741 = vadd.f32 %v737, %v740
        %vm742 = vweird.f32 %v736
        %vm743 = vweird.f32 %v737
        %vm744 = vmor %vm742, %vm743
        %v745 = vsel %vm744, %v737, %v741
        %v746 = vand.u32 2147483647, %v736
        %vm747 = vcmp.eq.f32.partialorder %v746, 8.507059e+37
        %v748 = vand.u32 %v736, 2147483648
        %v749 = vor.u32 1.1754944e-38, %v748
        %v750 = vsel %vm747, %v749, %v745
        %v751 = vmul.f32 1.0, %v750
        %v752 = vtanh.pop %v672
        %v753 = vxor.u32 %v712, 2147483648
        %v754 = vmul.f32 %v753, 1.442695
        %v755 = vpow.pop %v754
        %v756 = vadd.f32 %v755, 1.0
        %v757 = vrcp.pop %v756
        %v758 = vmul.f32 %v756, %v757
        %v759 = vsub.f32 1.0, %v758
        %v760 = vmul.f32 %v757, %v759
        %v761 = vadd.f32 %v757, %v760
        %vm762 = vweird.f32 %v756
        %vm763 = vweird.f32 %v757
        %vm764 = vmor %vm762, %vm763
        %v765 = vsel %vm764, %v757, %v761
        %v766 = vand.u32 2147483647, %v756
        %vm767 = vcmp.eq.f32.partialorder %v766, 8.507059e+37
        %v768 = vand.u32 %v756, 2147483648
        %v769 = vor.u32 1.1754944e-38, %v768
        %v770 = vsel %vm767, %v769, %v765
        %v771 = vmul.f32 1.0, %v770
        %v772 = vmul.f32 %v751, %v544
        %v773 = vmul.f32 %v732, %v752
        %v774 = vadd.f32 %v772, %v773
        %v775 = vtanh.pop %v774
        %v776 = vmul.f32 %v771, %v775
        %777 = vst [vmem:[#allocation3] sm:$0x3] %v776
        %778 = vst [vmem:[#allocation4] sm:$0x3] %v774
        %v779 = vld [vmem:[%s8] sm:$0xff]
        %v780 = vld [vmem:[%s8 + $0x8] sm:$0xff]
        %v781 = vld [vmem:[%s8 + $0x10] sm:$0xff]
        %v782 = vld [vmem:[%s8 + $0x18] sm:$0xff]
        %v783 = vld [vmem:[%s8 + $0x20] sm:$0xff]
        %v784 = vld [vmem:[%s8 + $0x28] sm:$0xff]
        %v785 = vld [vmem:[%s8 + $0x30] sm:$0xff]
        %v786 = vld [vmem:[%s8 + $0x38] sm:$0xff]
        %v787 = vld [vmem:[%s8 + $0x40] sm:$0xff]
        %v788 = vld [vmem:[%s8 + $0x48] sm:$0xff]
        %v789 = vld [vmem:[%s8 + $0x50] sm:$0xff]
        %v790 = vld [vmem:[%s8 + $0x58] sm:$0xff]
        %v791 = vld [vmem:[%s8 + $0x60] sm:$0xff]
        %v792 = vld [vmem:[%s8 + $0x68] sm:$0xff]
        %v793 = vld [vmem:[%s8 + $0x70] sm:$0xff]
        %v794 = vld [vmem:[%s8 + $0x78] sm:$0xff]
        %795 = vmatpush.msra.mxu0 %v794
        %796 = vmatpush.msra.mxu0 %v793
        %797 = vmatpush.msra.mxu0 %v792
        %798 = vmatpush.msra.mxu0 %v791
        %799 = vmatpush.msra.mxu0 %v790
        %800 = vmatpush.msra.mxu0 %v789
        %801 = vmatpush.msra.mxu0 %v788
        %802 = vmatpush.msra.mxu0 %v787
        %803 = vmatpush.msra.mxu0 %v786
        %804 = vmatpush.msra.mxu0 %v785
        %805 = vmatpush.msra.mxu0 %v784
        %806 = vmatpush.msra.mxu0 %v783
        %807 = vmatpush.msra.mxu0 %v782
        %808 = vmatpush.msra.mxu0 %v781
        %809 = vmatpush.msra.mxu0 %v780
        %810 = vmatpush.msra.mxu0 %v779
        %811 = vmatmul.f32.gmra.mxu0 %v776
        %v812 = vpop.f32.mrf.mxu0
        %v813 = vadd.f32 0.0, %v812
        %814 = vdwg.mxu0
        %v815 = vld [vmem:[%s0] sm:$0x3]
        %v816 = vld [vmem:[%s0 + $0x2] sm:$0x3]
        %v817 = vld [vmem:[%s0 + $0x4] sm:$0x3]
        %v818 = vld [vmem:[%s0 + $0x6] sm:$0x3]
        %v819 = vld [vmem:[%s0 + $0x8] sm:$0x3]
        %v820 = vld [vmem:[%s0 + $0xa] sm:$0x3]
        %v821 = vld [vmem:[%s0 + $0xc] sm:$0x3]
        %v822 = vld [vmem:[%s0 + $0xe] sm:$0x3]
        %v823 = vadd.f32 %v815, %v813
        %v824 = vadd.f32 %v816, %v813
        %v825 = vadd.f32 %v817, %v813
        %v826 = vadd.f32 %v818, %v813
        %v827 = vadd.f32 %v819, %v813
        %v828 = vadd.f32 %v820, %v813
        %v829 = vadd.f32 %v821, %v813
        %v830 = vadd.f32 %v822, %v813
        %v831 = vtanh.pop %v823
        %v832 = vtanh.pop %v824
        %v833 = vtanh.pop %v825
        %v834 = vtanh.pop %v826
        %v835 = vtanh.pop %v827
        %v836 = vtanh.pop %v828
        %v837 = vtanh.pop %v829
        %v838 = vtanh.pop %v830
        %v839 = vld [vmem:[%s9] sm:$0x1]
        %v841 = vperm.slane %v839, 0
        %v843 = vmul.f32 %v831, %v841
        %v844 = vmul.f32 %v832, %v841
        %v845 = vmul.f32 %v833, %v841
        %v846 = vmul.f32 %v834, %v841
        %v847 = vmul.f32 %v835, %v841
        %v848 = vmul.f32 %v836, %v841
        %v849 = vmul.f32 %v837, %v841
        %v850 = vmul.f32 %v838, %v841
        %vm851 = vcmask 1041408
        %v852 = vsel %vm851, %v843, 0.0
        %853 = vadd.xlane.f32.xlu0 %v852
        %v854 = vpop.xlane.xlu0 %853
        %v855 = vsel %vm851, %v844, 0.0
        %856 = vadd.xlane.f32.xlu0 %v855
        %v857 = vpop.xlane.xlu0 %856
        %v858 = vsel %vm851, %v845, 0.0
        %859 = vadd.xlane.f32.xlu0 %v858
        %v860 = vpop.xlane.xlu0 %859
        %v861 = vsel %vm851, %v846, 0.0
        %862 = vadd.xlane.f32.xlu0 %v861
        %v863 = vpop.xlane.xlu0 %862
        %v864 = vsel %vm851, %v847, 0.0
        %865 = vadd.xlane.f32.xlu0 %v864
        %v866 = vpop.xlane.xlu0 %865
        %v867 = vsel %vm851, %v848, 0.0
        %868 = vadd.xlane.f32.xlu0 %v867
        %v869 = vpop.xlane.xlu0 %868
        %v870 = vsel %vm851, %v849, 0.0
        %871 = vadd.xlane.f32.xlu0 %v870
        %v872 = vpop.xlane.xlu0 %871
        %v873 = vsel %vm851, %v850, 0.0
        %874 = vadd.xlane.f32.xlu0 %v873
        %v875 = vpop.xlane.xlu0 %874
        %v876 = vtanh.pop %v854
        %v877 = vtanh.pop %v857
        %v878 = vtanh.pop %v860
        %v879 = vtanh.pop %v863
        %v880 = vtanh.pop %v866
        %v881 = vtanh.pop %v869
        %v882 = vtanh.pop %v872
        %v883 = vtanh.pop %v875
        %v884 = vmul.f32 %v876, 10.0
        %v885 = vmul.f32 %v877, 10.0
        %v886 = vmul.f32 %v878, 10.0
        %v887 = vmul.f32 %v879, 10.0
        %v888 = vmul.f32 %v880, 10.0
        %v889 = vmul.f32 %v881, 10.0
        %v890 = vmul.f32 %v882, 10.0
        %v891 = vmul.f32 %v883, 10.0
        %v892 = vld [vmem:[#allocation2] sm:$0xff]
        %vm893 = vcmp.gt.f32.partialorder %v892, 0.5
        %v902 = vlaneseq
        %v903 = vand.u32 %v902, 127
        %v904 = vperm.slane %v884, %v903
        %v905 = vperm.slane %v885, %v903
        %v906 = vperm.slane %v886, %v903
        %v907 = vperm.slane %v887, %v903
        %v908 = vperm.slane %v888, %v903
        %v909 = vperm.slane %v889, %v903
        %v910 = vperm.slane %v890, %v903
        %v911 = vperm.slane %v891, %v903
        %vm912 = vcmask 1041409
        %v913 = vsel %vm912, %v905, %v904
        %vm914 = vcmask 1042434
        %v915 = vsel %vm914, %v906, %v913
        %vm916 = vcmask 1043459
        %v917 = vsel %vm916, %v907, %v915
        %vm918 = vcmask 1044484
        %v919 = vsel %vm918, %v908, %v917
        %vm920 = vcmask 1045509
        %v921 = vsel %vm920, %v909, %v919
        %vm922 = vcmask 1046534
        %v923 = vsel %vm922, %v910, %v921
        %vm924 = vcmask 1047559
        %v925 = vsel %vm924, %v911, %v923
        %v927 = vsel %vm893, %v925, -1e+09
        %vm928 = vcmask 15360
        %v929 = vsel %vm928, %v927, -inf
        %v930 = vrot.slane %v929, 4
        %v931 = vmax.f32 %v929, %v930
        %v932 = vrot.slane %v931, 2
        %v933 = vmax.f32 %v931, %v932
        %v934 = vrot.slane %v933, 1
        %v935 = vmax.f32 %v933, %v934
        %v936 = vsub.f32 %v927, %v935
        %v937 = vmul.f32 %v936, 1.442695
        %v938 = vpow.pop %v937
        %v939 = vsel %vm928, %v938, 0.0
        %v940 = vrot.slane %v939, 4
        %v941 = vadd.f32 %v939, %v940
        %v942 = vrot.slane %v941, 2
        %v943 = vadd.f32 %v941, %v942
        %v944 = vrot.slane %v943, 1
        %v945 = vadd.f32 %v943, %v944
        %v946 = vlog2.pop %v945
        %v947 = vmul.f32 %v946, 0.6931472
        %v948 = vsub.f32 %v936, %v947
        %v949 = vld [vmem:[%s394] sm:$0xff]
        %v950 = vadd.f32 %v927, %v949
        %v951 = vsel %vm928, %v950, -inf
        %v952 = vrot.slane %v951, 4
        %v953 = vmax.f32 %v951, %v952
        %v954 = vrot.slane %v953, 2
        %v955 = vmax.f32 %v953, %v954
        %v956 = vrot.slane %v955, 1
        %v957 = vmax.f32 %v955, %v956
        %v958 = vlaneseq
        %v959 = vshrl.u32 %v958, 7
        %vm960 = vcmp.ge.f32.partialorder %v950, %v957
        %v961 = vsel %vm960, %v959, 8
        %v962 = vsel %vm928, %v961, 2147483647
        %v963 = vrot.slane %v962, 4
        %vm964 = vcmp.lt.s32.totalorder %v962, %v963
        %v965 = vsel %vm964, %v962, %v963
        %v966 = vrot.slane %v965, 2
        %vm967 = vcmp.lt.s32.totalorder %v965, %v966
        %v968 = vsel %vm967, %v965, %v966
        %v969 = vrot.slane %v968, 1
        %vm970 = vcmp.lt.s32.totalorder %v968, %v969
        %v971 = vsel %vm970, %v968, %v969
        %vm972 = vcmp.eq.s32.totalorder %v959, %v971
        %v973 = vsel %vm972, 1, 0
        %v974 = vcvt.s32.f32 %v973
        %v975 = vld [vmem:[#allocation6] sm:$0x1]
        %v976 = vmul.f32 %v974, %v948
        %v977 = vsel %vm928, %v976, 0.0
        %v978 = vrot.slane %v977, 4
        %v979 = vadd.f32 %v977, %v978
        %v980 = vrot.slane %v979, 2
        %v981 = vadd.f32 %v979, %v980
        %v982 = vrot.slane %v981, 1
        %v983 = vadd.f32 %v981, %v982
        %v984 = vadd.f32 %v975, %v983
        %vm985 = vcmask 8192
        %986 = vst.msk [vmem:[#allocation6] sm:$0x1] %vm985, %v984
        %v987 = vsub.f32 1.0, %v974
        %v988 = vmul.f32 %v892, %v987
        %989 = vst.msk [vmem:[#allocation2] sm:$0xff] %vm928, %v988
        %v990 = vld [vmem:[%s1] sm:$0x3]
        %v991 = vld [vmem:[%s1 + $0x2] sm:$0x3]
        %v992 = vld [vmem:[%s1 + $0x4] sm:$0x3]
        %v993 = vld [vmem:[%s1 + $0x6] sm:$0x3]
        %v994 = vld [vmem:[%s1 + $0x8] sm:$0x3]
        %v995 = vld [vmem:[%s1 + $0xa] sm:$0x3]
        %v996 = vld [vmem:[%s1 + $0xc] sm:$0x3]
        %v997 = vld [vmem:[%s1 + $0xe] sm:$0x3]
        %v998 = vperm.slane %v974, 0
        %v999 = vlaneseq
        %v1000 = vshrl.u32 %v999, 7
        %1002 = vset.pattern.permute.xlu0 %v1000
        %1003 = vperm.xlu0 %1002, %v998
        %v1004 = vpop.permute.xlu0 %1003
        %v1005 = vperm.slane %v974, 1
        %v1006 = vlaneseq
        %v1007 = vshrl.u32 %v1006, 7
        %1009 = vset.pattern.permute.xlu0 %v1007
        %1010 = vperm.xlu0 %1009, %v1005
        %v1011 = vpop.permute.xlu0 %1010
        %v1012 = vperm.slane %v974, 2
        %v1013 = vlaneseq
        %v1014 = vshrl.u32 %v1013, 7
        %1016 = vset.pattern.permute.xlu0 %v1014
        %1017 = vperm.xlu0 %1016, %v1012
        %v1018 = vpop.permute.xlu0 %1017
        %v1019 = vperm.slane %v974, 3
        %v1020 = vlaneseq
        %v1021 = vshrl.u32 %v1020, 7
        %1023 = vset.pattern.permute.xlu0 %v1021
        %1024 = vperm.xlu0 %1023, %v1019
        %v1025 = vpop.permute.xlu0 %1024
        %v1026 = vperm.slane %v974, 4
        %v1027 = vlaneseq
        %v1028 = vshrl.u32 %v1027, 7
        %1030 = vset.pattern.permute.xlu0 %v1028
        %1031 = vperm.xlu0 %1030, %v1026
        %v1032 = vpop.permute.xlu0 %1031
        %v1033 = vperm.slane %v974, 5
        %v1034 = vlaneseq
        %v1035 = vshrl.u32 %v1034, 7
        %1037 = vset.pattern.permute.xlu0 %v1035
        %1038 = vperm.xlu0 %1037, %v1033
        %v1039 = vpop.permute.xlu0 %1038
        %v1040 = vperm.slane %v974, 6
        %v1041 = vlaneseq
        %v1042 = vshrl.u32 %v1041, 7
        %1044 = vset.pattern.permute.xlu0 %v1042
        %1045 = vperm.xlu0 %1044, %v1040
        %v1046 = vpop.permute.xlu0 %1045
        %v1047 = vperm.slane %v974, 7
        %v1048 = vlaneseq
        %v1049 = vshrl.u32 %v1048, 7
        %1051 = vset.pattern.permute.xlu0 %v1049
        %1052 = vperm.xlu0 %1051, %v1047
        %v1053 = vpop.permute.xlu0 %1052
        %v1054 = vmul.f32 %v990, %v1004
        %v1055 = vmul.f32 %v991, %v1011
        %v1056 = vmul.f32 %v992, %v1018
        %v1057 = vmul.f32 %v993, %v1025
        %v1058 = vmul.f32 %v994, %v1032
        %v1059 = vmul.f32 %v995, %v1039
        %v1060 = vmul.f32 %v996, %v1046
        %v1061 = vmul.f32 %v997, %v1053
        %v1062 = vsel %vm851, %v1054, 0.0
        %v1063 = vsel %vm851, %v1055, 0.0
        %v1064 = vadd.f32 %v1062, %v1063
        %v1065 = vsel %vm851, %v1056, 0.0
        %v1066 = vadd.f32 %v1064, %v1065
        %v1067 = vsel %vm851, %v1057, 0.0
        %v1068 = vadd.f32 %v1066, %v1067
        %v1069 = vsel %vm851, %v1058, 0.0
        %v1070 = vadd.f32 %v1068, %v1069
        %v1071 = vsel %vm851, %v1059, 0.0
        %v1072 = vadd.f32 %v1070, %v1071
        %v1073 = vsel %vm851, %v1060, 0.0
        %v1074 = vadd.f32 %v1072, %v1073
        %v1075 = vsel %vm851, %v1061, 0.0
        %v1076 = vadd.f32 %v1074, %v1075
        %1077 = vst [vmem:[#allocation5] sm:$0x3] %v1076
        %s1078 = scalar_lea.vmem %s11, %s25
        %1079 = vst.msk [vmem:[%s1078] sm:$0x1] %vm985, %v971
        // Predicated region
        $region69: #{_forward_impl.7} parent=63 // pred_check
          %p1080 = pneg %p274
        $region70: #{_forward_impl.7} parent=63 // pred_check_branch
          %1082 = sbr.rel (%p1080) target = $region72
        $region71: #{_forward_impl.7} parent=63 // pred_region
          _
        $region72: #{_forward_impl.7} parent=63 // pred_fallthru
          _
        // Predicated region
        $region73: #{_forward_impl.7} parent=63 // pred_check
          %p1083 = pneg %p295
        $region74: #{_forward_impl.7} parent=63 // pred_check_branch
          %1085 = sbr.rel (%p1083) target = $region76
        $region75: #{_forward_impl.7} parent=63 // pred_region
          %1087 = vsyncadd [#allocation7], 0
          %s1089 = sshll.u32 [#allocation6], 4
          %s1090 = int_to_ptr.vmem [resolvable:$true] %s1089
          %s1091 = sshll.u32 %s12, 4
          %s1092 = int_to_ptr.hbm [resolvable:$true] %s1091
          %1094 = dma.vmem_to_hbm [thread:$0]  %s1090, 16, %s1092, [#allocation7]
        $region76: #{_forward_impl.7} parent=63 // pred_fallthru
          _
        // Predicated region
        $region77: #{_forward_impl.7} parent=63 // pred_check
          %p1095 = pneg %p274
        $region78: #{_forward_impl.7} parent=63 // pred_check_branch
          %1097 = sbr.rel (%p1095) target = $region80
        $region79: #{_forward_impl.7} parent=63 // pred_region
          _
        $region80: #{_forward_impl.7} parent=63 // pred_fallthru
          _
        // Predicated region
        $region81: #{_forward_impl.7} parent=63 // pred_check
          %p1098 = pneg %p295
        $region82: #{_forward_impl.7} parent=63 // pred_check_branch
          %1100 = sbr.rel (%p1098) target = $region84
        $region83: #{_forward_impl.7} parent=63 // pred_region
          %1102 = dma.done [#allocation7], 16
        $region84: #{_forward_impl.7} parent=63 // pred_fallthru
          _
      $region64: #{_forward_impl.7} parent=5 // pred_fallthru
        _
      %p1103 = scmp.le.s32.totalorder 2, %s20
      // Predicated region
      $region85: #{_forward_impl.7} parent=5 // pred_check
        %p1104 = pneg %p1103
      $region86: #{_forward_impl.7} parent=5 // pred_check_branch
        %1106 = sbr.rel (%p1104) target = $region88
      $region87: #{_forward_impl.7} parent=5 // pred_region
        %s1107 = ssub.s32 %s20, 2
      $region88: #{_forward_impl.7} parent=5 // pred_fallthru
        _
    $region6: #{_forward_impl.7} parent=1 // loop_footer
      %s24 = sadd.s32 1, %s20
    $region7: #{_forward_impl.7} parent=1 // loop_footer_branch
      %19 = sbr.rel target = $region3
    $region8: #{_forward_impl.7} parent=1 // loop_exit
      _
    %1108 = vsyncpa [#allocation7], 1
    %s1109 = scalar_lea.sflag [#allocation7], 1
    %1110 = vsyncpa %s1109, 1

</llo_original>
